<compile_context>
chip_gen: v7x
topology: tpu7x:2x2x1
jax: 0.10.0
libtpu: 0.0.40
codegen_flags: <defaults>
</compile_context>

<pallas_src>
import functools

import jax
import jax.numpy as jnp
from jax import lax
from jax.experimental import pallas as pl
from jax.experimental.pallas import tpu as pltpu


# ---------------------------------------------------------------------------
# Pallas kernels
# ---------------------------------------------------------------------------
def _conv_kernel(*refs, offs, apply_relu, has_residual):
    """Fused conv (tap-shifted matmuls) + folded BN + [residual] + [ReLU].

    refs = (x_ref, w_ref, s_ref, b_ref, [r_ref,] o_ref)
      x_ref: (1, Lpad, Cin)  bf16  padded, phase-flattened activations (1 image)
      w_ref: (T, Cin, Cout)  bf16  one (Cin, Cout) matrix per kernel tap
      s_ref, b_ref: (1, Cout) f32  folded BatchNorm scale / bias
      r_ref: (1, Mo, Cout)   bf16  residual in the same flat layout (optional)
      o_ref: (1, Mo, Cout)   bf16  flat output rows (garbage cols j >= Wo incl.)
    """
    if has_residual:
        x_ref, w_ref, s_ref, b_ref, r_ref, o_ref = refs
    else:
        x_ref, w_ref, s_ref, b_ref, o_ref = refs
    mo, cout = o_ref.shape[1], o_ref.shape[2]

    # Load the whole slab once (aligned read), widen to f32, then take each tap
    # as a contiguous static row-slice of the value (in-VMEM patch assembly —
    # no HBM im2col).  Slices are re-packed to bf16 just before the MXU.
    xs = x_ref[0].astype(jnp.float32)                      # (Lpad, Cin)

    acc = jnp.zeros((mo, cout), jnp.float32)
    for t, off in enumerate(offs):
        patch = xs[off:off + mo, :].astype(jnp.bfloat16)   # (Mo, Cin)
        acc = acc + jnp.dot(patch, w_ref[t],
                            preferred_element_type=jnp.float32)

    acc = acc * s_ref[...] + b_ref[...]                    # folded BN (fp32)
    if has_residual:
        acc = acc + r_ref[0].astype(jnp.float32)
    if apply_relu:
        acc = jnp.maximum(acc, 0.0)
    o_ref[0] = acc.astype(o_ref.dtype)


def _avgpool_fc_kernel(x_ref, w_ref, b_ref, o_ref):
    # x_ref: (N, H*W, C) bf16, w_ref: (C, classes) f32, b_ref: (1, classes) f32
    hw = x_ref.shape[1]
    pooled = jnp.sum(x_ref[...].astype(jnp.float32), axis=1) * (1.0 / hw)
    o_ref[...] = (jnp.dot(pooled, w_ref[...],
                          preferred_element_type=jnp.float32) + b_ref[...])


# ---------------------------------------------------------------------------
# Wrapper glue (1x data movement only: pad / phase split / reshape)
# ---------------------------------------------------------------------------
def _flatten_taps(x, ks, stride, pad):
    """Lay out a conv input so every (kh, kw) tap is a contiguous row slice.

    Returns (xf, offs, Ho, Wo, Wq):
      xf:   (N, Lpad, C)  padded (and, for stride 2, phase-split) activations,
            flattened so output position (i, j) of tap t reads row
            offs[t] + i*Wq + j.
      offs: ks*ks static row offsets.
      Output columns j in [Wo, Wq) are garbage and get sliced off afterwards.
    """
    N, H, W, C = x.shape
    Ho = (H + 2 * pad - ks) // stride + 1
    Wo = (W + 2 * pad - ks) // stride + 1
    if pad:
        x = jnp.pad(x, ((0, 0), (pad, pad), (pad, pad), (0, 0)))
    Hp, Wp = H + 2 * pad, W + 2 * pad

    if stride == 1:
        Wq = Wp
        base = x.reshape(N, Hp * Wp, C)
        offs = [kh * Wq + kw for kh in range(ks) for kw in range(ks)]
    elif stride == 2:
        assert Hp % 2 == 0 and Wp % 2 == 0, "stride-2 conv needs even padded dims"
        Hq, Wq = Hp // 2, Wp // 2
        if ks == 1:                      # 1x1 downsample: only phase (0, 0)
            base = x[:, ::2, ::2, :].reshape(N, Hq * Wq, C)
            offs = [0]
        else:
            # phase split: base[n, (2p+q)*Hq*Wq + ii*Wq + jj, c] = x[n, 2ii+p, 2jj+q, c]
            xph = x.reshape(N, Hq, 2, Wq, 2, C).transpose(0, 2, 4, 1, 3, 5)
            base = xph.reshape(N, 4 * Hq * Wq, C)
            lq = Hq * Wq
            offs = [(2 * (kh % 2) + (kw % 2)) * lq + (kh // 2) * Wq + (kw // 2)
                    for kh in range(ks) for kw in range(ks)]
    else:
        raise NotImplementedError(f"stride {stride}")

    lneed = max(offs) + Ho * Wq          # garbage tail reads stay in bounds
    if lneed > base.shape[1]:
        base = jnp.pad(base, ((0, 0), (0, lneed - base.shape[1]), (0, 0)))
    return base, offs, Ho, Wo, Wq


def conv_bn(x, w, scale, bias, stride, pad, apply_relu, residual=None):
    """Conv (HWIO weight, no bias) + folded BN + [residual] + [ReLU].  NHWC."""
    N = x.shape[0]
    ks, _, cin, cout = w.shape
    xf, offs, Ho, Wo, Wq = _flatten_taps(x.astype(jnp.bfloat16), ks, stride, pad)
    wf = w.reshape(ks * ks, cin, cout).astype(jnp.bfloat16)
    if cin < 8:   # stem (Cin=3): pad the tiny contraction dim with zero weights
        xf = jnp.pad(xf, ((0, 0), (0, 0), (0, 8 - cin)))
        wf = jnp.pad(wf, ((0, 0), (0, 8 - cin), (0, 0)))
        cin = 8
    Mo = Ho * Wq
    Lpad = xf.shape[1]
    T = ks * ks
    s2 = scale.reshape(1, cout).astype(jnp.float32)
    b2 = bias.reshape(1, cout).astype(jnp.float32)

    args = [xf, wf, s2, b2]
    in_specs = [
        pl.BlockSpec((1, Lpad, cin), lambda n: (n, 0, 0)),
        pl.BlockSpec((T, cin, cout), lambda n: (0, 0, 0)),   # grid-invariant
        pl.BlockSpec((1, cout), lambda n: (0, 0)),
        pl.BlockSpec((1, cout), lambda n: (0, 0)),
    ]
    has_residual = residual is not None
    if has_residual:
        r = jnp.pad(residual.astype(jnp.bfloat16),
                    ((0, 0), (0, 0), (0, Wq - Wo), (0, 0))).reshape(N, Mo, cout)
        args.append(r)
        in_specs.append(pl.BlockSpec((1, Mo, cout), lambda n: (n, 0, 0)))

    yf = pl.pallas_call(
        functools.partial(_conv_kernel, offs=tuple(offs),
                          apply_relu=apply_relu, has_residual=has_residual),
        out_shape=jax.ShapeDtypeStruct((N, Mo, cout), jnp.bfloat16),
        grid_spec=pltpu.PrefetchScalarGridSpec(
            num_scalar_prefetch=0,
            grid=(N,),                  # N=2 -> both v7x TensorCores busy
            in_specs=in_specs,
            out_specs=pl.BlockSpec((1, Mo, cout), lambda n: (n, 0, 0)),
        ),
        # No vmem_limit override: worst-case usage ~10 MiB, fine on v5e/v6e/v7x.
        compiler_params=pltpu.CompilerParams(
            dimension_semantics=("parallel",),
        ),
    )(*args)
    # Drop garbage columns (j >= Wo) and restore NHWC.
    return yf.reshape(N, Ho, Wq, cout)[:, :, :Wo, :]


def avgpool_fc(x, w, b):
    """AdaptiveAvgPool2d((1,1)) + Linear, fused.  x: (N, H, W, C) bf16."""
    N, H, W, C = x.shape
    nc = w.shape[1]
    xr = x.reshape(N, H * W, C).astype(jnp.bfloat16)
    return pl.pallas_call(
        _avgpool_fc_kernel,
        out_shape=jax.ShapeDtypeStruct((N, nc), jnp.float32),
        grid_spec=pltpu.PrefetchScalarGridSpec(
            num_scalar_prefetch=0,
            grid=(1,),
            in_specs=[
                pl.BlockSpec((N, H * W, C), lambda i: (0, 0, 0)),
                pl.BlockSpec((C, nc), lambda i: (0, 0)),
                pl.BlockSpec((1, nc), lambda i: (0, 0)),
            ],
            out_specs=pl.BlockSpec((N, nc), lambda i: (0, 0)),
        ),
        compiler_params=pltpu.CompilerParams(
            dimension_semantics=("arbitrary",),
        ),
    )(xr, w.astype(jnp.float32), b.reshape(1, nc).astype(jnp.float32))


# ---------------------------------------------------------------------------
# Model (BasicBlock, expansion=1; eval-mode folded BatchNorm)
# ---------------------------------------------------------------------------
def basic_block(x, blk):
    stride = blk["stride"]
    if "ds_w" in blk:  # 1x1 conv + BN downsample shortcut
        res = conv_bn(x, blk["ds_w"], blk["ds_s"], blk["ds_b"],
                      stride=stride, pad=0, apply_relu=False)
    else:
        res = x
    h = conv_bn(x, blk["w1"], blk["s1"], blk["b1"],
                stride=stride, pad=1, apply_relu=True)
    return conv_bn(h, blk["w2"], blk["s2"], blk["b2"],
                   stride=1, pad=1, apply_relu=True, residual=res)


def resnet_forward(params, x_nchw):
    x = jnp.transpose(x_nchw, (0, 2, 3, 1)).astype(jnp.bfloat16)  # NCHW -> NHWC
    x = conv_bn(x, params["conv1_w"], params["conv1_s"], params["conv1_b"],
                stride=1, pad=1, apply_relu=True)
    for blocks in params["stages"]:
        for blk in blocks:
            x = basic_block(x, blk)
    return avgpool_fc(x, params["fc_w"], params["fc_b"])


# ---------------------------------------------------------------------------
# Plain-JAX/XLA reference (same bf16 layer boundaries) for a sanity check
# ---------------------------------------------------------------------------
def _ref_conv_bn(x, w, scale, bias, stride, pad, apply_relu, residual=None):
    y = lax.conv_general_dilated(
        x.astype(jnp.bfloat16), w.astype(jnp.bfloat16),
        window_strides=(stride, stride), padding=[(pad, pad), (pad, pad)],
        dimension_numbers=("NHWC", "HWIO", "NHWC"),
        preferred_element_type=jnp.float32)
    y = y * scale.reshape(1, 1, 1, -1) + bias.reshape(1, 1, 1, -1)
    if residual is not None:
        y = y + residual.astype(jnp.float32)
    if apply_relu:
        y = jnp.maximum(y, 0.0)
    return y.astype(jnp.bfloat16)


def resnet_forward_ref(params, x_nchw):
    x = jnp.transpose(x_nchw, (0, 2, 3, 1)).astype(jnp.bfloat16)
    x = _ref_conv_bn(x, params["conv1_w"], params["conv1_s"], params["conv1_b"],
                     1, 1, True)
    for blocks in params["stages"]:
        for blk in blocks:
            s = blk["stride"]
            if "ds_w" in blk:
                res = _ref_conv_bn(x, blk["ds_w"], blk["ds_s"], blk["ds_b"],
                                   s, 0, False)
            else:
                res = x
            h = _ref_conv_bn(x, blk["w1"], blk["s1"], blk["b1"], s, 1, True)
            x = _ref_conv_bn(h, blk["w2"], blk["s2"], blk["b2"], 1, 1, True,
                             residual=res)
    pooled = jnp.mean(x.astype(jnp.float32), axis=(1, 2))
    return pooled @ params["fc_w"].astype(jnp.float32) + \
        params["fc_b"].astype(jnp.float32)


# ---------------------------------------------------------------------------
# Deterministic parameter init (synthetic weights, eval-mode BN folding)
# ---------------------------------------------------------------------------
def _init_bn(key, c):
    k1, k2, k3, k4 = jax.random.split(key, 4)
    gamma = jax.random.uniform(k1, (c,), minval=0.5, maxval=1.5)
    beta = jax.random.normal(k2, (c,)) * 0.1
    mean = jax.random.normal(k3, (c,)) * 0.1
    var = jax.random.uniform(k4, (c,), minval=0.5, maxval=1.5)
    eps = 1e-5
    scale = gamma / jnp.sqrt(var + eps)
    bias = beta - mean * scale
    return scale.astype(jnp.float32), bias.astype(jnp.float32)


def _init_conv(key, kh, kw, cin, cout):
    fan_in = kh * kw * cin
    w = jax.random.normal(key, (kh, kw, cin, cout)) / jnp.sqrt(fan_in)
    return w.astype(jnp.bfloat16)       # conv weights stored bf16


def init_resnet(key, layers=(1, 1, 1, 1), num_classes=10):
    keys = iter(jax.random.split(key, 64))
    params = {}
    params["conv1_w"] = _init_conv(next(keys), 3, 3, 3, 64)
    params["conv1_s"], params["conv1_b"] = _init_bn(next(keys), 64)

    in_c = 64
    stage_cfg = [(64, layers[0], 1), (128, layers[1], 2),
                 (256, layers[2], 2), (512, layers[3], 2)]
    stages = []
    for out_c, n_blocks, stride in stage_cfg:
        strides = [stride] + [1] * (n_blocks - 1)
        blocks = []
        for s in strides:
            blk = {"stride": s}
            blk["w1"] = _init_conv(next(keys), 3, 3, in_c, out_c)
            blk["s1"], blk["b1"] = _init_bn(next(keys), out_c)
            blk["w2"] = _init_conv(next(keys), 3, 3, out_c, out_c)
            blk["s2"], blk["b2"] = _init_bn(next(keys), out_c)
            if s != 1 or in_c != out_c:
                blk["ds_w"] = _init_conv(next(keys), 1, 1, in_c, out_c)
                blk["ds_s"], blk["ds_b"] = _init_bn(next(keys), out_c)
            blocks.append(blk)
            in_c = out_c
        stages.append(blocks)
    params["stages"] = stages

    params["fc_w"] = (jax.random.normal(next(keys), (512, num_classes))
                      / jnp.sqrt(512.0)).astype(jnp.float32)
    params["fc_b"] = (jax.random.normal(next(keys), (num_classes,)) * 0.01
                      ).astype(jnp.float32)
    return params


if __name__ == "__main__":
    key = jax.random.PRNGKey(0)
    k_params, k_x = jax.random.split(key)
    params = init_resnet(k_params, layers=(1, 1, 1, 1), num_classes=10)

    # Input follows the PyTorch forward: NCHW with 3 input channels.
    x = jax.random.normal(k_x, (2, 3, 16, 16), dtype=jnp.float32)

    logits = resnet_forward(params, x)
    jax.block_until_ready(logits)
    assert logits.shape == (2, 10), logits.shape

    # Sanity check against an XLA reference with matching bf16 layer boundaries
    # (loose tolerance: only bf16 rounding / accumulation-order differences).
    ref = resnet_forward_ref(params, x)
    jax.block_until_ready(ref)
    err = float(jnp.max(jnp.abs(logits - ref)))
    ref_scale = float(jnp.max(jnp.abs(ref))) + 1e-6
    assert err <= 0.1 * ref_scale + 1e-2, (err, ref_scale)

    print("KERNEL_OK")
</pallas_src>

<mosaic_0001>
module attributes {stable_mosaic.version = 11 : i64} {
  func.func @_conv_kernel(%arg0: i32, %arg1: memref<1x326x8xbf16, #tpu.memory_space<vmem>>, %arg2: memref<9x8x64xbf16, #tpu.memory_space<vmem>>, %arg3: memref<1x64xf32, #tpu.memory_space<vmem>>, %arg4: memref<1x64xf32, #tpu.memory_space<vmem>>, %arg5: memref<1x288x64xbf16, #tpu.memory_space<vmem>>) attributes {dimension_semantics = [#tpu.dimension_semantics<parallel>], iteration_bounds = array<i64: 2>, scalar_prefetch = 0 : i64, scratch_operands = 0 : i64, tpu.core_type = #tpu.core_type<tc>, window_params = [{transform_indices = @transform_0, window_bounds = array<i64: 1, 326, 8>}, {pipeline_mode = #tpu.pipeline_mode<synchronous>, transform_indices = @transform_1, window_bounds = array<i64: 9, 8, 64>}, {pipeline_mode = #tpu.pipeline_mode<synchronous>, transform_indices = @transform_2, window_bounds = array<i64: 1, 64>}, {pipeline_mode = #tpu.pipeline_mode<synchronous>, transform_indices = @transform_3, window_bounds = array<i64: 1, 64>}, {transform_indices = @transform_4, window_bounds = array<i64: 1, 288, 64>}]} {
    %c0 = arith.constant 0 : index
    %c0_0 = arith.constant 0 : index
    %c0_1 = arith.constant 0 : index
    %0 = vector.load %arg1[%c0, %c0_0, %c0_1] : memref<1x326x8xbf16, #tpu.memory_space<vmem>>, vector<1x326x8xbf16>
    %1 = vector.shape_cast %0 : vector<1x326x8xbf16> to vector<326x8xbf16>
    %2 = arith.extf %1 : vector<326x8xbf16> to vector<326x8xf32>
    %cst = arith.constant 0.000000e+00 : f32
    %3 = vector.broadcast %cst : f32 to vector<288x64xf32>
    %4 = vector.extract_strided_slice %2 {offsets = [0, 0], sizes = [288, 8], strides = [1, 1]} : vector<326x8xf32> to vector<288x8xf32>
    %5 = arith.truncf %4 : vector<288x8xf32> to vector<288x8xbf16>
    %c0_2 = arith.constant 0 : index
    %c0_3 = arith.constant 0 : index
    %c0_4 = arith.constant 0 : index
    %6 = vector.load %arg2[%c0_2, %c0_3, %c0_4] : memref<9x8x64xbf16, #tpu.memory_space<vmem>>, vector<1x8x64xbf16>
    %7 = vector.shape_cast %6 : vector<1x8x64xbf16> to vector<8x64xbf16>
    %cst_5 = arith.constant dense<0.000000e+00> : vector<288x64xf32>
    %8 = tpu.matmul %5, %7, %cst_5 {dimension_numbers = #tpu.dot_dimension_numbers<[1], [0], [0], [1], [0, 0, 1, 1], [], []>} : vector<288x8xbf16>, vector<8x64xbf16>, vector<288x64xf32> -> vector<288x64xf32>
    %9 = arith.addf %3, %8 : vector<288x64xf32>
    %10 = vector.extract_strided_slice %2 {offsets = [1, 0], sizes = [288, 8], strides = [1, 1]} : vector<326x8xf32> to vector<288x8xf32>
    %11 = arith.truncf %10 : vector<288x8xf32> to vector<288x8xbf16>
    %c1 = arith.constant 1 : index
    %c0_6 = arith.constant 0 : index
    %c0_7 = arith.constant 0 : index
    %12 = vector.load %arg2[%c1, %c0_6, %c0_7] : memref<9x8x64xbf16, #tpu.memory_space<vmem>>, vector<1x8x64xbf16>
    %13 = vector.shape_cast %12 : vector<1x8x64xbf16> to vector<8x64xbf16>
    %cst_8 = arith.constant dense<0.000000e+00> : vector<288x64xf32>
    %14 = tpu.matmul %11, %13, %cst_8 {dimension_numbers = #tpu.dot_dimension_numbers<[1], [0], [0], [1], [0, 0, 1, 1], [], []>} : vector<288x8xbf16>, vector<8x64xbf16>, vector<288x64xf32> -> vector<288x64xf32>
    %15 = arith.addf %9, %14 : vector<288x64xf32>
    %16 = vector.extract_strided_slice %2 {offsets = [2, 0], sizes = [288, 8], strides = [1, 1]} : vector<326x8xf32> to vector<288x8xf32>
    %17 = arith.truncf %16 : vector<288x8xf32> to vector<288x8xbf16>
    %c2 = arith.constant 2 : index
    %c0_9 = arith.constant 0 : index
    %c0_10 = arith.constant 0 : index
    %18 = vector.load %arg2[%c2, %c0_9, %c0_10] : memref<9x8x64xbf16, #tpu.memory_space<vmem>>, vector<1x8x64xbf16>
    %19 = vector.shape_cast %18 : vector<1x8x64xbf16> to vector<8x64xbf16>
    %cst_11 = arith.constant dense<0.000000e+00> : vector<288x64xf32>
    %20 = tpu.matmul %17, %19, %cst_11 {dimension_numbers = #tpu.dot_dimension_numbers<[1], [0], [0], [1], [0, 0, 1, 1], [], []>} : vector<288x8xbf16>, vector<8x64xbf16>, vector<288x64xf32> -> vector<288x64xf32>
    %21 = arith.addf %15, %20 : vector<288x64xf32>
    %22 = vector.extract_strided_slice %2 {offsets = [18, 0], sizes = [288, 8], strides = [1, 1]} : vector<326x8xf32> to vector<288x8xf32>
    %23 = arith.truncf %22 : vector<288x8xf32> to vector<288x8xbf16>
    %c3 = arith.constant 3 : index
    %c0_12 = arith.constant 0 : index
    %c0_13 = arith.constant 0 : index
    %24 = vector.load %arg2[%c3, %c0_12, %c0_13] : memref<9x8x64xbf16, #tpu.memory_space<vmem>>, vector<1x8x64xbf16>
    %25 = vector.shape_cast %24 : vector<1x8x64xbf16> to vector<8x64xbf16>
    %cst_14 = arith.constant dense<0.000000e+00> : vector<288x64xf32>
    %26 = tpu.matmul %23, %25, %cst_14 {dimension_numbers = #tpu.dot_dimension_numbers<[1], [0], [0], [1], [0, 0, 1, 1], [], []>} : vector<288x8xbf16>, vector<8x64xbf16>, vector<288x64xf32> -> vector<288x64xf32>
    %27 = arith.addf %21, %26 : vector<288x64xf32>
    %28 = vector.extract_strided_slice %2 {offsets = [19, 0], sizes = [288, 8], strides = [1, 1]} : vector<326x8xf32> to vector<288x8xf32>
    %29 = arith.truncf %28 : vector<288x8xf32> to vector<288x8xbf16>
    %c4 = arith.constant 4 : index
    %c0_15 = arith.constant 0 : index
    %c0_16 = arith.constant 0 : index
    %30 = vector.load %arg2[%c4, %c0_15, %c0_16] : memref<9x8x64xbf16, #tpu.memory_space<vmem>>, vector<1x8x64xbf16>
    %31 = vector.shape_cast %30 : vector<1x8x64xbf16> to vector<8x64xbf16>
    %cst_17 = arith.constant dense<0.000000e+00> : vector<288x64xf32>
    %32 = tpu.matmul %29, %31, %cst_17 {dimension_numbers = #tpu.dot_dimension_numbers<[1], [0], [0], [1], [0, 0, 1, 1], [], []>} : vector<288x8xbf16>, vector<8x64xbf16>, vector<288x64xf32> -> vector<288x64xf32>
    %33 = arith.addf %27, %32 : vector<288x64xf32>
    %34 = vector.extract_strided_slice %2 {offsets = [20, 0], sizes = [288, 8], strides = [1, 1]} : vector<326x8xf32> to vector<288x8xf32>
    %35 = arith.truncf %34 : vector<288x8xf32> to vector<288x8xbf16>
    %c5 = arith.constant 5 : index
    %c0_18 = arith.constant 0 : index
    %c0_19 = arith.constant 0 : index
    %36 = vector.load %arg2[%c5, %c0_18, %c0_19] : memref<9x8x64xbf16, #tpu.memory_space<vmem>>, vector<1x8x64xbf16>
    %37 = vector.shape_cast %36 : vector<1x8x64xbf16> to vector<8x64xbf16>
    %cst_20 = arith.constant dense<0.000000e+00> : vector<288x64xf32>
    %38 = tpu.matmul %35, %37, %cst_20 {dimension_numbers = #tpu.dot_dimension_numbers<[1], [0], [0], [1], [0, 0, 1, 1], [], []>} : vector<288x8xbf16>, vector<8x64xbf16>, vector<288x64xf32> -> vector<288x64xf32>
    %39 = arith.addf %33, %38 : vector<288x64xf32>
    %40 = vector.extract_strided_slice %2 {offsets = [36, 0], sizes = [288, 8], strides = [1, 1]} : vector<326x8xf32> to vector<288x8xf32>
    %41 = arith.truncf %40 : vector<288x8xf32> to vector<288x8xbf16>
    %c6 = arith.constant 6 : index
    %c0_21 = arith.constant 0 : index
    %c0_22 = arith.constant 0 : index
    %42 = vector.load %arg2[%c6, %c0_21, %c0_22] : memref<9x8x64xbf16, #tpu.memory_space<vmem>>, vector<1x8x64xbf16>
    %43 = vector.shape_cast %42 : vector<1x8x64xbf16> to vector<8x64xbf16>
    %cst_23 = arith.constant dense<0.000000e+00> : vector<288x64xf32>
    %44 = tpu.matmul %41, %43, %cst_23 {dimension_numbers = #tpu.dot_dimension_numbers<[1], [0], [0], [1], [0, 0, 1, 1], [], []>} : vector<288x8xbf16>, vector<8x64xbf16>, vector<288x64xf32> -> vector<288x64xf32>
    %45 = arith.addf %39, %44 : vector<288x64xf32>
    %46 = vector.extract_strided_slice %2 {offsets = [37, 0], sizes = [288, 8], strides = [1, 1]} : vector<326x8xf32> to vector<288x8xf32>
    %47 = arith.truncf %46 : vector<288x8xf32> to vector<288x8xbf16>
    %c7 = arith.constant 7 : index
    %c0_24 = arith.constant 0 : index
    %c0_25 = arith.constant 0 : index
    %48 = vector.load %arg2[%c7, %c0_24, %c0_25] : memref<9x8x64xbf16, #tpu.memory_space<vmem>>, vector<1x8x64xbf16>
    %49 = vector.shape_cast %48 : vector<1x8x64xbf16> to vector<8x64xbf16>
    %cst_26 = arith.constant dense<0.000000e+00> : vector<288x64xf32>
    %50 = tpu.matmul %47, %49, %cst_26 {dimension_numbers = #tpu.dot_dimension_numbers<[1], [0], [0], [1], [0, 0, 1, 1], [], []>} : vector<288x8xbf16>, vector<8x64xbf16>, vector<288x64xf32> -> vector<288x64xf32>
    %51 = arith.addf %45, %50 : vector<288x64xf32>
    %52 = vector.extract_strided_slice %2 {offsets = [38, 0], sizes = [288, 8], strides = [1, 1]} : vector<326x8xf32> to vector<288x8xf32>
    %53 = arith.truncf %52 : vector<288x8xf32> to vector<288x8xbf16>
    %c8 = arith.constant 8 : index
    %c0_27 = arith.constant 0 : index
    %c0_28 = arith.constant 0 : index
    %54 = vector.load %arg2[%c8, %c0_27, %c0_28] : memref<9x8x64xbf16, #tpu.memory_space<vmem>>, vector<1x8x64xbf16>
    %55 = vector.shape_cast %54 : vector<1x8x64xbf16> to vector<8x64xbf16>
    %cst_29 = arith.constant dense<0.000000e+00> : vector<288x64xf32>
    %56 = tpu.matmul %53, %55, %cst_29 {dimension_numbers = #tpu.dot_dimension_numbers<[1], [0], [0], [1], [0, 0, 1, 1], [], []>} : vector<288x8xbf16>, vector<8x64xbf16>, vector<288x64xf32> -> vector<288x64xf32>
    %57 = arith.addf %51, %56 : vector<288x64xf32>
    %c0_30 = arith.constant 0 : index
    %c0_31 = arith.constant 0 : index
    %58 = vector.load %arg3[%c0_30, %c0_31] : memref<1x64xf32, #tpu.memory_space<vmem>>, vector<1x64xf32>
    %59 = vector.broadcast %58 : vector<1x64xf32> to vector<288x64xf32>
    %60 = arith.mulf %57, %59 : vector<288x64xf32>
    %c0_32 = arith.constant 0 : index
    %c0_33 = arith.constant 0 : index
    %61 = vector.load %arg4[%c0_32, %c0_33] : memref<1x64xf32, #tpu.memory_space<vmem>>, vector<1x64xf32>
    %62 = vector.broadcast %61 : vector<1x64xf32> to vector<288x64xf32>
    %63 = arith.addf %60, %62 : vector<288x64xf32>
    %cst_34 = arith.constant 0.000000e+00 : f32
    %64 = vector.broadcast %cst_34 : f32 to vector<288x64xf32>
    %65 = arith.maximumf %63, %64 : vector<288x64xf32>
    %66 = arith.truncf %65 : vector<288x64xf32> to vector<288x64xbf16>
    %c0_35 = arith.constant 0 : index
    %c0_36 = arith.constant 0 : index
    %c0_37 = arith.constant 0 : index
    %67 = vector.load %arg5[%c0_35, %c0_36, %c0_37] : memref<1x288x64xbf16, #tpu.memory_space<vmem>>, vector<1x288x64xbf16>
    %68 = vector.shape_cast %67 : vector<1x288x64xbf16> to vector<288x64xbf16>
    %69 = vector.shape_cast %66 : vector<288x64xbf16> to vector<1x288x64xbf16>
    tpu.vector_store %arg5[%c0_35, %c0_36, %c0_37], %69 {strides = array<i32>} : memref<1x288x64xbf16, #tpu.memory_space<vmem>>, vector<1x288x64xbf16>,
    return
  }
  func.func @transform_0(%arg0: i32) -> (i32, i32, i32) {
    %c0_i32 = arith.constant 0 : i32
    %c0_i32_0 = arith.constant 0 : i32
    %c0_i32_1 = arith.constant 0 : i32
    return %arg0, %c0_i32, %c0_i32_0 : i32, i32, i32
  }
  func.func @transform_1(%arg0: i32) -> (i32, i32, i32) {
    %c0_i32 = arith.constant 0 : i32
    %c0_i32_0 = arith.constant 0 : i32
    %c0_i32_1 = arith.constant 0 : i32
    %c0_i32_2 = arith.constant 0 : i32
    return %c0_i32, %c0_i32_0, %c0_i32_1 : i32, i32, i32
  }
  func.func @transform_2(%arg0: i32) -> (i32, i32) {
    %c0_i32 = arith.constant 0 : i32
    %c0_i32_0 = arith.constant 0 : i32
    %c0_i32_1 = arith.constant 0 : i32
    return %c0_i32, %c0_i32_0 : i32, i32
  }
  func.func @transform_3(%arg0: i32) -> (i32, i32) {
    %c0_i32 = arith.constant 0 : i32
    %c0_i32_0 = arith.constant 0 : i32
    %c0_i32_1 = arith.constant 0 : i32
    return %c0_i32, %c0_i32_0 : i32, i32
  }
  func.func @transform_4(%arg0: i32) -> (i32, i32, i32) {
    %c0_i32 = arith.constant 0 : i32
    %c0_i32_0 = arith.constant 0 : i32
    %c0_i32_1 = arith.constant 0 : i32
    return %arg0, %c0_i32, %c0_i32_0 : i32, i32, i32
  }
}

</mosaic_0001>

<llo_original>
// kernel: tpu_custom_call.1
$region0: #{tpu_custom_call.1}
  #allocation0 [shape = 'u32[]', space=smem, size = 0x4, offset = 0x4, fixed_abs, tag = 'smem constant byte address 0x4 - core index']
  #allocation1 [shape = 'u32[144,128]{1,0:T(1,128)}', space=vmem, size = 0x12000, scoped, tag = 'internal scratch']
  %s0 = inlined_call_operand.vmem [shape: bf16[2,326,8], index: 0, kind: input, shape index: {}]
  %s1 = inlined_call_operand.vmem [shape: bf16[9,8,64], index: 1, kind: input, shape index: {}]
  %s2 = inlined_call_operand.vmem [shape: f32[1,64], index: 2, kind: input, shape index: {}]
  %s3 = inlined_call_operand.vmem [shape: f32[1,64], index: 3, kind: input, shape index: {}]
  %s4 = inlined_call_operand.vmem [shape: bf16[2,288,64], index: 4, kind: output, shape index: {}]
  %s5 = sld [smem:[#allocation0]]
  $region49: #{tpu_custom_call.1} parent=0
    _
  %s7 = ssub.s32 1, %s5
  %s8 = scalar_select 0, %s7, %s5
  loop: start=0, step=1, limit=4
  $region2: #{tpu_custom_call.1} parent=0 // loop_pre_header
    _
  $region3: #{tpu_custom_call.1} parent=0 // loop_header
    %s10 = sphi 0, %s14
    %p11 = scmp.ge.s32.totalorder %s10, 4
    %s20 = sphi 0, %s22
    %s23 = sphi 0, %s20
    %s24 = sphi 0, %s23
    %s40 = sphi 0, %s24
    %s44 = sphi 0, %s44
    %s46 = sphi 0, %s44
    %s47 = sphi 0, %s46
    %s61 = sphi 0, %s47
    %s65 = sphi 0, %s65
    %s67 = sphi 0, %s65
    %s68 = sphi 0, %s67
    %s82 = sphi 0, %s68
    %s86 = sphi 0, %s86
    %s88 = sphi 0, %s86
    %s89 = sphi 0, %s88
    %s103 = sphi 0, %s89
    %s109 = sphi 0, %s111
    %s112 = sphi 0, %s109
    %s113 = sphi 0, %s112
    %s129 = sphi 0, %s113
  $region4: #{tpu_custom_call.1} parent=0 // loop_header_branch
    %13 = sbr.rel (%p11) target = $region8
  $region5: #{tpu_custom_call.1} parent=0 // loop_body
    %s15 = ssub.s32 %s10, 1
    %s16 = ssub.s32 %s10, 2
    %s17 = sadd.s32 %s10, 1
    %s18 = ssub.s32 %s10, %s17
    %p19 = scmp.eq.s32.totalorder %s18, 0
    %s21 = sadd.s32 %s20, 1
    %s22 = scalar_select %p19, %s20, %s21
    %p25 = pneg %p19
    %p26 = scmp.eq.s32.totalorder %s10, 1
    %p27 = por %p25, %p26
    %p28 = scmp.ne.s32.totalorder %s20, %s23
    %p29 = scmp.eq.s32.totalorder %s10, 0
    %p30 = por %p28, %p29
    %p31 = scmp.ne.s32.totalorder %s20, %s23
    %p32 = scmp.eq.s32.totalorder %s15, 1
    %p33 = por %p31, %p32
    %p34 = scmp.ne.s32.totalorder %s23, %s24
    %p35 = scmp.eq.s32.totalorder %s15, 0
    %p36 = por %p34, %p35
    %p37 = scmp.ne.s32.totalorder %s23, %s24
    %p38 = scmp.eq.s32.totalorder %s16, 1
    %p39 = por %p37, %p38
    %p41 = scmp.ne.s32.totalorder %s24, %s40
    %p42 = scmp.eq.s32.totalorder %s16, 0
    %p43 = por %p41, %p42
    %s45 = sadd.s32 %s44, 1
    %p48 = scmp.eq.s32.totalorder %s10, 1
    %p49 = scmp.ne.s32.totalorder %s44, %s46
    %p50 = scmp.eq.s32.totalorder %s10, 0
    %p51 = por %p49, %p50
    %p52 = scmp.ne.s32.totalorder %s44, %s46
    %p53 = scmp.eq.s32.totalorder %s15, 1
    %p54 = por %p52, %p53
    %p55 = scmp.ne.s32.totalorder %s46, %s47
    %p56 = scmp.eq.s32.totalorder %s15, 0
    %p57 = por %p55, %p56
    %p58 = scmp.ne.s32.totalorder %s46, %s47
    %p59 = scmp.eq.s32.totalorder %s16, 1
    %p60 = por %p58, %p59
    %p62 = scmp.ne.s32.totalorder %s47, %s61
    %p63 = scmp.eq.s32.totalorder %s16, 0
    %p64 = por %p62, %p63
    %s66 = sadd.s32 %s65, 1
    %p69 = scmp.eq.s32.totalorder %s10, 1
    %p70 = scmp.ne.s32.totalorder %s65, %s67
    %p71 = scmp.eq.s32.totalorder %s10, 0
    %p72 = por %p70, %p71
    %p73 = scmp.ne.s32.totalorder %s65, %s67
    %p74 = scmp.eq.s32.totalorder %s15, 1
    %p75 = por %p73, %p74
    %p76 = scmp.ne.s32.totalorder %s67, %s68
    %p77 = scmp.eq.s32.totalorder %s15, 0
    %p78 = por %p76, %p77
    %p79 = scmp.ne.s32.totalorder %s67, %s68
    %p80 = scmp.eq.s32.totalorder %s16, 1
    %p81 = por %p79, %p80
    %p83 = scmp.ne.s32.totalorder %s68, %s82
    %p84 = scmp.eq.s32.totalorder %s16, 0
    %p85 = por %p83, %p84
    %s87 = sadd.s32 %s86, 1
    %p90 = scmp.eq.s32.totalorder %s10, 1
    %p91 = scmp.ne.s32.totalorder %s86, %s88
    %p92 = scmp.eq.s32.totalorder %s10, 0
    %p93 = por %p91, %p92
    %p94 = scmp.ne.s32.totalorder %s86, %s88
    %p95 = scmp.eq.s32.totalorder %s15, 1
    %p96 = por %p94, %p95
    %p97 = scmp.ne.s32.totalorder %s88, %s89
    %p98 = scmp.eq.s32.totalorder %s15, 0
    %p99 = por %p97, %p98
    %p100 = scmp.ne.s32.totalorder %s88, %s89
    %p101 = scmp.eq.s32.totalorder %s16, 1
    %p102 = por %p100, %p101
    %p104 = scmp.ne.s32.totalorder %s89, %s103
    %p105 = scmp.eq.s32.totalorder %s16, 0
    %p106 = por %p104, %p105
    %s107 = ssub.s32 %s10, %s17
    %p108 = scmp.eq.s32.totalorder %s107, 0
    %s110 = sadd.s32 %s109, 1
    %s111 = scalar_select %p108, %s109, %s110
    %p114 = pneg %p108
    %p115 = scmp.eq.s32.totalorder %s10, 1
    %p116 = por %p114, %p115
    %p117 = scmp.ne.s32.totalorder %s109, %s112
    %p118 = scmp.eq.s32.totalorder %s10, 0
    %p119 = por %p117, %p118
    %p120 = scmp.ne.s32.totalorder %s109, %s112
    %p121 = scmp.eq.s32.totalorder %s15, 1
    %p122 = por %p120, %p121
    %p123 = scmp.ne.s32.totalorder %s112, %s113
    %p124 = scmp.eq.s32.totalorder %s15, 0
    %p125 = por %p123, %p124
    %p126 = scmp.ne.s32.totalorder %s112, %s113
    %p127 = scmp.eq.s32.totalorder %s16, 1
    %p128 = por %p126, %p127
    %p130 = scmp.ne.s32.totalorder %s113, %s129
    %p131 = scmp.eq.s32.totalorder %s16, 0
    %p132 = por %p130, %p131
    %p133 = scmp.le.s32.totalorder 1, %s10
    %p134 = scmp.lt.s32.totalorder %s10, 3
    %p135 = pnand %p133, %p134
    %p136 = pneg %p135
    // Predicated region
    $region9: #{tpu_custom_call.1} parent=5 // pred_check
      _
    $region10: #{tpu_custom_call.1} parent=5 // pred_check_branch
      %138 = sbr.rel (%p135) target = $region12
    $region11: #{tpu_custom_call.1} parent=5 // pred_region
      %s139 = ssub.s32 %s10, 1
      // Predicated region
      $region13: #{tpu_custom_call.1} parent=11 // pred_check
        %p140 = pneg %p57
      $region14: #{tpu_custom_call.1} parent=11 // pred_check_branch
        %142 = sbr.rel (%p140) target = $region16
      $region15: #{tpu_custom_call.1} parent=11 // pred_region
        _
      $region16: #{tpu_custom_call.1} parent=11 // pred_fallthru
        _
      // Predicated region
      $region17: #{tpu_custom_call.1} parent=11 // pred_check
        %p143 = pneg %p78
      $region18: #{tpu_custom_call.1} parent=11 // pred_check_branch
        %145 = sbr.rel (%p143) target = $region20
      $region19: #{tpu_custom_call.1} parent=11 // pred_region
        _
      $region20: #{tpu_custom_call.1} parent=11 // pred_fallthru
        _
      // Predicated region
      $region21: #{tpu_custom_call.1} parent=11 // pred_check
        %p146 = pneg %p99
      $region22: #{tpu_custom_call.1} parent=11 // pred_check_branch
        %148 = sbr.rel (%p146) target = $region24
      $region23: #{tpu_custom_call.1} parent=11 // pred_region
        _
      $region24: #{tpu_custom_call.1} parent=11 // pred_fallthru
        _
    $region12: #{tpu_custom_call.1} parent=5 // pred_fallthru
      _
    %p149 = scmp.lt.s32.totalorder %s10, 2
    // Predicated region
    $region25: #{tpu_custom_call.1} parent=5 // pred_check
      %p150 = pneg %p149
    $region26: #{tpu_custom_call.1} parent=5 // pred_check_branch
      %152 = sbr.rel (%p150) target = $region28
    $region27: #{tpu_custom_call.1} parent=5 // pred_region
      // Predicated region
      $region29: #{tpu_custom_call.1} parent=27 // pred_check
        %p153 = pneg %p30
      $region30: #{tpu_custom_call.1} parent=27 // pred_check_branch
        %155 = sbr.rel (%p153) target = $region32
      $region31: #{tpu_custom_call.1} parent=27 // pred_region
        %p156 = scmp.lt.s32.totalorder %s10, 1
        %s157 = scalar_select %p156, %s10, 1
        %s158 = smul.addr %s157, 41
        %s159 = smul.addr %s158, 4
        %s160 = scalar_lea.vmem %s0, %s159
      $region32: #{tpu_custom_call.1} parent=27 // pred_fallthru
        _
    $region28: #{tpu_custom_call.1} parent=5 // pred_fallthru
      _
    %p161 = scmp.le.s32.totalorder 1, %s10
    %p162 = scmp.lt.s32.totalorder %s10, 3
    %p163 = pnand %p161, %p162
    %p164 = pneg %p163
    // Predicated region
    $region33: #{tpu_custom_call.1} parent=5 // pred_check
      _
    $region34: #{tpu_custom_call.1} parent=5 // pred_check_branch
      %166 = sbr.rel (%p163) target = $region36
    $region35: #{tpu_custom_call.1} parent=5 // pred_region
      %s167 = ssub.s32 %s10, 1
      %p168 = scmp.lt.s32.totalorder %s15, 1
      %s169 = scalar_select %p168, %s15, 1
      %s170 = smul.addr %s169, 41
      %s171 = smul.addr %s170, 4
      %s172 = scalar_lea.vmem %s0, %s171
      %p173 = pneg %p36
      %p174 = pneg %p33
      %p175 = pneg %p57
      %p176 = pneg %p54
      %p177 = pneg %p78
      %p178 = pneg %p75
      %p179 = pneg %p99
      %p180 = pneg %p96
      %p181 = pneg %p125
      %p182 = pneg %p122
      %p183 = scmp.lt.s32.totalorder %s15, 1
      %s184 = scalar_select %p183, %s15, 1
      %s185 = smul.addr %s184, 36
      %s186 = smul.addr %s185, 4
      %s187 = scalar_lea.vmem %s4, %s186
      %p188 = scmp.lt.s32.totalorder %s15, 1
      %s189 = scalar_select %p188, %s15, 1
      %s190 = smul.addr %s189, 41
      %s191 = smul.addr %s190, 4
      %s192 = scalar_lea.vmem %s0, %s191
      %p193 = scmp.lt.s32.totalorder %s15, 1
      %s194 = scalar_select %p193, %s15, 1
      %s195 = smul.addr %s194, 36
      %s196 = smul.addr %s195, 4
      %s197 = scalar_lea.vmem %s4, %s196
      %v199 = vld [vmem:[%s192] sm:$0xf]
      %v200 = vld [vmem:[%s192 + $0x4] sm:$0xf]
      %v201 = vld [vmem:[%s192 + $0x8] sm:$0xf]
      %v202 = vld [vmem:[%s192 + $0xc] sm:$0xf]
      %v203 = vld [vmem:[%s192 + $0x10] sm:$0xf]
      %v204 = vld [vmem:[%s192 + $0x14] sm:$0xf]
      %v205 = vld [vmem:[%s192 + $0x18] sm:$0xf]
      %v206 = vld [vmem:[%s192 + $0x1c] sm:$0xf]
      %v207 = vld [vmem:[%s192 + $0x20] sm:$0xf]
      %v208 = vld [vmem:[%s192 + $0x24] sm:$0xf]
      %v209 = vld [vmem:[%s192 + $0x28] sm:$0xf]
      %v210 = vld [vmem:[%s192 + $0x2c] sm:$0xf]
      %v211 = vld [vmem:[%s192 + $0x30] sm:$0xf]
      %v212 = vld [vmem:[%s192 + $0x34] sm:$0xf]
      %v213 = vld [vmem:[%s192 + $0x38] sm:$0xf]
      %v214 = vld [vmem:[%s192 + $0x3c] sm:$0xf]
      %v215 = vld [vmem:[%s192 + $0x40] sm:$0xf]
      %v216 = vld [vmem:[%s192 + $0x44] sm:$0xf]
      %v217 = vld [vmem:[%s192 + $0x48] sm:$0xf]
      %v218 = vld [vmem:[%s192 + $0x4c] sm:$0xf]
      %v219 = vld [vmem:[%s192 + $0x50] sm:$0xf]
      %v220 = vld [vmem:[%s192 + $0x54] sm:$0xf]
      %v221 = vld [vmem:[%s192 + $0x58] sm:$0xf]
      %v222 = vld [vmem:[%s192 + $0x5c] sm:$0xf]
      %v223 = vld [vmem:[%s192 + $0x60] sm:$0xf]
      %v224 = vld [vmem:[%s192 + $0x64] sm:$0xf]
      %v225 = vld [vmem:[%s192 + $0x68] sm:$0xf]
      %v226 = vld [vmem:[%s192 + $0x6c] sm:$0xf]
      %v227 = vld [vmem:[%s192 + $0x70] sm:$0xf]
      %v228 = vld [vmem:[%s192 + $0x74] sm:$0xf]
      %v229 = vld [vmem:[%s192 + $0x78] sm:$0xf]
      %v230 = vld [vmem:[%s192 + $0x7c] sm:$0xf]
      %v231 = vld [vmem:[%s192 + $0x80] sm:$0xf]
      %v232 = vld [vmem:[%s192 + $0x84] sm:$0xf]
      %v233 = vld [vmem:[%s192 + $0x88] sm:$0xf]
      %v234 = vld [vmem:[%s192 + $0x8c] sm:$0xf]
      %v235 = vld [vmem:[%s192 + $0x90] sm:$0xf]
      %v236 = vld [vmem:[%s192 + $0x94] sm:$0xf]
      %v237 = vld [vmem:[%s192 + $0x98] sm:$0xf]
      %v238 = vld [vmem:[%s192 + $0x9c] sm:$0xf]
      %v239 = vld [vmem:[%s192 + $0xa0] sm:$0x7]
      %v240 = vunpack.c.l.bf16 %v199
      %v241 = vunpack.c.l.bf16 %v200
      %v242 = vunpack.c.l.bf16 %v201
      %v243 = vunpack.c.l.bf16 %v202
      %v244 = vunpack.c.l.bf16 %v203
      %v245 = vunpack.c.l.bf16 %v204
      %v246 = vunpack.c.l.bf16 %v205
      %v247 = vunpack.c.l.bf16 %v206
      %v248 = vunpack.c.l.bf16 %v207
      %v249 = vunpack.c.l.bf16 %v208
      %v250 = vunpack.c.l.bf16 %v209
      %v251 = vunpack.c.l.bf16 %v210
      %v252 = vunpack.c.l.bf16 %v211
      %v253 = vunpack.c.l.bf16 %v212
      %v254 = vunpack.c.l.bf16 %v213
      %v255 = vunpack.c.l.bf16 %v214
      %v256 = vunpack.c.l.bf16 %v215
      %v257 = vunpack.c.l.bf16 %v216
      %v258 = vunpack.c.l.bf16 %v217
      %v259 = vunpack.c.l.bf16 %v218
      %v260 = vunpack.c.l.bf16 %v219
      %v261 = vunpack.c.l.bf16 %v220
      %v262 = vunpack.c.l.bf16 %v221
      %v263 = vunpack.c.l.bf16 %v222
      %v264 = vunpack.c.l.bf16 %v223
      %v265 = vunpack.c.l.bf16 %v224
      %v266 = vunpack.c.l.bf16 %v225
      %v267 = vunpack.c.l.bf16 %v226
      %v268 = vunpack.c.l.bf16 %v227
      %v269 = vunpack.c.l.bf16 %v228
      %v270 = vunpack.c.l.bf16 %v229
      %v271 = vunpack.c.l.bf16 %v230
      %v272 = vunpack.c.l.bf16 %v231
      %v273 = vunpack.c.l.bf16 %v232
      %v274 = vunpack.c.l.bf16 %v233
      %v275 = vunpack.c.l.bf16 %v234
      %v276 = vunpack.c.l.bf16 %v235
      %v277 = vunpack.c.l.bf16 %v236
      %v278 = vunpack.c.l.bf16 %v237
      %v279 = vunpack.c.l.bf16 %v238
      %v280 = vunpack.c.l.bf16 %v239
      %v281 = vpack.c.bf16 %v241, %v240
      %v282 = vpack.c.bf16 %v243, %v242
      %v283 = vpack.c.bf16 %v245, %v244
      %v284 = vpack.c.bf16 %v247, %v246
      %v285 = vpack.c.bf16 %v249, %v248
      %v286 = vpack.c.bf16 %v251, %v250
      %v287 = vpack.c.bf16 %v253, %v252
      %v288 = vpack.c.bf16 %v255, %v254
      %v289 = vpack.c.bf16 %v257, %v256
      %v290 = vpack.c.bf16 %v259, %v258
      %v291 = vpack.c.bf16 %v261, %v260
      %v292 = vpack.c.bf16 %v263, %v262
      %v293 = vpack.c.bf16 %v265, %v264
      %v294 = vpack.c.bf16 %v267, %v266
      %v295 = vpack.c.bf16 %v269, %v268
      %v296 = vpack.c.bf16 %v271, %v270
      %v297 = vpack.c.bf16 %v273, %v272
      %v298 = vpack.c.bf16 %v275, %v274
      %v299 = vld [vmem:[%s1] sm:$0xf]
      %v300 = vpack.c.bf16 %v276, %v276
      %s301 = scalar_lea.vmem %s1, 4
      %v302 = vld [vmem:[%s301] sm:$0xf]
      %vm303 = vsmask.f32 7424
      %v305 = vshrl.u32 %v281, 16
      %v307 = vshll.u32 %v281, 16
      %v309 = vrot.slane %v307, 1
      %v310 = vor.u32 %v305, %v309
      %v312 = vshll.u32 %v282, 16
      %v314 = vrot.slane %v312, 1
      %v315 = vsel %vm303, %v310, %v314
      %v316 = vshrl.u32 %v282, 16
      %v318 = vor.u32 %v316, %v314
      %v320 = vshll.u32 %v283, 16
      %v322 = vrot.slane %v320, 1
      %v323 = vsel %vm303, %v318, %v322
      %v324 = vshrl.u32 %v283, 16
      %v326 = vor.u32 %v324, %v322
      %v328 = vshll.u32 %v284, 16
      %v330 = vrot.slane %v328, 1
      %v331 = vsel %vm303, %v326, %v330
      %v332 = vshrl.u32 %v284, 16
      %v334 = vor.u32 %v332, %v330
      %v336 = vshll.u32 %v285, 16
      %v338 = vrot.slane %v336, 1
      %v339 = vsel %vm303, %v334, %v338
      %v340 = vshrl.u32 %v285, 16
      %v342 = vor.u32 %v340, %v338
      %v344 = vshll.u32 %v286, 16
      %v346 = vrot.slane %v344, 1
      %v347 = vsel %vm303, %v342, %v346
      %v348 = vshrl.u32 %v286, 16
      %v350 = vor.u32 %v348, %v346
      %v352 = vshll.u32 %v287, 16
      %v354 = vrot.slane %v352, 1
      %v355 = vsel %vm303, %v350, %v354
      %v356 = vshrl.u32 %v287, 16
      %v358 = vor.u32 %v356, %v354
      %v360 = vshll.u32 %v288, 16
      %v362 = vrot.slane %v360, 1
      %v363 = vsel %vm303, %v358, %v362
      %v364 = vshrl.u32 %v288, 16
      %v366 = vor.u32 %v364, %v362
      %v368 = vshll.u32 %v289, 16
      %v370 = vrot.slane %v368, 1
      %v371 = vsel %vm303, %v366, %v370
      %v372 = vshrl.u32 %v289, 16
      %v374 = vor.u32 %v372, %v370
      %v376 = vshll.u32 %v290, 16
      %v378 = vrot.slane %v376, 1
      %v379 = vsel %vm303, %v374, %v378
      %v380 = vshrl.u32 %v290, 16
      %v382 = vor.u32 %v380, %v378
      %v384 = vshll.u32 %v291, 16
      %v386 = vrot.slane %v384, 1
      %v387 = vsel %vm303, %v382, %v386
      %v388 = vshrl.u32 %v291, 16
      %v390 = vor.u32 %v388, %v386
      %v392 = vshll.u32 %v292, 16
      %v394 = vrot.slane %v392, 1
      %v395 = vsel %vm303, %v390, %v394
      %v396 = vshrl.u32 %v292, 16
      %v398 = vor.u32 %v396, %v394
      %v400 = vshll.u32 %v293, 16
      %v402 = vrot.slane %v400, 1
      %v403 = vsel %vm303, %v398, %v402
      %v404 = vshrl.u32 %v293, 16
      %v406 = vor.u32 %v404, %v402
      %v408 = vshll.u32 %v294, 16
      %v410 = vrot.slane %v408, 1
      %v411 = vsel %vm303, %v406, %v410
      %v412 = vshrl.u32 %v294, 16
      %v414 = vor.u32 %v412, %v410
      %v416 = vshll.u32 %v295, 16
      %v418 = vrot.slane %v416, 1
      %v419 = vsel %vm303, %v414, %v418
      %v420 = vshrl.u32 %v295, 16
      %v422 = vor.u32 %v420, %v418
      %v424 = vshll.u32 %v296, 16
      %v426 = vrot.slane %v424, 1
      %v427 = vsel %vm303, %v422, %v426
      %v428 = vshrl.u32 %v296, 16
      %v430 = vor.u32 %v428, %v426
      %v432 = vshll.u32 %v297, 16
      %v434 = vrot.slane %v432, 1
      %v435 = vsel %vm303, %v430, %v434
      %v436 = vshrl.u32 %v297, 16
      %v438 = vor.u32 %v436, %v434
      %v440 = vshll.u32 %v298, 16
      %v442 = vrot.slane %v440, 1
      %v443 = vsel %vm303, %v438, %v442
      %v444 = vshrl.u32 %v298, 16
      %v446 = vor.u32 %v444, %v442
      %v448 = vshll.u32 %v300, 16
      %v450 = vrot.slane %v448, 1
      %v451 = vsel %vm303, %v446, %v450
      %vm452 = vcmask 64512
      %v454 = vsel %vm452, %v315, 0
      %v457 = vsel %vm452, %v323, 0
      %v460 = vsel %vm452, %v331, 0
      %v463 = vsel %vm452, %v339, 0
      %v466 = vsel %vm452, %v347, 0
      %v469 = vsel %vm452, %v355, 0
      %v472 = vsel %vm452, %v363, 0
      %v475 = vsel %vm452, %v371, 0
      %v478 = vsel %vm452, %v379, 0
      %v481 = vsel %vm452, %v387, 0
      %v484 = vsel %vm452, %v395, 0
      %v487 = vsel %vm452, %v403, 0
      %v490 = vsel %vm452, %v411, 0
      %v493 = vsel %vm452, %v419, 0
      %v496 = vsel %vm452, %v427, 0
      %v499 = vsel %vm452, %v435, 0
      %v502 = vsel %vm452, %v443, 0
      %v505 = vsel %vm452, %v451, 0
      %vm507 = vcmask 1043456
      %v509 = vsel %vm507, %v302, 0
      %511 = vmatprep.subr.bf16.mxu0 0
      %512 = vmatpush1.bf16.msra.mxu0 %v509
      %513 = vmatprep.subr.bf16.mxu0 0
      %514 = vmatpush1.bf16.msra.mxu0 0
      %515 = vmatprep.subr.bf16.mxu0 0
      %516 = vmatpush1.bf16.msra.mxu0 0
      %517 = vmatprep.subr.bf16.mxu0 0
      %518 = vmatpush1.bf16.msra.mxu0 0
      %519 = vmatprep.subr.bf16.mxu0 0
      %520 = vmatpush1.bf16.msra.mxu0 0
      %521 = vmatprep.subr.bf16.mxu0 0
      %522 = vmatpush1.bf16.msra.mxu0 0
      %523 = vmatprep.subr.bf16.mxu0 0
      %524 = vmatpush1.bf16.msra.mxu0 0
      %525 = vmatprep.subr.bf16.mxu0 0
      %526 = vmatpush1.bf16.msra.mxu0 0
      %527 = vmatprep.subr.bf16.mxu0 0
      %528 = vmatpush1.bf16.msra.mxu0 0
      %529 = vmatprep.subr.bf16.mxu0 0
      %530 = vmatpush1.bf16.msra.mxu0 0
      %531 = vmatprep.subr.bf16.mxu0 0
      %532 = vmatpush1.bf16.msra.mxu0 0
      %533 = vmatprep.subr.bf16.mxu0 0
      %534 = vmatpush1.bf16.msra.mxu0 0
      %535 = vmatprep.subr.bf16.mxu0 0
      %536 = vmatpush1.bf16.msra.mxu0 0
      %537 = vmatprep.subr.bf16.mxu0 0
      %538 = vmatpush1.bf16.msra.mxu0 0
      %539 = vmatprep.subr.bf16.mxu0 0
      %540 = vmatpush1.bf16.msra.mxu0 0
      %541 = vmatprep.subr.bf16.mxu0 0
      %542 = vmatpush1.bf16.msra.mxu0 0
      %543 = vmatprep.mubr.bf16.mxu0 0
      %544 = vmatmul.mubr.bf16.gmra.mrb[0].mxu0 %v454
      %v545 = vpop.f32.mrb[0].mxu0
      %v546 = vadd.f32 0.0, %v545
      %v547 = vpop.f32.mrb[0].mxu0
      %v548 = vpop.f32.mrb[0].mxu0
      %v549 = vadd.f32 0.0, %v548
      %v550 = vpop.f32.mrb[0].mxu0
      %551 = vmatprep.mubr.bf16.mxu0 0
      %552 = vmatmul.mubr.bf16.gmra.mrb[0].mxu0 %v457
      %v553 = vpop.f32.mrb[0].mxu0
      %v554 = vadd.f32 0.0, %v553
      %v555 = vpop.f32.mrb[0].mxu0
      %v556 = vpop.f32.mrb[0].mxu0
      %v557 = vadd.f32 0.0, %v556
      %v558 = vpop.f32.mrb[0].mxu0
      %559 = vmatprep.mubr.bf16.mxu0 0
      %560 = vmatmul.mubr.bf16.gmra.mrb[0].mxu0 %v460
      %v561 = vpop.f32.mrb[0].mxu0
      %v562 = vadd.f32 0.0, %v561
      %v563 = vpop.f32.mrb[0].mxu0
      %v564 = vpop.f32.mrb[0].mxu0
      %v565 = vadd.f32 0.0, %v564
      %v566 = vpop.f32.mrb[0].mxu0
      %567 = vmatprep.mubr.bf16.mxu0 0
      %568 = vmatmul.mubr.bf16.gmra.mrb[0].mxu0 %v463
      %v569 = vpop.f32.mrb[0].mxu0
      %v570 = vadd.f32 0.0, %v569
      %v571 = vpop.f32.mrb[0].mxu0
      %v572 = vpop.f32.mrb[0].mxu0
      %v573 = vadd.f32 0.0, %v572
      %v574 = vpop.f32.mrb[0].mxu0
      %575 = vmatprep.mubr.bf16.mxu0 0
      %576 = vmatmul.mubr.bf16.gmra.mrb[0].mxu0 %v466
      %v577 = vpop.f32.mrb[0].mxu0
      %v578 = vadd.f32 0.0, %v577
      %v579 = vpop.f32.mrb[0].mxu0
      %v580 = vpop.f32.mrb[0].mxu0
      %v581 = vadd.f32 0.0, %v580
      %v582 = vpop.f32.mrb[0].mxu0
      %583 = vmatprep.mubr.bf16.mxu0 0
      %584 = vmatmul.mubr.bf16.gmra.mrb[0].mxu0 %v469
      %v585 = vpop.f32.mrb[0].mxu0
      %v586 = vadd.f32 0.0, %v585
      %v587 = vpop.f32.mrb[0].mxu0
      %v588 = vpop.f32.mrb[0].mxu0
      %v589 = vadd.f32 0.0, %v588
      %v590 = vpop.f32.mrb[0].mxu0
      %591 = vmatprep.mubr.bf16.mxu0 0
      %592 = vmatmul.mubr.bf16.gmra.mrb[0].mxu0 %v472
      %v593 = vpop.f32.mrb[0].mxu0
      %v594 = vadd.f32 0.0, %v593
      %v595 = vpop.f32.mrb[0].mxu0
      %v596 = vpop.f32.mrb[0].mxu0
      %v597 = vadd.f32 0.0, %v596
      %v598 = vpop.f32.mrb[0].mxu0
      %599 = vmatprep.mubr.bf16.mxu0 0
      %600 = vmatmul.mubr.bf16.gmra.mrb[0].mxu0 %v475
      %v601 = vpop.f32.mrb[0].mxu0
      %v602 = vadd.f32 0.0, %v601
      %v603 = vpop.f32.mrb[0].mxu0
      %v604 = vpop.f32.mrb[0].mxu0
      %v605 = vadd.f32 0.0, %v604
      %v606 = vpop.f32.mrb[0].mxu0
      %607 = vmatprep.mubr.bf16.mxu0 0
      %608 = vmatmul.mubr.bf16.gmra.mrb[0].mxu0 %v478
      %v609 = vpop.f32.mrb[0].mxu0
      %v610 = vadd.f32 0.0, %v609
      %v611 = vpop.f32.mrb[0].mxu0
      %v612 = vpop.f32.mrb[0].mxu0
      %v613 = vadd.f32 0.0, %v612
      %v614 = vpop.f32.mrb[0].mxu0
      %615 = vmatprep.mubr.bf16.mxu0 0
      %616 = vmatmul.mubr.bf16.gmra.mrb[0].mxu0 %v481
      %v617 = vpop.f32.mrb[0].mxu0
      %v618 = vadd.f32 0.0, %v617
      %v619 = vpop.f32.mrb[0].mxu0
      %v620 = vpop.f32.mrb[0].mxu0
      %v621 = vadd.f32 0.0, %v620
      %v622 = vpop.f32.mrb[0].mxu0
      %623 = vmatprep.mubr.bf16.mxu0 0
      %624 = vmatmul.mubr.bf16.gmra.mrb[0].mxu0 %v484
      %v625 = vpop.f32.mrb[0].mxu0
      %v626 = vadd.f32 0.0, %v625
      %v627 = vpop.f32.mrb[0].mxu0
      %v628 = vpop.f32.mrb[0].mxu0
      %v629 = vadd.f32 0.0, %v628
      %v630 = vpop.f32.mrb[0].mxu0
      %631 = vmatprep.mubr.bf16.mxu0 0
      %632 = vmatmul.mubr.bf16.gmra.mrb[0].mxu0 %v487
      %v633 = vpop.f32.mrb[0].mxu0
      %v634 = vadd.f32 0.0, %v633
      %v635 = vpop.f32.mrb[0].mxu0
      %v636 = vpop.f32.mrb[0].mxu0
      %v637 = vadd.f32 0.0, %v636
      %v638 = vpop.f32.mrb[0].mxu0
      %639 = vmatprep.mubr.bf16.mxu0 0
      %640 = vmatmul.mubr.bf16.gmra.mrb[0].mxu0 %v490
      %v641 = vpop.f32.mrb[0].mxu0
      %v642 = vadd.f32 0.0, %v641
      %v643 = vpop.f32.mrb[0].mxu0
      %v644 = vpop.f32.mrb[0].mxu0
      %v645 = vadd.f32 0.0, %v644
      %v646 = vpop.f32.mrb[0].mxu0
      %647 = vmatprep.mubr.bf16.mxu0 0
      %648 = vmatmul.mubr.bf16.gmra.mrb[0].mxu0 %v493
      %v649 = vpop.f32.mrb[0].mxu0
      %v650 = vadd.f32 0.0, %v649
      %v651 = vpop.f32.mrb[0].mxu0
      %v652 = vpop.f32.mrb[0].mxu0
      %v653 = vadd.f32 0.0, %v652
      %v654 = vpop.f32.mrb[0].mxu0
      %655 = vmatprep.mubr.bf16.mxu0 0
      %656 = vmatmul.mubr.bf16.gmra.mrb[0].mxu0 %v496
      %v657 = vpop.f32.mrb[0].mxu0
      %v658 = vadd.f32 0.0, %v657
      %v659 = vpop.f32.mrb[0].mxu0
      %v660 = vpop.f32.mrb[0].mxu0
      %v661 = vadd.f32 0.0, %v660
      %v662 = vpop.f32.mrb[0].mxu0
      %663 = vmatprep.mubr.bf16.mxu0 0
      %664 = vmatmul.mubr.bf16.gmra.mrb[0].mxu0 %v499
      %v665 = vpop.f32.mrb[0].mxu0
      %v666 = vadd.f32 0.0, %v665
      %v667 = vpop.f32.mrb[0].mxu0
      %v668 = vpop.f32.mrb[0].mxu0
      %v669 = vadd.f32 0.0, %v668
      %v670 = vpop.f32.mrb[0].mxu0
      %671 = vmatprep.mubr.bf16.mxu0 0
      %672 = vmatmul.mubr.bf16.gmra.mrb[0].mxu0 %v502
      %v673 = vpop.f32.mrb[0].mxu0
      %v674 = vadd.f32 0.0, %v673
      %v675 = vpop.f32.mrb[0].mxu0
      %v676 = vpop.f32.mrb[0].mxu0
      %v677 = vadd.f32 0.0, %v676
      %v678 = vpop.f32.mrb[0].mxu0
      %679 = vmatprep.mubr.bf16.mxu0 0
      %680 = vmatmul.mubr.bf16.gmra.mrb[0].mxu0 %v505
      %v681 = vpop.f32.mrb[0].mxu0
      %v682 = vadd.f32 0.0, %v681
      %v683 = vpop.f32.mrb[0].mxu0
      %v684 = vpop.f32.mrb[0].mxu0
      %v685 = vadd.f32 0.0, %v684
      %v686 = vpop.f32.mrb[0].mxu0
      %687 = vdwg.mxu0
      %v688 = vsel %vm452, %v281, 0
      %v690 = vsel %vm452, %v282, 0
      %v692 = vsel %vm452, %v283, 0
      %v694 = vsel %vm452, %v284, 0
      %v696 = vsel %vm452, %v285, 0
      %v698 = vsel %vm452, %v286, 0
      %v700 = vsel %vm452, %v287, 0
      %v702 = vsel %vm452, %v288, 0
      %v704 = vsel %vm452, %v289, 0
      %v706 = vsel %vm452, %v290, 0
      %v708 = vsel %vm452, %v291, 0
      %v710 = vsel %vm452, %v292, 0
      %v712 = vsel %vm452, %v293, 0
      %v714 = vsel %vm452, %v294, 0
      %v716 = vsel %vm452, %v295, 0
      %v718 = vsel %vm452, %v296, 0
      %v720 = vsel %vm452, %v297, 0
      %v722 = vsel %vm452, %v298, 0
      %v725 = vsel %vm507, %v299, 0
      %727 = vmatprep.subr.bf16.mxu0 0
      %728 = vmatpush1.bf16.msra.mxu0 %v725
      %729 = vmatprep.subr.bf16.mxu0 0
      %730 = vmatpush1.bf16.msra.mxu0 0
      %731 = vmatprep.subr.bf16.mxu0 0
      %732 = vmatpush1.bf16.msra.mxu0 0
      %733 = vmatprep.subr.bf16.mxu0 0
      %734 = vmatpush1.bf16.msra.mxu0 0
      %735 = vmatprep.subr.bf16.mxu0 0
      %736 = vmatpush1.bf16.msra.mxu0 0
      %737 = vmatprep.subr.bf16.mxu0 0
      %738 = vmatpush1.bf16.msra.mxu0 0
      %739 = vmatprep.subr.bf16.mxu0 0
      %740 = vmatpush1.bf16.msra.mxu0 0
      %741 = vmatprep.subr.bf16.mxu0 0
      %742 = vmatpush1.bf16.msra.mxu0 0
      %743 = vmatprep.subr.bf16.mxu0 0
      %744 = vmatpush1.bf16.msra.mxu0 0
      %745 = vmatprep.subr.bf16.mxu0 0
      %746 = vmatpush1.bf16.msra.mxu0 0
      %747 = vmatprep.subr.bf16.mxu0 0
      %748 = vmatpush1.bf16.msra.mxu0 0
      %749 = vmatprep.subr.bf16.mxu0 0
      %750 = vmatpush1.bf16.msra.mxu0 0
      %751 = vmatprep.subr.bf16.mxu0 0
      %752 = vmatpush1.bf16.msra.mxu0 0
      %753 = vmatprep.subr.bf16.mxu0 0
      %754 = vmatpush1.bf16.msra.mxu0 0
      %755 = vmatprep.subr.bf16.mxu0 0
      %756 = vmatpush1.bf16.msra.mxu0 0
      %757 = vmatprep.subr.bf16.mxu0 0
      %758 = vmatpush1.bf16.msra.mxu0 0
      %759 = vmatprep.mubr.bf16.mxu0 0
      %760 = vmatmul.mubr.bf16.gmra.mrb[0].mxu0 %v688
      %v761 = vpop.f32.mrb[0].mxu0
      %v762 = vadd.f32 %v546, %v761
      %v763 = vpop.f32.mrb[0].mxu0
      %v764 = vpop.f32.mrb[0].mxu0
      %v765 = vadd.f32 %v549, %v764
      %v766 = vpop.f32.mrb[0].mxu0
      %767 = vmatprep.mubr.bf16.mxu0 0
      %768 = vmatmul.mubr.bf16.gmra.mrb[0].mxu0 %v690
      %v769 = vpop.f32.mrb[0].mxu0
      %v770 = vadd.f32 %v554, %v769
      %v771 = vpop.f32.mrb[0].mxu0
      %v772 = vpop.f32.mrb[0].mxu0
      %v773 = vadd.f32 %v557, %v772
      %v774 = vpop.f32.mrb[0].mxu0
      %775 = vmatprep.mubr.bf16.mxu0 0
      %776 = vmatmul.mubr.bf16.gmra.mrb[0].mxu0 %v692
      %v777 = vpop.f32.mrb[0].mxu0
      %v778 = vadd.f32 %v562, %v777
      %v779 = vpop.f32.mrb[0].mxu0
      %v780 = vpop.f32.mrb[0].mxu0
      %v781 = vadd.f32 %v565, %v780
      %v782 = vpop.f32.mrb[0].mxu0
      %783 = vmatprep.mubr.bf16.mxu0 0
      %784 = vmatmul.mubr.bf16.gmra.mrb[0].mxu0 %v694
      %v785 = vpop.f32.mrb[0].mxu0
      %v786 = vadd.f32 %v570, %v785
      %v787 = vpop.f32.mrb[0].mxu0
      %v788 = vpop.f32.mrb[0].mxu0
      %v789 = vadd.f32 %v573, %v788
      %v790 = vpop.f32.mrb[0].mxu0
      %791 = vmatprep.mubr.bf16.mxu0 0
      %792 = vmatmul.mubr.bf16.gmra.mrb[0].mxu0 %v696
      %v793 = vpop.f32.mrb[0].mxu0
      %v794 = vadd.f32 %v578, %v793
      %v795 = vpop.f32.mrb[0].mxu0
      %v796 = vpop.f32.mrb[0].mxu0
      %v797 = vadd.f32 %v581, %v796
      %v798 = vpop.f32.mrb[0].mxu0
      %799 = vmatprep.mubr.bf16.mxu0 0
      %800 = vmatmul.mubr.bf16.gmra.mrb[0].mxu0 %v698
      %v801 = vpop.f32.mrb[0].mxu0
      %v802 = vadd.f32 %v586, %v801
      %v803 = vpop.f32.mrb[0].mxu0
      %v804 = vpop.f32.mrb[0].mxu0
      %v805 = vadd.f32 %v589, %v804
      %v806 = vpop.f32.mrb[0].mxu0
      %807 = vmatprep.mubr.bf16.mxu0 0
      %808 = vmatmul.mubr.bf16.gmra.mrb[0].mxu0 %v700
      %v809 = vpop.f32.mrb[0].mxu0
      %v810 = vadd.f32 %v594, %v809
      %v811 = vpop.f32.mrb[0].mxu0
      %v812 = vpop.f32.mrb[0].mxu0
      %v813 = vadd.f32 %v597, %v812
      %v814 = vpop.f32.mrb[0].mxu0
      %815 = vmatprep.mubr.bf16.mxu0 0
      %816 = vmatmul.mubr.bf16.gmra.mrb[0].mxu0 %v702
      %v817 = vpop.f32.mrb[0].mxu0
      %v818 = vadd.f32 %v602, %v817
      %v819 = vpop.f32.mrb[0].mxu0
      %v820 = vpop.f32.mrb[0].mxu0
      %v821 = vadd.f32 %v605, %v820
      %v822 = vpop.f32.mrb[0].mxu0
      %823 = vmatprep.mubr.bf16.mxu0 0
      %824 = vmatmul.mubr.bf16.gmra.mrb[0].mxu0 %v704
      %v825 = vpop.f32.mrb[0].mxu0
      %v826 = vadd.f32 %v610, %v825
      %v827 = vpop.f32.mrb[0].mxu0
      %v828 = vpop.f32.mrb[0].mxu0
      %v829 = vadd.f32 %v613, %v828
      %v830 = vpop.f32.mrb[0].mxu0
      %831 = vmatprep.mubr.bf16.mxu0 0
      %832 = vmatmul.mubr.bf16.gmra.mrb[0].mxu0 %v706
      %v833 = vpop.f32.mrb[0].mxu0
      %v834 = vadd.f32 %v618, %v833
      %v835 = vpop.f32.mrb[0].mxu0
      %v836 = vpop.f32.mrb[0].mxu0
      %v837 = vadd.f32 %v621, %v836
      %v838 = vpop.f32.mrb[0].mxu0
      %839 = vmatprep.mubr.bf16.mxu0 0
      %840 = vmatmul.mubr.bf16.gmra.mrb[0].mxu0 %v708
      %v841 = vpop.f32.mrb[0].mxu0
      %v842 = vadd.f32 %v626, %v841
      %v843 = vpop.f32.mrb[0].mxu0
      %v844 = vpop.f32.mrb[0].mxu0
      %v845 = vadd.f32 %v629, %v844
      %v846 = vpop.f32.mrb[0].mxu0
      %847 = vmatprep.mubr.bf16.mxu0 0
      %848 = vmatmul.mubr.bf16.gmra.mrb[0].mxu0 %v710
      %v849 = vpop.f32.mrb[0].mxu0
      %v850 = vadd.f32 %v634, %v849
      %v851 = vpop.f32.mrb[0].mxu0
      %v852 = vpop.f32.mrb[0].mxu0
      %v853 = vadd.f32 %v637, %v852
      %v854 = vpop.f32.mrb[0].mxu0
      %855 = vmatprep.mubr.bf16.mxu0 0
      %856 = vmatmul.mubr.bf16.gmra.mrb[0].mxu0 %v712
      %v857 = vpop.f32.mrb[0].mxu0
      %v858 = vadd.f32 %v642, %v857
      %v859 = vpop.f32.mrb[0].mxu0
      %v860 = vpop.f32.mrb[0].mxu0
      %v861 = vadd.f32 %v645, %v860
      %v862 = vpop.f32.mrb[0].mxu0
      %863 = vmatprep.mubr.bf16.mxu0 0
      %864 = vmatmul.mubr.bf16.gmra.mrb[0].mxu0 %v714
      %v865 = vpop.f32.mrb[0].mxu0
      %v866 = vadd.f32 %v650, %v865
      %v867 = vpop.f32.mrb[0].mxu0
      %v868 = vpop.f32.mrb[0].mxu0
      %v869 = vadd.f32 %v653, %v868
      %v870 = vpop.f32.mrb[0].mxu0
      %871 = vmatprep.mubr.bf16.mxu0 0
      %872 = vmatmul.mubr.bf16.gmra.mrb[0].mxu0 %v716
      %v873 = vpop.f32.mrb[0].mxu0
      %v874 = vadd.f32 %v658, %v873
      %v875 = vpop.f32.mrb[0].mxu0
      %v876 = vpop.f32.mrb[0].mxu0
      %v877 = vadd.f32 %v661, %v876
      %v878 = vpop.f32.mrb[0].mxu0
      %879 = vmatprep.mubr.bf16.mxu0 0
      %880 = vmatmul.mubr.bf16.gmra.mrb[0].mxu0 %v718
      %v881 = vpop.f32.mrb[0].mxu0
      %v882 = vadd.f32 %v666, %v881
      %v883 = vpop.f32.mrb[0].mxu0
      %v884 = vpop.f32.mrb[0].mxu0
      %v885 = vadd.f32 %v669, %v884
      %v886 = vpop.f32.mrb[0].mxu0
      %887 = vmatprep.mubr.bf16.mxu0 0
      %888 = vmatmul.mubr.bf16.gmra.mrb[0].mxu0 %v720
      %v889 = vpop.f32.mrb[0].mxu0
      %v890 = vadd.f32 %v674, %v889
      %v891 = vpop.f32.mrb[0].mxu0
      %v892 = vpop.f32.mrb[0].mxu0
      %v893 = vadd.f32 %v677, %v892
      %v894 = vpop.f32.mrb[0].mxu0
      %895 = vmatprep.mubr.bf16.mxu0 0
      %896 = vmatmul.mubr.bf16.gmra.mrb[0].mxu0 %v722
      %v897 = vpop.f32.mrb[0].mxu0
      %v898 = vadd.f32 %v682, %v897
      %v899 = vpop.f32.mrb[0].mxu0
      %v900 = vpop.f32.mrb[0].mxu0
      %v901 = vadd.f32 %v685, %v900
      %v902 = vpop.f32.mrb[0].mxu0
      %903 = vdwg.mxu0
      %s904 = scalar_lea.vmem %s1, 8
      %v905 = vld [vmem:[%s904] sm:$0xf]
      %vm925 = vcmask 1046528
      %v926 = vrot.slane %v281, 1
      %v927 = vrot.slane %v282, 1
      %v928 = vsel %vm925, %v926, %v927
      %v929 = vrot.slane %v283, 1
      %v930 = vsel %vm925, %v927, %v929
      %v931 = vrot.slane %v284, 1
      %v932 = vsel %vm925, %v929, %v931
      %v933 = vrot.slane %v285, 1
      %v934 = vsel %vm925, %v931, %v933
      %v935 = vrot.slane %v286, 1
      %v936 = vsel %vm925, %v933, %v935
      %v937 = vrot.slane %v287, 1
      %v938 = vsel %vm925, %v935, %v937
      %v939 = vrot.slane %v288, 1
      %v940 = vsel %vm925, %v937, %v939
      %v941 = vrot.slane %v289, 1
      %v942 = vsel %vm925, %v939, %v941
      %v943 = vrot.slane %v290, 1
      %v944 = vsel %vm925, %v941, %v943
      %v945 = vrot.slane %v291, 1
      %v946 = vsel %vm925, %v943, %v945
      %v947 = vrot.slane %v292, 1
      %v948 = vsel %vm925, %v945, %v947
      %v949 = vrot.slane %v293, 1
      %v950 = vsel %vm925, %v947, %v949
      %v951 = vrot.slane %v294, 1
      %v952 = vsel %vm925, %v949, %v951
      %v953 = vrot.slane %v295, 1
      %v954 = vsel %vm925, %v951, %v953
      %v955 = vrot.slane %v296, 1
      %v956 = vsel %vm925, %v953, %v955
      %v957 = vrot.slane %v297, 1
      %v958 = vsel %vm925, %v955, %v957
      %v959 = vrot.slane %v298, 1
      %v960 = vsel %vm925, %v957, %v959
      %v961 = vrot.slane %v300, 1
      %v962 = vsel %vm925, %v959, %v961
      %v964 = vsel %vm452, %v928, 0
      %v967 = vsel %vm452, %v930, 0
      %v970 = vsel %vm452, %v932, 0
      %v973 = vsel %vm452, %v934, 0
      %v976 = vsel %vm452, %v936, 0
      %v979 = vsel %vm452, %v938, 0
      %v982 = vsel %vm452, %v940, 0
      %v985 = vsel %vm452, %v942, 0
      %v988 = vsel %vm452, %v944, 0
      %v991 = vsel %vm452, %v946, 0
      %v994 = vsel %vm452, %v948, 0
      %v997 = vsel %vm452, %v950, 0
      %v1000 = vsel %vm452, %v952, 0
      %v1003 = vsel %vm452, %v954, 0
      %v1006 = vsel %vm452, %v956, 0
      %v1009 = vsel %vm452, %v958, 0
      %v1012 = vsel %vm452, %v960, 0
      %v1015 = vsel %vm452, %v962, 0
      %v1018 = vsel %vm507, %v905, 0
      %1020 = vmatprep.subr.bf16.mxu0 0
      %1021 = vmatpush1.bf16.msra.mxu0 %v1018
      %1022 = vmatprep.subr.bf16.mxu0 0
      %1023 = vmatpush1.bf16.msra.mxu0 0
      %1024 = vmatprep.subr.bf16.mxu0 0
      %1025 = vmatpush1.bf16.msra.mxu0 0
      %1026 = vmatprep.subr.bf16.mxu0 0
      %1027 = vmatpush1.bf16.msra.mxu0 0
      %1028 = vmatprep.subr.bf16.mxu0 0
      %1029 = vmatpush1.bf16.msra.mxu0 0
      %1030 = vmatprep.subr.bf16.mxu0 0
      %1031 = vmatpush1.bf16.msra.mxu0 0
      %1032 = vmatprep.subr.bf16.mxu0 0
      %1033 = vmatpush1.bf16.msra.mxu0 0
      %1034 = vmatprep.subr.bf16.mxu0 0
      %1035 = vmatpush1.bf16.msra.mxu0 0
      %1036 = vmatprep.subr.bf16.mxu0 0
      %1037 = vmatpush1.bf16.msra.mxu0 0
      %1038 = vmatprep.subr.bf16.mxu0 0
      %1039 = vmatpush1.bf16.msra.mxu0 0
      %1040 = vmatprep.subr.bf16.mxu0 0
      %1041 = vmatpush1.bf16.msra.mxu0 0
      %1042 = vmatprep.subr.bf16.mxu0 0
      %1043 = vmatpush1.bf16.msra.mxu0 0
      %1044 = vmatprep.subr.bf16.mxu0 0
      %1045 = vmatpush1.bf16.msra.mxu0 0
      %1046 = vmatprep.subr.bf16.mxu0 0
      %1047 = vmatpush1.bf16.msra.mxu0 0
      %1048 = vmatprep.subr.bf16.mxu0 0
      %1049 = vmatpush1.bf16.msra.mxu0 0
      %1050 = vmatprep.subr.bf16.mxu0 0
      %1051 = vmatpush1.bf16.msra.mxu0 0
      %1052 = vmatprep.mubr.bf16.mxu0 0
      %1053 = vmatmul.mubr.bf16.gmra.mrb[0].mxu0 %v964
      %v1054 = vpop.f32.mrb[0].mxu0
      %v1055 = vadd.f32 0.0, %v1054
      %v1056 = vpop.f32.mrb[0].mxu0
      %v1057 = vpop.f32.mrb[0].mxu0
      %v1058 = vadd.f32 0.0, %v1057
      %v1059 = vpop.f32.mrb[0].mxu0
      %1060 = vmatprep.mubr.bf16.mxu0 0
      %1061 = vmatmul.mubr.bf16.gmra.mrb[0].mxu0 %v967
      %v1062 = vpop.f32.mrb[0].mxu0
      %v1063 = vadd.f32 0.0, %v1062
      %v1064 = vpop.f32.mrb[0].mxu0
      %v1065 = vpop.f32.mrb[0].mxu0
      %v1066 = vadd.f32 0.0, %v1065
      %v1067 = vpop.f32.mrb[0].mxu0
      %1068 = vmatprep.mubr.bf16.mxu0 0
      %1069 = vmatmul.mubr.bf16.gmra.mrb[0].mxu0 %v970
      %v1070 = vpop.f32.mrb[0].mxu0
      %v1071 = vadd.f32 0.0, %v1070
      %v1072 = vpop.f32.mrb[0].mxu0
      %v1073 = vpop.f32.mrb[0].mxu0
      %v1074 = vadd.f32 0.0, %v1073
      %v1075 = vpop.f32.mrb[0].mxu0
      %1076 = vmatprep.mubr.bf16.mxu0 0
      %1077 = vmatmul.mubr.bf16.gmra.mrb[0].mxu0 %v973
      %v1078 = vpop.f32.mrb[0].mxu0
      %v1079 = vadd.f32 0.0, %v1078
      %v1080 = vpop.f32.mrb[0].mxu0
      %v1081 = vpop.f32.mrb[0].mxu0
      %v1082 = vadd.f32 0.0, %v1081
      %v1083 = vpop.f32.mrb[0].mxu0
      %1084 = vmatprep.mubr.bf16.mxu0 0
      %1085 = vmatmul.mubr.bf16.gmra.mrb[0].mxu0 %v976
      %v1086 = vpop.f32.mrb[0].mxu0
      %v1087 = vadd.f32 0.0, %v1086
      %v1088 = vpop.f32.mrb[0].mxu0
      %v1089 = vpop.f32.mrb[0].mxu0
      %v1090 = vadd.f32 0.0, %v1089
      %v1091 = vpop.f32.mrb[0].mxu0
      %1092 = vmatprep.mubr.bf16.mxu0 0
      %1093 = vmatmul.mubr.bf16.gmra.mrb[0].mxu0 %v979
      %v1094 = vpop.f32.mrb[0].mxu0
      %v1095 = vadd.f32 0.0, %v1094
      %v1096 = vpop.f32.mrb[0].mxu0
      %v1097 = vpop.f32.mrb[0].mxu0
      %v1098 = vadd.f32 0.0, %v1097
      %v1099 = vpop.f32.mrb[0].mxu0
      %1100 = vmatprep.mubr.bf16.mxu0 0
      %1101 = vmatmul.mubr.bf16.gmra.mrb[0].mxu0 %v982
      %v1102 = vpop.f32.mrb[0].mxu0
      %v1103 = vadd.f32 0.0, %v1102
      %v1104 = vpop.f32.mrb[0].mxu0
      %v1105 = vpop.f32.mrb[0].mxu0
      %v1106 = vadd.f32 0.0, %v1105
      %v1107 = vpop.f32.mrb[0].mxu0
      %1108 = vmatprep.mubr.bf16.mxu0 0
      %1109 = vmatmul.mubr.bf16.gmra.mrb[0].mxu0 %v985
      %v1110 = vpop.f32.mrb[0].mxu0
      %v1111 = vadd.f32 0.0, %v1110
      %v1112 = vpop.f32.mrb[0].mxu0
      %v1113 = vpop.f32.mrb[0].mxu0
      %v1114 = vadd.f32 0.0, %v1113
      %v1115 = vpop.f32.mrb[0].mxu0
      %1116 = vmatprep.mubr.bf16.mxu0 0
      %1117 = vmatmul.mubr.bf16.gmra.mrb[0].mxu0 %v988
      %v1118 = vpop.f32.mrb[0].mxu0
      %v1119 = vadd.f32 0.0, %v1118
      %v1120 = vpop.f32.mrb[0].mxu0
      %v1121 = vpop.f32.mrb[0].mxu0
      %v1122 = vadd.f32 0.0, %v1121
      %v1123 = vpop.f32.mrb[0].mxu0
      %1124 = vmatprep.mubr.bf16.mxu0 0
      %1125 = vmatmul.mubr.bf16.gmra.mrb[0].mxu0 %v991
      %v1126 = vpop.f32.mrb[0].mxu0
      %v1127 = vadd.f32 0.0, %v1126
      %v1128 = vpop.f32.mrb[0].mxu0
      %v1129 = vpop.f32.mrb[0].mxu0
      %v1130 = vadd.f32 0.0, %v1129
      %v1131 = vpop.f32.mrb[0].mxu0
      %1132 = vmatprep.mubr.bf16.mxu0 0
      %1133 = vmatmul.mubr.bf16.gmra.mrb[0].mxu0 %v994
      %v1134 = vpop.f32.mrb[0].mxu0
      %v1135 = vadd.f32 0.0, %v1134
      %v1136 = vpop.f32.mrb[0].mxu0
      %v1137 = vpop.f32.mrb[0].mxu0
      %v1138 = vadd.f32 0.0, %v1137
      %v1139 = vpop.f32.mrb[0].mxu0
      %1140 = vmatprep.mubr.bf16.mxu0 0
      %1141 = vmatmul.mubr.bf16.gmra.mrb[0].mxu0 %v997
      %v1142 = vpop.f32.mrb[0].mxu0
      %v1143 = vadd.f32 0.0, %v1142
      %v1144 = vpop.f32.mrb[0].mxu0
      %v1145 = vpop.f32.mrb[0].mxu0
      %v1146 = vadd.f32 0.0, %v1145
      %v1147 = vpop.f32.mrb[0].mxu0
      %1148 = vmatprep.mubr.bf16.mxu0 0
      %1149 = vmatmul.mubr.bf16.gmra.mrb[0].mxu0 %v1000
      %v1150 = vpop.f32.mrb[0].mxu0
      %v1151 = vadd.f32 0.0, %v1150
      %v1152 = vpop.f32.mrb[0].mxu0
      %v1153 = vpop.f32.mrb[0].mxu0
      %v1154 = vadd.f32 0.0, %v1153
      %v1155 = vpop.f32.mrb[0].mxu0
      %1156 = vmatprep.mubr.bf16.mxu0 0
      %1157 = vmatmul.mubr.bf16.gmra.mrb[0].mxu0 %v1003
      %v1158 = vpop.f32.mrb[0].mxu0
      %v1159 = vadd.f32 0.0, %v1158
      %v1160 = vpop.f32.mrb[0].mxu0
      %v1161 = vpop.f32.mrb[0].mxu0
      %v1162 = vadd.f32 0.0, %v1161
      %v1163 = vpop.f32.mrb[0].mxu0
      %1164 = vmatprep.mubr.bf16.mxu0 0
      %1165 = vmatmul.mubr.bf16.gmra.mrb[0].mxu0 %v1006
      %v1166 = vpop.f32.mrb[0].mxu0
      %v1167 = vadd.f32 0.0, %v1166
      %v1168 = vpop.f32.mrb[0].mxu0
      %v1169 = vpop.f32.mrb[0].mxu0
      %v1170 = vadd.f32 0.0, %v1169
      %v1171 = vpop.f32.mrb[0].mxu0
      %1172 = vmatprep.mubr.bf16.mxu0 0
      %1173 = vmatmul.mubr.bf16.gmra.mrb[0].mxu0 %v1009
      %v1174 = vpop.f32.mrb[0].mxu0
      %v1175 = vadd.f32 0.0, %v1174
      %v1176 = vpop.f32.mrb[0].mxu0
      %v1177 = vpop.f32.mrb[0].mxu0
      %v1178 = vadd.f32 0.0, %v1177
      %v1179 = vpop.f32.mrb[0].mxu0
      %1180 = vmatprep.mubr.bf16.mxu0 0
      %1181 = vmatmul.mubr.bf16.gmra.mrb[0].mxu0 %v1012
      %v1182 = vpop.f32.mrb[0].mxu0
      %v1183 = vadd.f32 0.0, %v1182
      %v1184 = vpop.f32.mrb[0].mxu0
      %v1185 = vpop.f32.mrb[0].mxu0
      %v1186 = vadd.f32 0.0, %v1185
      %v1187 = vpop.f32.mrb[0].mxu0
      %1188 = vmatprep.mubr.bf16.mxu0 0
      %1189 = vmatmul.mubr.bf16.gmra.mrb[0].mxu0 %v1015
      %v1190 = vpop.f32.mrb[0].mxu0
      %v1191 = vadd.f32 0.0, %v1190
      %v1192 = vpop.f32.mrb[0].mxu0
      %v1193 = vpop.f32.mrb[0].mxu0
      %v1194 = vadd.f32 0.0, %v1193
      %v1195 = vpop.f32.mrb[0].mxu0
      %1196 = vdwg.mxu0
      %v1197 = vadd.f32 %v762, %v1055
      %v1198 = vadd.f32 %v765, %v1058
      %v1199 = vadd.f32 %v770, %v1063
      %v1200 = vadd.f32 %v773, %v1066
      %v1201 = vadd.f32 %v778, %v1071
      %v1202 = vadd.f32 %v781, %v1074
      %v1203 = vadd.f32 %v786, %v1079
      %v1204 = vadd.f32 %v789, %v1082
      %v1205 = vadd.f32 %v794, %v1087
      %v1206 = vadd.f32 %v797, %v1090
      %v1207 = vadd.f32 %v802, %v1095
      %v1208 = vadd.f32 %v805, %v1098
      %v1209 = vadd.f32 %v810, %v1103
      %v1210 = vadd.f32 %v813, %v1106
      %v1211 = vadd.f32 %v818, %v1111
      %v1212 = vadd.f32 %v821, %v1114
      %v1213 = vadd.f32 %v826, %v1119
      %v1214 = vadd.f32 %v829, %v1122
      %v1215 = vadd.f32 %v834, %v1127
      %v1216 = vadd.f32 %v837, %v1130
      %v1217 = vadd.f32 %v842, %v1135
      %v1218 = vadd.f32 %v845, %v1138
      %v1219 = vadd.f32 %v850, %v1143
      %v1220 = vadd.f32 %v853, %v1146
      %v1221 = vadd.f32 %v858, %v1151
      %v1222 = vadd.f32 %v861, %v1154
      %v1223 = vadd.f32 %v866, %v1159
      %v1224 = vadd.f32 %v869, %v1162
      %v1225 = vadd.f32 %v874, %v1167
      %v1226 = vadd.f32 %v877, %v1170
      %v1227 = vadd.f32 %v882, %v1175
      %v1228 = vadd.f32 %v885, %v1178
      %v1229 = vadd.f32 %v890, %v1183
      %v1230 = vadd.f32 %v893, %v1186
      %v1231 = vadd.f32 %v898, %v1191
      %v1232 = vadd.f32 %v901, %v1194
      %v1233 = vpack.c.bf16 %v277, %v276
      %v1234 = vpack.c.bf16 %v278, %v278
      %s1235 = scalar_lea.vmem %s1, 12
      %v1236 = vld [vmem:[%s1235] sm:$0xf]
      %v1239 = vrot.slane %v1233, 1
      %v1240 = vsel %vm925, %v959, %v1239
      %v1241 = vrot.slane %v1234, 1
      %v1242 = vsel %vm925, %v1239, %v1241
      %v1244 = vsel %vm452, %v1240, 0
      %v1247 = vsel %vm452, %v1242, 0
      %v1250 = vsel %vm507, %v1236, 0
      %1252 = vmatprep.subr.bf16.mxu0 0
      %1253 = vmatpush1.bf16.msra.mxu0 %v1250
      %1254 = vmatprep.subr.bf16.mxu0 0
      %1255 = vmatpush1.bf16.msra.mxu0 0
      %1256 = vmatprep.subr.bf16.mxu0 0
      %1257 = vmatpush1.bf16.msra.mxu0 0
      %1258 = vmatprep.subr.bf16.mxu0 0
      %1259 = vmatpush1.bf16.msra.mxu0 0
      %1260 = vmatprep.subr.bf16.mxu0 0
      %1261 = vmatpush1.bf16.msra.mxu0 0
      %1262 = vmatprep.subr.bf16.mxu0 0
      %1263 = vmatpush1.bf16.msra.mxu0 0
      %1264 = vmatprep.subr.bf16.mxu0 0
      %1265 = vmatpush1.bf16.msra.mxu0 0
      %1266 = vmatprep.subr.bf16.mxu0 0
      %1267 = vmatpush1.bf16.msra.mxu0 0
      %1268 = vmatprep.subr.bf16.mxu0 0
      %1269 = vmatpush1.bf16.msra.mxu0 0
      %1270 = vmatprep.subr.bf16.mxu0 0
      %1271 = vmatpush1.bf16.msra.mxu0 0
      %1272 = vmatprep.subr.bf16.mxu0 0
      %1273 = vmatpush1.bf16.msra.mxu0 0
      %1274 = vmatprep.subr.bf16.mxu0 0
      %1275 = vmatpush1.bf16.msra.mxu0 0
      %1276 = vmatprep.subr.bf16.mxu0 0
      %1277 = vmatpush1.bf16.msra.mxu0 0
      %1278 = vmatprep.subr.bf16.mxu0 0
      %1279 = vmatpush1.bf16.msra.mxu0 0
      %1280 = vmatprep.subr.bf16.mxu0 0
      %1281 = vmatpush1.bf16.msra.mxu0 0
      %1282 = vmatprep.subr.bf16.mxu0 0
      %1283 = vmatpush1.bf16.msra.mxu0 0
      %1284 = vmatprep.mubr.bf16.mxu0 0
      %1285 = vmatmul.mubr.bf16.gmra.mrb[0].mxu0 %v967
      %v1286 = vpop.f32.mrb[0].mxu0
      %v1287 = vadd.f32 0.0, %v1286
      %v1288 = vpop.f32.mrb[0].mxu0
      %v1289 = vpop.f32.mrb[0].mxu0
      %v1290 = vadd.f32 0.0, %v1289
      %v1291 = vpop.f32.mrb[0].mxu0
      %1292 = vmatprep.mubr.bf16.mxu0 0
      %1293 = vmatmul.mubr.bf16.gmra.mrb[0].mxu0 %v970
      %v1294 = vpop.f32.mrb[0].mxu0
      %v1295 = vadd.f32 0.0, %v1294
      %v1296 = vpop.f32.mrb[0].mxu0
      %v1297 = vpop.f32.mrb[0].mxu0
      %v1298 = vadd.f32 0.0, %v1297
      %v1299 = vpop.f32.mrb[0].mxu0
      %1300 = vmatprep.mubr.bf16.mxu0 0
      %1301 = vmatmul.mubr.bf16.gmra.mrb[0].mxu0 %v973
      %v1302 = vpop.f32.mrb[0].mxu0
      %v1303 = vadd.f32 0.0, %v1302
      %v1304 = vpop.f32.mrb[0].mxu0
      %v1305 = vpop.f32.mrb[0].mxu0
      %v1306 = vadd.f32 0.0, %v1305
      %v1307 = vpop.f32.mrb[0].mxu0
      %1308 = vmatprep.mubr.bf16.mxu0 0
      %1309 = vmatmul.mubr.bf16.gmra.mrb[0].mxu0 %v976
      %v1310 = vpop.f32.mrb[0].mxu0
      %v1311 = vadd.f32 0.0, %v1310
      %v1312 = vpop.f32.mrb[0].mxu0
      %v1313 = vpop.f32.mrb[0].mxu0
      %v1314 = vadd.f32 0.0, %v1313
      %v1315 = vpop.f32.mrb[0].mxu0
      %1316 = vmatprep.mubr.bf16.mxu0 0
      %1317 = vmatmul.mubr.bf16.gmra.mrb[0].mxu0 %v979
      %v1318 = vpop.f32.mrb[0].mxu0
      %v1319 = vadd.f32 0.0, %v1318
      %v1320 = vpop.f32.mrb[0].mxu0
      %v1321 = vpop.f32.mrb[0].mxu0
      %v1322 = vadd.f32 0.0, %v1321
      %v1323 = vpop.f32.mrb[0].mxu0
      %1324 = vmatprep.mubr.bf16.mxu0 0
      %1325 = vmatmul.mubr.bf16.gmra.mrb[0].mxu0 %v982
      %v1326 = vpop.f32.mrb[0].mxu0
      %v1327 = vadd.f32 0.0, %v1326
      %v1328 = vpop.f32.mrb[0].mxu0
      %v1329 = vpop.f32.mrb[0].mxu0
      %v1330 = vadd.f32 0.0, %v1329
      %v1331 = vpop.f32.mrb[0].mxu0
      %1332 = vmatprep.mubr.bf16.mxu0 0
      %1333 = vmatmul.mubr.bf16.gmra.mrb[0].mxu0 %v985
      %v1334 = vpop.f32.mrb[0].mxu0
      %v1335 = vadd.f32 0.0, %v1334
      %v1336 = vpop.f32.mrb[0].mxu0
      %v1337 = vpop.f32.mrb[0].mxu0
      %v1338 = vadd.f32 0.0, %v1337
      %v1339 = vpop.f32.mrb[0].mxu0
      %1340 = vmatprep.mubr.bf16.mxu0 0
      %1341 = vmatmul.mubr.bf16.gmra.mrb[0].mxu0 %v988
      %v1342 = vpop.f32.mrb[0].mxu0
      %v1343 = vadd.f32 0.0, %v1342
      %v1344 = vpop.f32.mrb[0].mxu0
      %v1345 = vpop.f32.mrb[0].mxu0
      %v1346 = vadd.f32 0.0, %v1345
      %v1347 = vpop.f32.mrb[0].mxu0
      %1348 = vmatprep.mubr.bf16.mxu0 0
      %1349 = vmatmul.mubr.bf16.gmra.mrb[0].mxu0 %v991
      %v1350 = vpop.f32.mrb[0].mxu0
      %v1351 = vadd.f32 0.0, %v1350
      %v1352 = vpop.f32.mrb[0].mxu0
      %v1353 = vpop.f32.mrb[0].mxu0
      %v1354 = vadd.f32 0.0, %v1353
      %v1355 = vpop.f32.mrb[0].mxu0
      %1356 = vmatprep.mubr.bf16.mxu0 0
      %1357 = vmatmul.mubr.bf16.gmra.mrb[0].mxu0 %v994
      %v1358 = vpop.f32.mrb[0].mxu0
      %v1359 = vadd.f32 0.0, %v1358
      %v1360 = vpop.f32.mrb[0].mxu0
      %v1361 = vpop.f32.mrb[0].mxu0
      %v1362 = vadd.f32 0.0, %v1361
      %v1363 = vpop.f32.mrb[0].mxu0
      %1364 = vmatprep.mubr.bf16.mxu0 0
      %1365 = vmatmul.mubr.bf16.gmra.mrb[0].mxu0 %v997
      %v1366 = vpop.f32.mrb[0].mxu0
      %v1367 = vadd.f32 0.0, %v1366
      %v1368 = vpop.f32.mrb[0].mxu0
      %v1369 = vpop.f32.mrb[0].mxu0
      %v1370 = vadd.f32 0.0, %v1369
      %v1371 = vpop.f32.mrb[0].mxu0
      %1372 = vmatprep.mubr.bf16.mxu0 0
      %1373 = vmatmul.mubr.bf16.gmra.mrb[0].mxu0 %v1000
      %v1374 = vpop.f32.mrb[0].mxu0
      %v1375 = vadd.f32 0.0, %v1374
      %v1376 = vpop.f32.mrb[0].mxu0
      %v1377 = vpop.f32.mrb[0].mxu0
      %v1378 = vadd.f32 0.0, %v1377
      %v1379 = vpop.f32.mrb[0].mxu0
      %1380 = vmatprep.mubr.bf16.mxu0 0
      %1381 = vmatmul.mubr.bf16.gmra.mrb[0].mxu0 %v1003
      %v1382 = vpop.f32.mrb[0].mxu0
      %v1383 = vadd.f32 0.0, %v1382
      %v1384 = vpop.f32.mrb[0].mxu0
      %v1385 = vpop.f32.mrb[0].mxu0
      %v1386 = vadd.f32 0.0, %v1385
      %v1387 = vpop.f32.mrb[0].mxu0
      %1388 = vmatprep.mubr.bf16.mxu0 0
      %1389 = vmatmul.mubr.bf16.gmra.mrb[0].mxu0 %v1006
      %v1390 = vpop.f32.mrb[0].mxu0
      %v1391 = vadd.f32 0.0, %v1390
      %v1392 = vpop.f32.mrb[0].mxu0
      %v1393 = vpop.f32.mrb[0].mxu0
      %v1394 = vadd.f32 0.0, %v1393
      %v1395 = vpop.f32.mrb[0].mxu0
      %1396 = vmatprep.mubr.bf16.mxu0 0
      %1397 = vmatmul.mubr.bf16.gmra.mrb[0].mxu0 %v1009
      %v1398 = vpop.f32.mrb[0].mxu0
      %v1399 = vadd.f32 0.0, %v1398
      %v1400 = vpop.f32.mrb[0].mxu0
      %v1401 = vpop.f32.mrb[0].mxu0
      %v1402 = vadd.f32 0.0, %v1401
      %v1403 = vpop.f32.mrb[0].mxu0
      %1404 = vmatprep.mubr.bf16.mxu0 0
      %1405 = vmatmul.mubr.bf16.gmra.mrb[0].mxu0 %v1012
      %v1406 = vpop.f32.mrb[0].mxu0
      %v1407 = vadd.f32 0.0, %v1406
      %v1408 = vpop.f32.mrb[0].mxu0
      %v1409 = vpop.f32.mrb[0].mxu0
      %v1410 = vadd.f32 0.0, %v1409
      %v1411 = vpop.f32.mrb[0].mxu0
      %1412 = vmatprep.mubr.bf16.mxu0 0
      %1413 = vmatmul.mubr.bf16.gmra.mrb[0].mxu0 %v1244
      %v1414 = vpop.f32.mrb[0].mxu0
      %v1415 = vadd.f32 0.0, %v1414
      %v1416 = vpop.f32.mrb[0].mxu0
      %v1417 = vpop.f32.mrb[0].mxu0
      %v1418 = vadd.f32 0.0, %v1417
      %v1419 = vpop.f32.mrb[0].mxu0
      %1420 = vmatprep.mubr.bf16.mxu0 0
      %1421 = vmatmul.mubr.bf16.gmra.mrb[0].mxu0 %v1247
      %v1422 = vpop.f32.mrb[0].mxu0
      %v1423 = vadd.f32 0.0, %v1422
      %v1424 = vpop.f32.mrb[0].mxu0
      %v1425 = vpop.f32.mrb[0].mxu0
      %v1426 = vadd.f32 0.0, %v1425
      %v1427 = vpop.f32.mrb[0].mxu0
      %1428 = vdwg.mxu0
      %v1429 = vadd.f32 %v1197, %v1287
      %v1430 = vadd.f32 %v1198, %v1290
      %v1431 = vadd.f32 %v1199, %v1295
      %v1432 = vadd.f32 %v1200, %v1298
      %v1433 = vadd.f32 %v1201, %v1303
      %v1434 = vadd.f32 %v1202, %v1306
      %v1435 = vadd.f32 %v1203, %v1311
      %v1436 = vadd.f32 %v1204, %v1314
      %v1437 = vadd.f32 %v1205, %v1319
      %v1438 = vadd.f32 %v1206, %v1322
      %v1439 = vadd.f32 %v1207, %v1327
      %v1440 = vadd.f32 %v1208, %v1330
      %v1441 = vadd.f32 %v1209, %v1335
      %v1442 = vadd.f32 %v1210, %v1338
      %v1443 = vadd.f32 %v1211, %v1343
      %v1444 = vadd.f32 %v1212, %v1346
      %v1445 = vadd.f32 %v1213, %v1351
      %v1446 = vadd.f32 %v1214, %v1354
      %v1447 = vadd.f32 %v1215, %v1359
      %v1448 = vadd.f32 %v1216, %v1362
      %v1449 = vadd.f32 %v1217, %v1367
      %v1450 = vadd.f32 %v1218, %v1370
      %v1451 = vadd.f32 %v1219, %v1375
      %v1452 = vadd.f32 %v1220, %v1378
      %v1453 = vadd.f32 %v1221, %v1383
      %v1454 = vadd.f32 %v1222, %v1386
      %v1455 = vadd.f32 %v1223, %v1391
      %v1456 = vadd.f32 %v1224, %v1394
      %v1457 = vadd.f32 %v1225, %v1399
      %v1458 = vadd.f32 %v1226, %v1402
      %v1459 = vadd.f32 %v1227, %v1407
      %v1460 = vadd.f32 %v1228, %v1410
      %v1461 = vadd.f32 %v1229, %v1415
      %v1462 = vadd.f32 %v1230, %v1418
      %v1463 = vadd.f32 %v1231, %v1423
      %v1464 = vadd.f32 %v1232, %v1426
      %s1465 = scalar_lea.vmem %s1, 16
      %v1466 = vld [vmem:[%s1465] sm:$0xf]
      %vm1467 = vsmask.f32 6400
      %v1468 = vrot.slane %v316, 1
      %v1469 = vrot.slane %v312, 2
      %v1470 = vor.u32 %v1468, %v1469
      %v1471 = vrot.slane %v324, 1
      %v1472 = vrot.slane %v320, 2
      %v1473 = vor.u32 %v1471, %v1472
      %v1474 = vsel %vm1467, %v1470, %v1473
      %v1475 = vrot.slane %v332, 1
      %v1476 = vrot.slane %v328, 2
      %v1477 = vor.u32 %v1475, %v1476
      %v1478 = vsel %vm1467, %v1473, %v1477
      %v1479 = vrot.slane %v340, 1
      %v1480 = vrot.slane %v336, 2
      %v1481 = vor.u32 %v1479, %v1480
      %v1482 = vsel %vm1467, %v1477, %v1481
      %v1483 = vrot.slane %v348, 1
      %v1484 = vrot.slane %v344, 2
      %v1485 = vor.u32 %v1483, %v1484
      %v1486 = vsel %vm1467, %v1481, %v1485
      %v1487 = vrot.slane %v356, 1
      %v1488 = vrot.slane %v352, 2
      %v1489 = vor.u32 %v1487, %v1488
      %v1490 = vsel %vm1467, %v1485, %v1489
      %v1491 = vrot.slane %v364, 1
      %v1492 = vrot.slane %v360, 2
      %v1493 = vor.u32 %v1491, %v1492
      %v1494 = vsel %vm1467, %v1489, %v1493
      %v1495 = vrot.slane %v372, 1
      %v1496 = vrot.slane %v368, 2
      %v1497 = vor.u32 %v1495, %v1496
      %v1498 = vsel %vm1467, %v1493, %v1497
      %v1499 = vrot.slane %v380, 1
      %v1500 = vrot.slane %v376, 2
      %v1501 = vor.u32 %v1499, %v1500
      %v1502 = vsel %vm1467, %v1497, %v1501
      %v1503 = vrot.slane %v388, 1
      %v1504 = vrot.slane %v384, 2
      %v1505 = vor.u32 %v1503, %v1504
      %v1506 = vsel %vm1467, %v1501, %v1505
      %v1507 = vrot.slane %v396, 1
      %v1508 = vrot.slane %v392, 2
      %v1509 = vor.u32 %v1507, %v1508
      %v1510 = vsel %vm1467, %v1505, %v1509
      %v1511 = vrot.slane %v404, 1
      %v1512 = vrot.slane %v400, 2
      %v1513 = vor.u32 %v1511, %v1512
      %v1514 = vsel %vm1467, %v1509, %v1513
      %v1515 = vrot.slane %v412, 1
      %v1516 = vrot.slane %v408, 2
      %v1517 = vor.u32 %v1515, %v1516
      %v1518 = vsel %vm1467, %v1513, %v1517
      %v1519 = vrot.slane %v420, 1
      %v1520 = vrot.slane %v416, 2
      %v1521 = vor.u32 %v1519, %v1520
      %v1522 = vsel %vm1467, %v1517, %v1521
      %v1523 = vrot.slane %v428, 1
      %v1524 = vrot.slane %v424, 2
      %v1525 = vor.u32 %v1523, %v1524
      %v1526 = vsel %vm1467, %v1521, %v1525
      %v1527 = vrot.slane %v436, 1
      %v1528 = vrot.slane %v432, 2
      %v1529 = vor.u32 %v1527, %v1528
      %v1530 = vsel %vm1467, %v1525, %v1529
      %v1531 = vrot.slane %v444, 1
      %v1532 = vrot.slane %v440, 2
      %v1533 = vor.u32 %v1531, %v1532
      %v1534 = vsel %vm1467, %v1529, %v1533
      %v1536 = vshrl.u32 %v1233, 16
      %v1538 = vrot.slane %v1536, 1
      %v1539 = vshll.u32 %v1233, 16
      %v1541 = vrot.slane %v1539, 2
      %v1542 = vor.u32 %v1538, %v1541
      %v1543 = vsel %vm1467, %v1533, %v1542
      %v1545 = vshrl.u32 %v1234, 16
      %v1547 = vrot.slane %v1545, 1
      %v1548 = vshll.u32 %v1234, 16
      %v1550 = vrot.slane %v1548, 2
      %v1551 = vor.u32 %v1547, %v1550
      %v1552 = vsel %vm1467, %v1542, %v1551
      %v1554 = vsel %vm452, %v1474, 0
      %v1557 = vsel %vm452, %v1478, 0
      %v1560 = vsel %vm452, %v1482, 0
      %v1563 = vsel %vm452, %v1486, 0
      %v1566 = vsel %vm452, %v1490, 0
      %v1569 = vsel %vm452, %v1494, 0
      %v1572 = vsel %vm452, %v1498, 0
      %v1575 = vsel %vm452, %v1502, 0
      %v1578 = vsel %vm452, %v1506, 0
      %v1581 = vsel %vm452, %v1510, 0
      %v1584 = vsel %vm452, %v1514, 0
      %v1587 = vsel %vm452, %v1518, 0
      %v1590 = vsel %vm452, %v1522, 0
      %v1593 = vsel %vm452, %v1526, 0
      %v1596 = vsel %vm452, %v1530, 0
      %v1599 = vsel %vm452, %v1534, 0
      %v1602 = vsel %vm452, %v1543, 0
      %v1605 = vsel %vm452, %v1552, 0
      %v1608 = vsel %vm507, %v1466, 0
      %1610 = vmatprep.subr.bf16.mxu0 0
      %1611 = vmatpush1.bf16.msra.mxu0 %v1608
      %1612 = vmatprep.subr.bf16.mxu0 0
      %1613 = vmatpush1.bf16.msra.mxu0 0
      %1614 = vmatprep.subr.bf16.mxu0 0
      %1615 = vmatpush1.bf16.msra.mxu0 0
      %1616 = vmatprep.subr.bf16.mxu0 0
      %1617 = vmatpush1.bf16.msra.mxu0 0
      %1618 = vmatprep.subr.bf16.mxu0 0
      %1619 = vmatpush1.bf16.msra.mxu0 0
      %1620 = vmatprep.subr.bf16.mxu0 0
      %1621 = vmatpush1.bf16.msra.mxu0 0
      %1622 = vmatprep.subr.bf16.mxu0 0
      %1623 = vmatpush1.bf16.msra.mxu0 0
      %1624 = vmatprep.subr.bf16.mxu0 0
      %1625 = vmatpush1.bf16.msra.mxu0 0
      %1626 = vmatprep.subr.bf16.mxu0 0
      %1627 = vmatpush1.bf16.msra.mxu0 0
      %1628 = vmatprep.subr.bf16.mxu0 0
      %1629 = vmatpush1.bf16.msra.mxu0 0
      %1630 = vmatprep.subr.bf16.mxu0 0
      %1631 = vmatpush1.bf16.msra.mxu0 0
      %1632 = vmatprep.subr.bf16.mxu0 0
      %1633 = vmatpush1.bf16.msra.mxu0 0
      %1634 = vmatprep.subr.bf16.mxu0 0
      %1635 = vmatpush1.bf16.msra.mxu0 0
      %1636 = vmatprep.subr.bf16.mxu0 0
      %1637 = vmatpush1.bf16.msra.mxu0 0
      %1638 = vmatprep.subr.bf16.mxu0 0
      %1639 = vmatpush1.bf16.msra.mxu0 0
      %1640 = vmatprep.subr.bf16.mxu0 0
      %1641 = vmatpush1.bf16.msra.mxu0 0
      %1642 = vmatprep.mubr.bf16.mxu0 0
      %1643 = vmatmul.mubr.bf16.gmra.mrb[0].mxu0 %v1554
      %v1644 = vpop.f32.mrb[0].mxu0
      %v1645 = vadd.f32 0.0, %v1644
      %v1646 = vpop.f32.mrb[0].mxu0
      %v1647 = vpop.f32.mrb[0].mxu0
      %v1648 = vadd.f32 0.0, %v1647
      %v1649 = vpop.f32.mrb[0].mxu0
      %1650 = vmatprep.mubr.bf16.mxu0 0
      %1651 = vmatmul.mubr.bf16.gmra.mrb[0].mxu0 %v1557
      %v1652 = vpop.f32.mrb[0].mxu0
      %v1653 = vadd.f32 0.0, %v1652
      %v1654 = vpop.f32.mrb[0].mxu0
      %v1655 = vpop.f32.mrb[0].mxu0
      %v1656 = vadd.f32 0.0, %v1655
      %v1657 = vpop.f32.mrb[0].mxu0
      %1658 = vmatprep.mubr.bf16.mxu0 0
      %1659 = vmatmul.mubr.bf16.gmra.mrb[0].mxu0 %v1560
      %v1660 = vpop.f32.mrb[0].mxu0
      %v1661 = vadd.f32 0.0, %v1660
      %v1662 = vpop.f32.mrb[0].mxu0
      %v1663 = vpop.f32.mrb[0].mxu0
      %v1664 = vadd.f32 0.0, %v1663
      %v1665 = vpop.f32.mrb[0].mxu0
      %1666 = vmatprep.mubr.bf16.mxu0 0
      %1667 = vmatmul.mubr.bf16.gmra.mrb[0].mxu0 %v1563
      %v1668 = vpop.f32.mrb[0].mxu0
      %v1669 = vadd.f32 0.0, %v1668
      %v1670 = vpop.f32.mrb[0].mxu0
      %v1671 = vpop.f32.mrb[0].mxu0
      %v1672 = vadd.f32 0.0, %v1671
      %v1673 = vpop.f32.mrb[0].mxu0
      %1674 = vmatprep.mubr.bf16.mxu0 0
      %1675 = vmatmul.mubr.bf16.gmra.mrb[0].mxu0 %v1566
      %v1676 = vpop.f32.mrb[0].mxu0
      %v1677 = vadd.f32 0.0, %v1676
      %v1678 = vpop.f32.mrb[0].mxu0
      %v1679 = vpop.f32.mrb[0].mxu0
      %v1680 = vadd.f32 0.0, %v1679
      %v1681 = vpop.f32.mrb[0].mxu0
      %1682 = vmatprep.mubr.bf16.mxu0 0
      %1683 = vmatmul.mubr.bf16.gmra.mrb[0].mxu0 %v1569
      %v1684 = vpop.f32.mrb[0].mxu0
      %v1685 = vadd.f32 0.0, %v1684
      %v1686 = vpop.f32.mrb[0].mxu0
      %v1687 = vpop.f32.mrb[0].mxu0
      %v1688 = vadd.f32 0.0, %v1687
      %v1689 = vpop.f32.mrb[0].mxu0
      %1690 = vmatprep.mubr.bf16.mxu0 0
      %1691 = vmatmul.mubr.bf16.gmra.mrb[0].mxu0 %v1572
      %v1692 = vpop.f32.mrb[0].mxu0
      %v1693 = vadd.f32 0.0, %v1692
      %v1694 = vpop.f32.mrb[0].mxu0
      %v1695 = vpop.f32.mrb[0].mxu0
      %v1696 = vadd.f32 0.0, %v1695
      %v1697 = vpop.f32.mrb[0].mxu0
      %1698 = vmatprep.mubr.bf16.mxu0 0
      %1699 = vmatmul.mubr.bf16.gmra.mrb[0].mxu0 %v1575
      %v1700 = vpop.f32.mrb[0].mxu0
      %v1701 = vadd.f32 0.0, %v1700
      %v1702 = vpop.f32.mrb[0].mxu0
      %v1703 = vpop.f32.mrb[0].mxu0
      %v1704 = vadd.f32 0.0, %v1703
      %v1705 = vpop.f32.mrb[0].mxu0
      %1706 = vmatprep.mubr.bf16.mxu0 0
      %1707 = vmatmul.mubr.bf16.gmra.mrb[0].mxu0 %v1578
      %v1708 = vpop.f32.mrb[0].mxu0
      %v1709 = vadd.f32 0.0, %v1708
      %v1710 = vpop.f32.mrb[0].mxu0
      %v1711 = vpop.f32.mrb[0].mxu0
      %v1712 = vadd.f32 0.0, %v1711
      %v1713 = vpop.f32.mrb[0].mxu0
      %1714 = vmatprep.mubr.bf16.mxu0 0
      %1715 = vmatmul.mubr.bf16.gmra.mrb[0].mxu0 %v1581
      %v1716 = vpop.f32.mrb[0].mxu0
      %v1717 = vadd.f32 0.0, %v1716
      %v1718 = vpop.f32.mrb[0].mxu0
      %v1719 = vpop.f32.mrb[0].mxu0
      %v1720 = vadd.f32 0.0, %v1719
      %v1721 = vpop.f32.mrb[0].mxu0
      %1722 = vmatprep.mubr.bf16.mxu0 0
      %1723 = vmatmul.mubr.bf16.gmra.mrb[0].mxu0 %v1584
      %v1724 = vpop.f32.mrb[0].mxu0
      %v1725 = vadd.f32 0.0, %v1724
      %v1726 = vpop.f32.mrb[0].mxu0
      %v1727 = vpop.f32.mrb[0].mxu0
      %v1728 = vadd.f32 0.0, %v1727
      %v1729 = vpop.f32.mrb[0].mxu0
      %1730 = vmatprep.mubr.bf16.mxu0 0
      %1731 = vmatmul.mubr.bf16.gmra.mrb[0].mxu0 %v1587
      %v1732 = vpop.f32.mrb[0].mxu0
      %v1733 = vadd.f32 0.0, %v1732
      %v1734 = vpop.f32.mrb[0].mxu0
      %v1735 = vpop.f32.mrb[0].mxu0
      %v1736 = vadd.f32 0.0, %v1735
      %v1737 = vpop.f32.mrb[0].mxu0
      %1738 = vmatprep.mubr.bf16.mxu0 0
      %1739 = vmatmul.mubr.bf16.gmra.mrb[0].mxu0 %v1590
      %v1740 = vpop.f32.mrb[0].mxu0
      %v1741 = vadd.f32 0.0, %v1740
      %v1742 = vpop.f32.mrb[0].mxu0
      %v1743 = vpop.f32.mrb[0].mxu0
      %v1744 = vadd.f32 0.0, %v1743
      %v1745 = vpop.f32.mrb[0].mxu0
      %1746 = vmatprep.mubr.bf16.mxu0 0
      %1747 = vmatmul.mubr.bf16.gmra.mrb[0].mxu0 %v1593
      %v1748 = vpop.f32.mrb[0].mxu0
      %v1749 = vadd.f32 0.0, %v1748
      %v1750 = vpop.f32.mrb[0].mxu0
      %v1751 = vpop.f32.mrb[0].mxu0
      %v1752 = vadd.f32 0.0, %v1751
      %v1753 = vpop.f32.mrb[0].mxu0
      %1754 = vmatprep.mubr.bf16.mxu0 0
      %1755 = vmatmul.mubr.bf16.gmra.mrb[0].mxu0 %v1596
      %v1756 = vpop.f32.mrb[0].mxu0
      %v1757 = vadd.f32 0.0, %v1756
      %v1758 = vpop.f32.mrb[0].mxu0
      %v1759 = vpop.f32.mrb[0].mxu0
      %v1760 = vadd.f32 0.0, %v1759
      %v1761 = vpop.f32.mrb[0].mxu0
      %1762 = vmatprep.mubr.bf16.mxu0 0
      %1763 = vmatmul.mubr.bf16.gmra.mrb[0].mxu0 %v1599
      %v1764 = vpop.f32.mrb[0].mxu0
      %v1765 = vadd.f32 0.0, %v1764
      %v1766 = vpop.f32.mrb[0].mxu0
      %v1767 = vpop.f32.mrb[0].mxu0
      %v1768 = vadd.f32 0.0, %v1767
      %v1769 = vpop.f32.mrb[0].mxu0
      %1770 = vmatprep.mubr.bf16.mxu0 0
      %1771 = vmatmul.mubr.bf16.gmra.mrb[0].mxu0 %v1602
      %v1772 = vpop.f32.mrb[0].mxu0
      %v1773 = vadd.f32 0.0, %v1772
      %v1774 = vpop.f32.mrb[0].mxu0
      %v1775 = vpop.f32.mrb[0].mxu0
      %v1776 = vadd.f32 0.0, %v1775
      %v1777 = vpop.f32.mrb[0].mxu0
      %1778 = vmatprep.mubr.bf16.mxu0 0
      %1779 = vmatmul.mubr.bf16.gmra.mrb[0].mxu0 %v1605
      %v1780 = vpop.f32.mrb[0].mxu0
      %v1781 = vadd.f32 0.0, %v1780
      %v1782 = vpop.f32.mrb[0].mxu0
      %v1783 = vpop.f32.mrb[0].mxu0
      %v1784 = vadd.f32 0.0, %v1783
      %v1785 = vpop.f32.mrb[0].mxu0
      %1786 = vdwg.mxu0
      %v1787 = vadd.f32 %v1429, %v1645
      %v1788 = vadd.f32 %v1430, %v1648
      %v1789 = vadd.f32 %v1431, %v1653
      %v1790 = vadd.f32 %v1432, %v1656
      %v1791 = vadd.f32 %v1433, %v1661
      %v1792 = vadd.f32 %v1434, %v1664
      %v1793 = vadd.f32 %v1435, %v1669
      %v1794 = vadd.f32 %v1436, %v1672
      %v1795 = vadd.f32 %v1437, %v1677
      %v1796 = vadd.f32 %v1438, %v1680
      %v1797 = vadd.f32 %v1439, %v1685
      %v1798 = vadd.f32 %v1440, %v1688
      %v1799 = vadd.f32 %v1441, %v1693
      %v1800 = vadd.f32 %v1442, %v1696
      %v1801 = vadd.f32 %v1443, %v1701
      %v1802 = vadd.f32 %v1444, %v1704
      %v1803 = vadd.f32 %v1445, %v1709
      %v1804 = vadd.f32 %v1446, %v1712
      %v1805 = vadd.f32 %v1447, %v1717
      %v1806 = vadd.f32 %v1448, %v1720
      %v1807 = vadd.f32 %v1449, %v1725
      %v1808 = vadd.f32 %v1450, %v1728
      %v1809 = vadd.f32 %v1451, %v1733
      %v1810 = vadd.f32 %v1452, %v1736
      %v1811 = vadd.f32 %v1453, %v1741
      %v1812 = vadd.f32 %v1454, %v1744
      %v1813 = vadd.f32 %v1455, %v1749
      %v1814 = vadd.f32 %v1456, %v1752
      %v1815 = vadd.f32 %v1457, %v1757
      %v1816 = vadd.f32 %v1458, %v1760
      %v1817 = vadd.f32 %v1459, %v1765
      %v1818 = vadd.f32 %v1460, %v1768
      %v1819 = vadd.f32 %v1461, %v1773
      %v1820 = vadd.f32 %v1462, %v1776
      %v1821 = vadd.f32 %v1463, %v1781
      %v1822 = vadd.f32 %v1464, %v1784
      %s1823 = scalar_lea.vmem %s1, 20
      %v1824 = vld [vmem:[%s1823] sm:$0xf]
      %vm1825 = vcmask 1045504
      %v1826 = vrot.slane %v282, 2
      %v1827 = vrot.slane %v283, 2
      %v1828 = vsel %vm1825, %v1826, %v1827
      %v1829 = vrot.slane %v284, 2
      %v1830 = vsel %vm1825, %v1827, %v1829
      %v1831 = vrot.slane %v285, 2
      %v1832 = vsel %vm1825, %v1829, %v1831
      %v1833 = vrot.slane %v286, 2
      %v1834 = vsel %vm1825, %v1831, %v1833
      %v1835 = vrot.slane %v287, 2
      %v1836 = vsel %vm1825, %v1833, %v1835
      %v1837 = vrot.slane %v288, 2
      %v1838 = vsel %vm1825, %v1835, %v1837
      %v1839 = vrot.slane %v289, 2
      %v1840 = vsel %vm1825, %v1837, %v1839
      %v1841 = vrot.slane %v290, 2
      %v1842 = vsel %vm1825, %v1839, %v1841
      %v1843 = vrot.slane %v291, 2
      %v1844 = vsel %vm1825, %v1841, %v1843
      %v1845 = vrot.slane %v292, 2
      %v1846 = vsel %vm1825, %v1843, %v1845
      %v1847 = vrot.slane %v293, 2
      %v1848 = vsel %vm1825, %v1845, %v1847
      %v1849 = vrot.slane %v294, 2
      %v1850 = vsel %vm1825, %v1847, %v1849
      %v1851 = vrot.slane %v295, 2
      %v1852 = vsel %vm1825, %v1849, %v1851
      %v1853 = vrot.slane %v296, 2
      %v1854 = vsel %vm1825, %v1851, %v1853
      %v1855 = vrot.slane %v297, 2
      %v1856 = vsel %vm1825, %v1853, %v1855
      %v1857 = vrot.slane %v298, 2
      %v1858 = vsel %vm1825, %v1855, %v1857
      %v1859 = vrot.slane %v1233, 2
      %v1860 = vsel %vm1825, %v1857, %v1859
      %v1861 = vrot.slane %v1234, 2
      %v1862 = vsel %vm1825, %v1859, %v1861
      %v1864 = vsel %vm452, %v1828, 0
      %v1867 = vsel %vm452, %v1830, 0
      %v1870 = vsel %vm452, %v1832, 0
      %v1873 = vsel %vm452, %v1834, 0
      %v1876 = vsel %vm452, %v1836, 0
      %v1879 = vsel %vm452, %v1838, 0
      %v1882 = vsel %vm452, %v1840, 0
      %v1885 = vsel %vm452, %v1842, 0
      %v1888 = vsel %vm452, %v1844, 0
      %v1891 = vsel %vm452, %v1846, 0
      %v1894 = vsel %vm452, %v1848, 0
      %v1897 = vsel %vm452, %v1850, 0
      %v1900 = vsel %vm452, %v1852, 0
      %v1903 = vsel %vm452, %v1854, 0
      %v1906 = vsel %vm452, %v1856, 0
      %v1909 = vsel %vm452, %v1858, 0
      %v1912 = vsel %vm452, %v1860, 0
      %v1915 = vsel %vm452, %v1862, 0
      %v1918 = vsel %vm507, %v1824, 0
      %1920 = vmatprep.subr.bf16.mxu0 0
      %1921 = vmatpush1.bf16.msra.mxu0 %v1918
      %1922 = vmatprep.subr.bf16.mxu0 0
      %1923 = vmatpush1.bf16.msra.mxu0 0
      %1924 = vmatprep.subr.bf16.mxu0 0
      %1925 = vmatpush1.bf16.msra.mxu0 0
      %1926 = vmatprep.subr.bf16.mxu0 0
      %1927 = vmatpush1.bf16.msra.mxu0 0
      %1928 = vmatprep.subr.bf16.mxu0 0
      %1929 = vmatpush1.bf16.msra.mxu0 0
      %1930 = vmatprep.subr.bf16.mxu0 0
      %1931 = vmatpush1.bf16.msra.mxu0 0
      %1932 = vmatprep.subr.bf16.mxu0 0
      %1933 = vmatpush1.bf16.msra.mxu0 0
      %1934 = vmatprep.subr.bf16.mxu0 0
      %1935 = vmatpush1.bf16.msra.mxu0 0
      %1936 = vmatprep.subr.bf16.mxu0 0
      %1937 = vmatpush1.bf16.msra.mxu0 0
      %1938 = vmatprep.subr.bf16.mxu0 0
      %1939 = vmatpush1.bf16.msra.mxu0 0
      %1940 = vmatprep.subr.bf16.mxu0 0
      %1941 = vmatpush1.bf16.msra.mxu0 0
      %1942 = vmatprep.subr.bf16.mxu0 0
      %1943 = vmatpush1.bf16.msra.mxu0 0
      %1944 = vmatprep.subr.bf16.mxu0 0
      %1945 = vmatpush1.bf16.msra.mxu0 0
      %1946 = vmatprep.subr.bf16.mxu0 0
      %1947 = vmatpush1.bf16.msra.mxu0 0
      %1948 = vmatprep.subr.bf16.mxu0 0
      %1949 = vmatpush1.bf16.msra.mxu0 0
      %1950 = vmatprep.subr.bf16.mxu0 0
      %1951 = vmatpush1.bf16.msra.mxu0 0
      %1952 = vmatprep.mubr.bf16.mxu0 0
      %1953 = vmatmul.mubr.bf16.gmra.mrb[0].mxu0 %v1864
      %v1954 = vpop.f32.mrb[0].mxu0
      %v1955 = vadd.f32 0.0, %v1954
      %v1956 = vpop.f32.mrb[0].mxu0
      %v1957 = vpop.f32.mrb[0].mxu0
      %v1958 = vadd.f32 0.0, %v1957
      %v1959 = vpop.f32.mrb[0].mxu0
      %1960 = vmatprep.mubr.bf16.mxu0 0
      %1961 = vmatmul.mubr.bf16.gmra.mrb[0].mxu0 %v1867
      %v1962 = vpop.f32.mrb[0].mxu0
      %v1963 = vadd.f32 0.0, %v1962
      %v1964 = vpop.f32.mrb[0].mxu0
      %v1965 = vpop.f32.mrb[0].mxu0
      %v1966 = vadd.f32 0.0, %v1965
      %v1967 = vpop.f32.mrb[0].mxu0
      %1968 = vmatprep.mubr.bf16.mxu0 0
      %1969 = vmatmul.mubr.bf16.gmra.mrb[0].mxu0 %v1870
      %v1970 = vpop.f32.mrb[0].mxu0
      %v1971 = vadd.f32 0.0, %v1970
      %v1972 = vpop.f32.mrb[0].mxu0
      %v1973 = vpop.f32.mrb[0].mxu0
      %v1974 = vadd.f32 0.0, %v1973
      %v1975 = vpop.f32.mrb[0].mxu0
      %1976 = vmatprep.mubr.bf16.mxu0 0
      %1977 = vmatmul.mubr.bf16.gmra.mrb[0].mxu0 %v1873
      %v1978 = vpop.f32.mrb[0].mxu0
      %v1979 = vadd.f32 0.0, %v1978
      %v1980 = vpop.f32.mrb[0].mxu0
      %v1981 = vpop.f32.mrb[0].mxu0
      %v1982 = vadd.f32 0.0, %v1981
      %v1983 = vpop.f32.mrb[0].mxu0
      %1984 = vmatprep.mubr.bf16.mxu0 0
      %1985 = vmatmul.mubr.bf16.gmra.mrb[0].mxu0 %v1876
      %v1986 = vpop.f32.mrb[0].mxu0
      %v1987 = vadd.f32 0.0, %v1986
      %v1988 = vpop.f32.mrb[0].mxu0
      %v1989 = vpop.f32.mrb[0].mxu0
      %v1990 = vadd.f32 0.0, %v1989
      %v1991 = vpop.f32.mrb[0].mxu0
      %1992 = vmatprep.mubr.bf16.mxu0 0
      %1993 = vmatmul.mubr.bf16.gmra.mrb[0].mxu0 %v1879
      %v1994 = vpop.f32.mrb[0].mxu0
      %v1995 = vadd.f32 0.0, %v1994
      %v1996 = vpop.f32.mrb[0].mxu0
      %v1997 = vpop.f32.mrb[0].mxu0
      %v1998 = vadd.f32 0.0, %v1997
      %v1999 = vpop.f32.mrb[0].mxu0
      %2000 = vmatprep.mubr.bf16.mxu0 0
      %2001 = vmatmul.mubr.bf16.gmra.mrb[0].mxu0 %v1882
      %v2002 = vpop.f32.mrb[0].mxu0
      %v2003 = vadd.f32 0.0, %v2002
      %v2004 = vpop.f32.mrb[0].mxu0
      %v2005 = vpop.f32.mrb[0].mxu0
      %v2006 = vadd.f32 0.0, %v2005
      %v2007 = vpop.f32.mrb[0].mxu0
      %2008 = vmatprep.mubr.bf16.mxu0 0
      %2009 = vmatmul.mubr.bf16.gmra.mrb[0].mxu0 %v1885
      %v2010 = vpop.f32.mrb[0].mxu0
      %v2011 = vadd.f32 0.0, %v2010
      %v2012 = vpop.f32.mrb[0].mxu0
      %v2013 = vpop.f32.mrb[0].mxu0
      %v2014 = vadd.f32 0.0, %v2013
      %v2015 = vpop.f32.mrb[0].mxu0
      %2016 = vmatprep.mubr.bf16.mxu0 0
      %2017 = vmatmul.mubr.bf16.gmra.mrb[0].mxu0 %v1888
      %v2018 = vpop.f32.mrb[0].mxu0
      %v2019 = vadd.f32 0.0, %v2018
      %v2020 = vpop.f32.mrb[0].mxu0
      %v2021 = vpop.f32.mrb[0].mxu0
      %v2022 = vadd.f32 0.0, %v2021
      %v2023 = vpop.f32.mrb[0].mxu0
      %2024 = vmatprep.mubr.bf16.mxu0 0
      %2025 = vmatmul.mubr.bf16.gmra.mrb[0].mxu0 %v1891
      %v2026 = vpop.f32.mrb[0].mxu0
      %v2027 = vadd.f32 0.0, %v2026
      %v2028 = vpop.f32.mrb[0].mxu0
      %v2029 = vpop.f32.mrb[0].mxu0
      %v2030 = vadd.f32 0.0, %v2029
      %v2031 = vpop.f32.mrb[0].mxu0
      %2032 = vmatprep.mubr.bf16.mxu0 0
      %2033 = vmatmul.mubr.bf16.gmra.mrb[0].mxu0 %v1894
      %v2034 = vpop.f32.mrb[0].mxu0
      %v2035 = vadd.f32 0.0, %v2034
      %v2036 = vpop.f32.mrb[0].mxu0
      %v2037 = vpop.f32.mrb[0].mxu0
      %v2038 = vadd.f32 0.0, %v2037
      %v2039 = vpop.f32.mrb[0].mxu0
      %2040 = vmatprep.mubr.bf16.mxu0 0
      %2041 = vmatmul.mubr.bf16.gmra.mrb[0].mxu0 %v1897
      %v2042 = vpop.f32.mrb[0].mxu0
      %v2043 = vadd.f32 0.0, %v2042
      %v2044 = vpop.f32.mrb[0].mxu0
      %v2045 = vpop.f32.mrb[0].mxu0
      %v2046 = vadd.f32 0.0, %v2045
      %v2047 = vpop.f32.mrb[0].mxu0
      %2048 = vmatprep.mubr.bf16.mxu0 0
      %2049 = vmatmul.mubr.bf16.gmra.mrb[0].mxu0 %v1900
      %v2050 = vpop.f32.mrb[0].mxu0
      %v2051 = vadd.f32 0.0, %v2050
      %v2052 = vpop.f32.mrb[0].mxu0
      %v2053 = vpop.f32.mrb[0].mxu0
      %v2054 = vadd.f32 0.0, %v2053
      %v2055 = vpop.f32.mrb[0].mxu0
      %2056 = vmatprep.mubr.bf16.mxu0 0
      %2057 = vmatmul.mubr.bf16.gmra.mrb[0].mxu0 %v1903
      %v2058 = vpop.f32.mrb[0].mxu0
      %v2059 = vadd.f32 0.0, %v2058
      %v2060 = vpop.f32.mrb[0].mxu0
      %v2061 = vpop.f32.mrb[0].mxu0
      %v2062 = vadd.f32 0.0, %v2061
      %v2063 = vpop.f32.mrb[0].mxu0
      %2064 = vmatprep.mubr.bf16.mxu0 0
      %2065 = vmatmul.mubr.bf16.gmra.mrb[0].mxu0 %v1906
      %v2066 = vpop.f32.mrb[0].mxu0
      %v2067 = vadd.f32 0.0, %v2066
      %v2068 = vpop.f32.mrb[0].mxu0
      %v2069 = vpop.f32.mrb[0].mxu0
      %v2070 = vadd.f32 0.0, %v2069
      %v2071 = vpop.f32.mrb[0].mxu0
      %2072 = vmatprep.mubr.bf16.mxu0 0
      %2073 = vmatmul.mubr.bf16.gmra.mrb[0].mxu0 %v1909
      %v2074 = vpop.f32.mrb[0].mxu0
      %v2075 = vadd.f32 0.0, %v2074
      %v2076 = vpop.f32.mrb[0].mxu0
      %v2077 = vpop.f32.mrb[0].mxu0
      %v2078 = vadd.f32 0.0, %v2077
      %v2079 = vpop.f32.mrb[0].mxu0
      %2080 = vmatprep.mubr.bf16.mxu0 0
      %2081 = vmatmul.mubr.bf16.gmra.mrb[0].mxu0 %v1912
      %v2082 = vpop.f32.mrb[0].mxu0
      %v2083 = vadd.f32 0.0, %v2082
      %v2084 = vpop.f32.mrb[0].mxu0
      %v2085 = vpop.f32.mrb[0].mxu0
      %v2086 = vadd.f32 0.0, %v2085
      %v2087 = vpop.f32.mrb[0].mxu0
      %2088 = vmatprep.mubr.bf16.mxu0 0
      %2089 = vmatmul.mubr.bf16.gmra.mrb[0].mxu0 %v1915
      %v2090 = vpop.f32.mrb[0].mxu0
      %v2091 = vadd.f32 0.0, %v2090
      %v2092 = vpop.f32.mrb[0].mxu0
      %v2093 = vpop.f32.mrb[0].mxu0
      %v2094 = vadd.f32 0.0, %v2093
      %v2095 = vpop.f32.mrb[0].mxu0
      %2096 = vdwg.mxu0
      %v2097 = vadd.f32 %v1787, %v1955
      %v2098 = vadd.f32 %v1788, %v1958
      %v2099 = vadd.f32 %v1789, %v1963
      %v2100 = vadd.f32 %v1790, %v1966
      %v2101 = vadd.f32 %v1791, %v1971
      %v2102 = vadd.f32 %v1792, %v1974
      %v2103 = vadd.f32 %v1793, %v1979
      %v2104 = vadd.f32 %v1794, %v1982
      %v2105 = vadd.f32 %v1795, %v1987
      %v2106 = vadd.f32 %v1796, %v1990
      %v2107 = vadd.f32 %v1797, %v1995
      %v2108 = vadd.f32 %v1798, %v1998
      %v2109 = vadd.f32 %v1799, %v2003
      %v2110 = vadd.f32 %v1800, %v2006
      %v2111 = vadd.f32 %v1801, %v2011
      %v2112 = vadd.f32 %v1802, %v2014
      %v2113 = vadd.f32 %v1803, %v2019
      %v2114 = vadd.f32 %v1804, %v2022
      %v2115 = vadd.f32 %v1805, %v2027
      %v2116 = vadd.f32 %v1806, %v2030
      %v2117 = vadd.f32 %v1807, %v2035
      %v2118 = vadd.f32 %v1808, %v2038
      %v2119 = vadd.f32 %v1809, %v2043
      %v2120 = vadd.f32 %v1810, %v2046
      %v2121 = vadd.f32 %v1811, %v2051
      %v2122 = vadd.f32 %v1812, %v2054
      %v2123 = vadd.f32 %v1813, %v2059
      %v2124 = vadd.f32 %v1814, %v2062
      %v2125 = vadd.f32 %v1815, %v2067
      %v2126 = vadd.f32 %v1816, %v2070
      %v2127 = vadd.f32 %v1817, %v2075
      %v2128 = vadd.f32 %v1818, %v2078
      %v2129 = vadd.f32 %v1819, %v2083
      %v2130 = vadd.f32 %v1820, %v2086
      %v2131 = vadd.f32 %v1821, %v2091
      %v2132 = vadd.f32 %v1822, %v2094
      %v2133 = vpack.c.bf16 %v279, %v278
      %v2134 = vpack.c.bf16 %v280, %v280
      %s2135 = scalar_lea.vmem %s1, 24
      %v2136 = vld [vmem:[%s2135] sm:$0xf]
      %v2139 = vrot.slane %v2133, 2
      %v2140 = vsel %vm1825, %v1859, %v2139
      %v2141 = vrot.slane %v2134, 2
      %v2142 = vsel %vm1825, %v2139, %v2141
      %v2144 = vsel %vm452, %v2140, 0
      %v2147 = vsel %vm452, %v2142, 0
      %v2150 = vsel %vm507, %v2136, 0
      %2152 = vmatprep.subr.bf16.mxu0 0
      %2153 = vmatpush1.bf16.msra.mxu0 %v2150
      %2154 = vmatprep.subr.bf16.mxu0 0
      %2155 = vmatpush1.bf16.msra.mxu0 0
      %2156 = vmatprep.subr.bf16.mxu0 0
      %2157 = vmatpush1.bf16.msra.mxu0 0
      %2158 = vmatprep.subr.bf16.mxu0 0
      %2159 = vmatpush1.bf16.msra.mxu0 0
      %2160 = vmatprep.subr.bf16.mxu0 0
      %2161 = vmatpush1.bf16.msra.mxu0 0
      %2162 = vmatprep.subr.bf16.mxu0 0
      %2163 = vmatpush1.bf16.msra.mxu0 0
      %2164 = vmatprep.subr.bf16.mxu0 0
      %2165 = vmatpush1.bf16.msra.mxu0 0
      %2166 = vmatprep.subr.bf16.mxu0 0
      %2167 = vmatpush1.bf16.msra.mxu0 0
      %2168 = vmatprep.subr.bf16.mxu0 0
      %2169 = vmatpush1.bf16.msra.mxu0 0
      %2170 = vmatprep.subr.bf16.mxu0 0
      %2171 = vmatpush1.bf16.msra.mxu0 0
      %2172 = vmatprep.subr.bf16.mxu0 0
      %2173 = vmatpush1.bf16.msra.mxu0 0
      %2174 = vmatprep.subr.bf16.mxu0 0
      %2175 = vmatpush1.bf16.msra.mxu0 0
      %2176 = vmatprep.subr.bf16.mxu0 0
      %2177 = vmatpush1.bf16.msra.mxu0 0
      %2178 = vmatprep.subr.bf16.mxu0 0
      %2179 = vmatpush1.bf16.msra.mxu0 0
      %2180 = vmatprep.subr.bf16.mxu0 0
      %2181 = vmatpush1.bf16.msra.mxu0 0
      %2182 = vmatprep.subr.bf16.mxu0 0
      %2183 = vmatpush1.bf16.msra.mxu0 0
      %2184 = vmatprep.mubr.bf16.mxu0 0
      %2185 = vmatmul.mubr.bf16.gmra.mrb[0].mxu0 %v1867
      %v2186 = vpop.f32.mrb[0].mxu0
      %v2187 = vadd.f32 0.0, %v2186
      %v2188 = vpop.f32.mrb[0].mxu0
      %v2189 = vpop.f32.mrb[0].mxu0
      %v2190 = vadd.f32 0.0, %v2189
      %v2191 = vpop.f32.mrb[0].mxu0
      %2192 = vmatprep.mubr.bf16.mxu0 0
      %2193 = vmatmul.mubr.bf16.gmra.mrb[0].mxu0 %v1870
      %v2194 = vpop.f32.mrb[0].mxu0
      %v2195 = vadd.f32 0.0, %v2194
      %v2196 = vpop.f32.mrb[0].mxu0
      %v2197 = vpop.f32.mrb[0].mxu0
      %v2198 = vadd.f32 0.0, %v2197
      %v2199 = vpop.f32.mrb[0].mxu0
      %2200 = vmatprep.mubr.bf16.mxu0 0
      %2201 = vmatmul.mubr.bf16.gmra.mrb[0].mxu0 %v1873
      %v2202 = vpop.f32.mrb[0].mxu0
      %v2203 = vadd.f32 0.0, %v2202
      %v2204 = vpop.f32.mrb[0].mxu0
      %v2205 = vpop.f32.mrb[0].mxu0
      %v2206 = vadd.f32 0.0, %v2205
      %v2207 = vpop.f32.mrb[0].mxu0
      %2208 = vmatprep.mubr.bf16.mxu0 0
      %2209 = vmatmul.mubr.bf16.gmra.mrb[0].mxu0 %v1876
      %v2210 = vpop.f32.mrb[0].mxu0
      %v2211 = vadd.f32 0.0, %v2210
      %v2212 = vpop.f32.mrb[0].mxu0
      %v2213 = vpop.f32.mrb[0].mxu0
      %v2214 = vadd.f32 0.0, %v2213
      %v2215 = vpop.f32.mrb[0].mxu0
      %2216 = vmatprep.mubr.bf16.mxu0 0
      %2217 = vmatmul.mubr.bf16.gmra.mrb[0].mxu0 %v1879
      %v2218 = vpop.f32.mrb[0].mxu0
      %v2219 = vadd.f32 0.0, %v2218
      %v2220 = vpop.f32.mrb[0].mxu0
      %v2221 = vpop.f32.mrb[0].mxu0
      %v2222 = vadd.f32 0.0, %v2221
      %v2223 = vpop.f32.mrb[0].mxu0
      %2224 = vmatprep.mubr.bf16.mxu0 0
      %2225 = vmatmul.mubr.bf16.gmra.mrb[0].mxu0 %v1882
      %v2226 = vpop.f32.mrb[0].mxu0
      %v2227 = vadd.f32 0.0, %v2226
      %v2228 = vpop.f32.mrb[0].mxu0
      %v2229 = vpop.f32.mrb[0].mxu0
      %v2230 = vadd.f32 0.0, %v2229
      %v2231 = vpop.f32.mrb[0].mxu0
      %2232 = vmatprep.mubr.bf16.mxu0 0
      %2233 = vmatmul.mubr.bf16.gmra.mrb[0].mxu0 %v1885
      %v2234 = vpop.f32.mrb[0].mxu0
      %v2235 = vadd.f32 0.0, %v2234
      %v2236 = vpop.f32.mrb[0].mxu0
      %v2237 = vpop.f32.mrb[0].mxu0
      %v2238 = vadd.f32 0.0, %v2237
      %v2239 = vpop.f32.mrb[0].mxu0
      %2240 = vmatprep.mubr.bf16.mxu0 0
      %2241 = vmatmul.mubr.bf16.gmra.mrb[0].mxu0 %v1888
      %v2242 = vpop.f32.mrb[0].mxu0
      %v2243 = vadd.f32 0.0, %v2242
      %v2244 = vpop.f32.mrb[0].mxu0
      %v2245 = vpop.f32.mrb[0].mxu0
      %v2246 = vadd.f32 0.0, %v2245
      %v2247 = vpop.f32.mrb[0].mxu0
      %2248 = vmatprep.mubr.bf16.mxu0 0
      %2249 = vmatmul.mubr.bf16.gmra.mrb[0].mxu0 %v1891
      %v2250 = vpop.f32.mrb[0].mxu0
      %v2251 = vadd.f32 0.0, %v2250
      %v2252 = vpop.f32.mrb[0].mxu0
      %v2253 = vpop.f32.mrb[0].mxu0
      %v2254 = vadd.f32 0.0, %v2253
      %v2255 = vpop.f32.mrb[0].mxu0
      %2256 = vmatprep.mubr.bf16.mxu0 0
      %2257 = vmatmul.mubr.bf16.gmra.mrb[0].mxu0 %v1894
      %v2258 = vpop.f32.mrb[0].mxu0
      %v2259 = vadd.f32 0.0, %v2258
      %v2260 = vpop.f32.mrb[0].mxu0
      %v2261 = vpop.f32.mrb[0].mxu0
      %v2262 = vadd.f32 0.0, %v2261
      %v2263 = vpop.f32.mrb[0].mxu0
      %2264 = vmatprep.mubr.bf16.mxu0 0
      %2265 = vmatmul.mubr.bf16.gmra.mrb[0].mxu0 %v1897
      %v2266 = vpop.f32.mrb[0].mxu0
      %v2267 = vadd.f32 0.0, %v2266
      %v2268 = vpop.f32.mrb[0].mxu0
      %v2269 = vpop.f32.mrb[0].mxu0
      %v2270 = vadd.f32 0.0, %v2269
      %v2271 = vpop.f32.mrb[0].mxu0
      %2272 = vmatprep.mubr.bf16.mxu0 0
      %2273 = vmatmul.mubr.bf16.gmra.mrb[0].mxu0 %v1900
      %v2274 = vpop.f32.mrb[0].mxu0
      %v2275 = vadd.f32 0.0, %v2274
      %v2276 = vpop.f32.mrb[0].mxu0
      %v2277 = vpop.f32.mrb[0].mxu0
      %v2278 = vadd.f32 0.0, %v2277
      %v2279 = vpop.f32.mrb[0].mxu0
      %2280 = vmatprep.mubr.bf16.mxu0 0
      %2281 = vmatmul.mubr.bf16.gmra.mrb[0].mxu0 %v1903
      %v2282 = vpop.f32.mrb[0].mxu0
      %v2283 = vadd.f32 0.0, %v2282
      %v2284 = vpop.f32.mrb[0].mxu0
      %v2285 = vpop.f32.mrb[0].mxu0
      %v2286 = vadd.f32 0.0, %v2285
      %v2287 = vpop.f32.mrb[0].mxu0
      %2288 = vmatprep.mubr.bf16.mxu0 0
      %2289 = vmatmul.mubr.bf16.gmra.mrb[0].mxu0 %v1906
      %v2290 = vpop.f32.mrb[0].mxu0
      %v2291 = vadd.f32 0.0, %v2290
      %v2292 = vpop.f32.mrb[0].mxu0
      %v2293 = vpop.f32.mrb[0].mxu0
      %v2294 = vadd.f32 0.0, %v2293
      %v2295 = vpop.f32.mrb[0].mxu0
      %2296 = vmatprep.mubr.bf16.mxu0 0
      %2297 = vmatmul.mubr.bf16.gmra.mrb[0].mxu0 %v1909
      %v2298 = vpop.f32.mrb[0].mxu0
      %v2299 = vadd.f32 0.0, %v2298
      %v2300 = vpop.f32.mrb[0].mxu0
      %v2301 = vpop.f32.mrb[0].mxu0
      %v2302 = vadd.f32 0.0, %v2301
      %v2303 = vpop.f32.mrb[0].mxu0
      %2304 = vmatprep.mubr.bf16.mxu0 0
      %2305 = vmatmul.mubr.bf16.gmra.mrb[0].mxu0 %v1912
      %v2306 = vpop.f32.mrb[0].mxu0
      %v2307 = vadd.f32 0.0, %v2306
      %v2308 = vpop.f32.mrb[0].mxu0
      %v2309 = vpop.f32.mrb[0].mxu0
      %v2310 = vadd.f32 0.0, %v2309
      %v2311 = vpop.f32.mrb[0].mxu0
      %2312 = vmatprep.mubr.bf16.mxu0 0
      %2313 = vmatmul.mubr.bf16.gmra.mrb[0].mxu0 %v2144
      %v2314 = vpop.f32.mrb[0].mxu0
      %v2315 = vadd.f32 0.0, %v2314
      %v2316 = vpop.f32.mrb[0].mxu0
      %v2317 = vpop.f32.mrb[0].mxu0
      %v2318 = vadd.f32 0.0, %v2317
      %v2319 = vpop.f32.mrb[0].mxu0
      %2320 = vmatprep.mubr.bf16.mxu0 0
      %2321 = vmatmul.mubr.bf16.gmra.mrb[0].mxu0 %v2147
      %v2322 = vpop.f32.mrb[0].mxu0
      %v2323 = vadd.f32 0.0, %v2322
      %v2324 = vpop.f32.mrb[0].mxu0
      %v2325 = vpop.f32.mrb[0].mxu0
      %v2326 = vadd.f32 0.0, %v2325
      %v2327 = vpop.f32.mrb[0].mxu0
      %2328 = vdwg.mxu0
      %v2329 = vadd.f32 %v2097, %v2187
      %v2330 = vadd.f32 %v2098, %v2190
      %v2331 = vadd.f32 %v2099, %v2195
      %v2332 = vadd.f32 %v2100, %v2198
      %v2333 = vadd.f32 %v2101, %v2203
      %v2334 = vadd.f32 %v2102, %v2206
      %v2335 = vadd.f32 %v2103, %v2211
      %v2336 = vadd.f32 %v2104, %v2214
      %v2337 = vadd.f32 %v2105, %v2219
      %v2338 = vadd.f32 %v2106, %v2222
      %v2339 = vadd.f32 %v2107, %v2227
      %v2340 = vadd.f32 %v2108, %v2230
      %v2341 = vadd.f32 %v2109, %v2235
      %v2342 = vadd.f32 %v2110, %v2238
      %v2343 = vadd.f32 %v2111, %v2243
      %v2344 = vadd.f32 %v2112, %v2246
      %v2345 = vadd.f32 %v2113, %v2251
      %v2346 = vadd.f32 %v2114, %v2254
      %v2347 = vadd.f32 %v2115, %v2259
      %v2348 = vadd.f32 %v2116, %v2262
      %v2349 = vadd.f32 %v2117, %v2267
      %v2350 = vadd.f32 %v2118, %v2270
      %v2351 = vadd.f32 %v2119, %v2275
      %v2352 = vadd.f32 %v2120, %v2278
      %v2353 = vadd.f32 %v2121, %v2283
      %v2354 = vadd.f32 %v2122, %v2286
      %v2355 = vadd.f32 %v2123, %v2291
      %v2356 = vadd.f32 %v2124, %v2294
      %v2357 = vadd.f32 %v2125, %v2299
      %v2358 = vadd.f32 %v2126, %v2302
      %v2359 = vadd.f32 %v2127, %v2307
      %v2360 = vadd.f32 %v2128, %v2310
      %v2361 = vadd.f32 %v2129, %v2315
      %v2362 = vadd.f32 %v2130, %v2318
      %v2363 = vadd.f32 %v2131, %v2323
      %v2364 = vadd.f32 %v2132, %v2326
      %s2365 = scalar_lea.vmem %s1, 28
      %v2366 = vld [vmem:[%s2365] sm:$0xf]
      %vm2367 = vsmask.f32 5376
      %v2368 = vrot.slane %v324, 2
      %v2369 = vrot.slane %v320, 3
      %v2370 = vor.u32 %v2368, %v2369
      %v2371 = vrot.slane %v332, 2
      %v2372 = vrot.slane %v328, 3
      %v2373 = vor.u32 %v2371, %v2372
      %v2374 = vsel %vm2367, %v2370, %v2373
      %v2375 = vrot.slane %v340, 2
      %v2376 = vrot.slane %v336, 3
      %v2377 = vor.u32 %v2375, %v2376
      %v2378 = vsel %vm2367, %v2373, %v2377
      %v2379 = vrot.slane %v348, 2
      %v2380 = vrot.slane %v344, 3
      %v2381 = vor.u32 %v2379, %v2380
      %v2382 = vsel %vm2367, %v2377, %v2381
      %v2383 = vrot.slane %v356, 2
      %v2384 = vrot.slane %v352, 3
      %v2385 = vor.u32 %v2383, %v2384
      %v2386 = vsel %vm2367, %v2381, %v2385
      %v2387 = vrot.slane %v364, 2
      %v2388 = vrot.slane %v360, 3
      %v2389 = vor.u32 %v2387, %v2388
      %v2390 = vsel %vm2367, %v2385, %v2389
      %v2391 = vrot.slane %v372, 2
      %v2392 = vrot.slane %v368, 3
      %v2393 = vor.u32 %v2391, %v2392
      %v2394 = vsel %vm2367, %v2389, %v2393
      %v2395 = vrot.slane %v380, 2
      %v2396 = vrot.slane %v376, 3
      %v2397 = vor.u32 %v2395, %v2396
      %v2398 = vsel %vm2367, %v2393, %v2397
      %v2399 = vrot.slane %v388, 2
      %v2400 = vrot.slane %v384, 3
      %v2401 = vor.u32 %v2399, %v2400
      %v2402 = vsel %vm2367, %v2397, %v2401
      %v2403 = vrot.slane %v396, 2
      %v2404 = vrot.slane %v392, 3
      %v2405 = vor.u32 %v2403, %v2404
      %v2406 = vsel %vm2367, %v2401, %v2405
      %v2407 = vrot.slane %v404, 2
      %v2408 = vrot.slane %v400, 3
      %v2409 = vor.u32 %v2407, %v2408
      %v2410 = vsel %vm2367, %v2405, %v2409
      %v2411 = vrot.slane %v412, 2
      %v2412 = vrot.slane %v408, 3
      %v2413 = vor.u32 %v2411, %v2412
      %v2414 = vsel %vm2367, %v2409, %v2413
      %v2415 = vrot.slane %v420, 2
      %v2416 = vrot.slane %v416, 3
      %v2417 = vor.u32 %v2415, %v2416
      %v2418 = vsel %vm2367, %v2413, %v2417
      %v2419 = vrot.slane %v428, 2
      %v2420 = vrot.slane %v424, 3
      %v2421 = vor.u32 %v2419, %v2420
      %v2422 = vsel %vm2367, %v2417, %v2421
      %v2423 = vrot.slane %v436, 2
      %v2424 = vrot.slane %v432, 3
      %v2425 = vor.u32 %v2423, %v2424
      %v2426 = vsel %vm2367, %v2421, %v2425
      %v2427 = vrot.slane %v444, 2
      %v2428 = vrot.slane %v440, 3
      %v2429 = vor.u32 %v2427, %v2428
      %v2430 = vsel %vm2367, %v2425, %v2429
      %v2431 = vrot.slane %v1536, 2
      %v2432 = vrot.slane %v1539, 3
      %v2433 = vor.u32 %v2431, %v2432
      %v2434 = vsel %vm2367, %v2429, %v2433
      %v2436 = vshrl.u32 %v2133, 16
      %v2438 = vrot.slane %v2436, 2
      %v2439 = vshll.u32 %v2133, 16
      %v2441 = vrot.slane %v2439, 3
      %v2442 = vor.u32 %v2438, %v2441
      %v2443 = vsel %vm2367, %v2433, %v2442
      %v2445 = vshrl.u32 %v2134, 16
      %v2447 = vrot.slane %v2445, 2
      %v2448 = vshll.u32 %v2134, 16
      %v2450 = vrot.slane %v2448, 3
      %v2451 = vor.u32 %v2447, %v2450
      %v2452 = vsel %vm2367, %v2442, %v2451
      %v2454 = vsel %vm452, %v2374, 0
      %v2457 = vsel %vm452, %v2378, 0
      %v2460 = vsel %vm452, %v2382, 0
      %v2463 = vsel %vm452, %v2386, 0
      %v2466 = vsel %vm452, %v2390, 0
      %v2469 = vsel %vm452, %v2394, 0
      %v2472 = vsel %vm452, %v2398, 0
      %v2475 = vsel %vm452, %v2402, 0
      %v2478 = vsel %vm452, %v2406, 0
      %v2481 = vsel %vm452, %v2410, 0
      %v2484 = vsel %vm452, %v2414, 0
      %v2487 = vsel %vm452, %v2418, 0
      %v2490 = vsel %vm452, %v2422, 0
      %v2493 = vsel %vm452, %v2426, 0
      %v2496 = vsel %vm452, %v2430, 0
      %v2499 = vsel %vm452, %v2434, 0
      %v2502 = vsel %vm452, %v2443, 0
      %v2505 = vsel %vm452, %v2452, 0
      %v2508 = vsel %vm507, %v2366, 0
      %2510 = vmatprep.subr.bf16.mxu0 0
      %2511 = vmatpush1.bf16.msra.mxu0 %v2508
      %2512 = vmatprep.subr.bf16.mxu0 0
      %2513 = vmatpush1.bf16.msra.mxu0 0
      %2514 = vmatprep.subr.bf16.mxu0 0
      %2515 = vmatpush1.bf16.msra.mxu0 0
      %2516 = vmatprep.subr.bf16.mxu0 0
      %2517 = vmatpush1.bf16.msra.mxu0 0
      %2518 = vmatprep.subr.bf16.mxu0 0
      %2519 = vmatpush1.bf16.msra.mxu0 0
      %2520 = vmatprep.subr.bf16.mxu0 0
      %2521 = vmatpush1.bf16.msra.mxu0 0
      %2522 = vmatprep.subr.bf16.mxu0 0
      %2523 = vmatpush1.bf16.msra.mxu0 0
      %2524 = vmatprep.subr.bf16.mxu0 0
      %2525 = vmatpush1.bf16.msra.mxu0 0
      %2526 = vmatprep.subr.bf16.mxu0 0
      %2527 = vmatpush1.bf16.msra.mxu0 0
      %2528 = vmatprep.subr.bf16.mxu0 0
      %2529 = vmatpush1.bf16.msra.mxu0 0
      %2530 = vmatprep.subr.bf16.mxu0 0
      %2531 = vmatpush1.bf16.msra.mxu0 0
      %2532 = vmatprep.subr.bf16.mxu0 0
      %2533 = vmatpush1.bf16.msra.mxu0 0
      %2534 = vmatprep.subr.bf16.mxu0 0
      %2535 = vmatpush1.bf16.msra.mxu0 0
      %2536 = vmatprep.subr.bf16.mxu0 0
      %2537 = vmatpush1.bf16.msra.mxu0 0
      %2538 = vmatprep.subr.bf16.mxu0 0
      %2539 = vmatpush1.bf16.msra.mxu0 0
      %2540 = vmatprep.subr.bf16.mxu0 0
      %2541 = vmatpush1.bf16.msra.mxu0 0
      %2542 = vmatprep.mubr.bf16.mxu0 0
      %2543 = vmatmul.mubr.bf16.gmra.mrb[0].mxu0 %v2454
      %v2544 = vpop.f32.mrb[0].mxu0
      %v2545 = vadd.f32 0.0, %v2544
      %v2546 = vpop.f32.mrb[0].mxu0
      %v2547 = vpop.f32.mrb[0].mxu0
      %v2548 = vadd.f32 0.0, %v2547
      %v2549 = vpop.f32.mrb[0].mxu0
      %2550 = vmatprep.mubr.bf16.mxu0 0
      %2551 = vmatmul.mubr.bf16.gmra.mrb[0].mxu0 %v2457
      %v2552 = vpop.f32.mrb[0].mxu0
      %v2553 = vadd.f32 0.0, %v2552
      %v2554 = vpop.f32.mrb[0].mxu0
      %v2555 = vpop.f32.mrb[0].mxu0
      %v2556 = vadd.f32 0.0, %v2555
      %v2557 = vpop.f32.mrb[0].mxu0
      %2558 = vmatprep.mubr.bf16.mxu0 0
      %2559 = vmatmul.mubr.bf16.gmra.mrb[0].mxu0 %v2460
      %v2560 = vpop.f32.mrb[0].mxu0
      %v2561 = vadd.f32 0.0, %v2560
      %v2562 = vpop.f32.mrb[0].mxu0
      %v2563 = vpop.f32.mrb[0].mxu0
      %v2564 = vadd.f32 0.0, %v2563
      %v2565 = vpop.f32.mrb[0].mxu0
      %2566 = vmatprep.mubr.bf16.mxu0 0
      %2567 = vmatmul.mubr.bf16.gmra.mrb[0].mxu0 %v2463
      %v2568 = vpop.f32.mrb[0].mxu0
      %v2569 = vadd.f32 0.0, %v2568
      %v2570 = vpop.f32.mrb[0].mxu0
      %v2571 = vpop.f32.mrb[0].mxu0
      %v2572 = vadd.f32 0.0, %v2571
      %v2573 = vpop.f32.mrb[0].mxu0
      %2574 = vmatprep.mubr.bf16.mxu0 0
      %2575 = vmatmul.mubr.bf16.gmra.mrb[0].mxu0 %v2466
      %v2576 = vpop.f32.mrb[0].mxu0
      %v2577 = vadd.f32 0.0, %v2576
      %v2578 = vpop.f32.mrb[0].mxu0
      %v2579 = vpop.f32.mrb[0].mxu0
      %v2580 = vadd.f32 0.0, %v2579
      %v2581 = vpop.f32.mrb[0].mxu0
      %2582 = vmatprep.mubr.bf16.mxu0 0
      %2583 = vmatmul.mubr.bf16.gmra.mrb[0].mxu0 %v2469
      %v2584 = vpop.f32.mrb[0].mxu0
      %v2585 = vadd.f32 0.0, %v2584
      %v2586 = vpop.f32.mrb[0].mxu0
      %v2587 = vpop.f32.mrb[0].mxu0
      %v2588 = vadd.f32 0.0, %v2587
      %v2589 = vpop.f32.mrb[0].mxu0
      %2590 = vmatprep.mubr.bf16.mxu0 0
      %2591 = vmatmul.mubr.bf16.gmra.mrb[0].mxu0 %v2472
      %v2592 = vpop.f32.mrb[0].mxu0
      %v2593 = vadd.f32 0.0, %v2592
      %v2594 = vpop.f32.mrb[0].mxu0
      %v2595 = vpop.f32.mrb[0].mxu0
      %v2596 = vadd.f32 0.0, %v2595
      %v2597 = vpop.f32.mrb[0].mxu0
      %2598 = vmatprep.mubr.bf16.mxu0 0
      %2599 = vmatmul.mubr.bf16.gmra.mrb[0].mxu0 %v2475
      %v2600 = vpop.f32.mrb[0].mxu0
      %v2601 = vadd.f32 0.0, %v2600
      %v2602 = vpop.f32.mrb[0].mxu0
      %v2603 = vpop.f32.mrb[0].mxu0
      %v2604 = vadd.f32 0.0, %v2603
      %v2605 = vpop.f32.mrb[0].mxu0
      %2606 = vmatprep.mubr.bf16.mxu0 0
      %2607 = vmatmul.mubr.bf16.gmra.mrb[0].mxu0 %v2478
      %v2608 = vpop.f32.mrb[0].mxu0
      %v2609 = vadd.f32 0.0, %v2608
      %v2610 = vpop.f32.mrb[0].mxu0
      %v2611 = vpop.f32.mrb[0].mxu0
      %v2612 = vadd.f32 0.0, %v2611
      %v2613 = vpop.f32.mrb[0].mxu0
      %2614 = vmatprep.mubr.bf16.mxu0 0
      %2615 = vmatmul.mubr.bf16.gmra.mrb[0].mxu0 %v2481
      %v2616 = vpop.f32.mrb[0].mxu0
      %v2617 = vadd.f32 0.0, %v2616
      %v2618 = vpop.f32.mrb[0].mxu0
      %v2619 = vpop.f32.mrb[0].mxu0
      %v2620 = vadd.f32 0.0, %v2619
      %v2621 = vpop.f32.mrb[0].mxu0
      %2622 = vmatprep.mubr.bf16.mxu0 0
      %2623 = vmatmul.mubr.bf16.gmra.mrb[0].mxu0 %v2484
      %v2624 = vpop.f32.mrb[0].mxu0
      %v2625 = vadd.f32 0.0, %v2624
      %v2626 = vpop.f32.mrb[0].mxu0
      %v2627 = vpop.f32.mrb[0].mxu0
      %v2628 = vadd.f32 0.0, %v2627
      %v2629 = vpop.f32.mrb[0].mxu0
      %2630 = vmatprep.mubr.bf16.mxu0 0
      %2631 = vmatmul.mubr.bf16.gmra.mrb[0].mxu0 %v2487
      %v2632 = vpop.f32.mrb[0].mxu0
      %v2633 = vadd.f32 0.0, %v2632
      %v2634 = vpop.f32.mrb[0].mxu0
      %v2635 = vpop.f32.mrb[0].mxu0
      %v2636 = vadd.f32 0.0, %v2635
      %v2637 = vpop.f32.mrb[0].mxu0
      %2638 = vmatprep.mubr.bf16.mxu0 0
      %2639 = vmatmul.mubr.bf16.gmra.mrb[0].mxu0 %v2490
      %v2640 = vpop.f32.mrb[0].mxu0
      %v2641 = vadd.f32 0.0, %v2640
      %v2642 = vpop.f32.mrb[0].mxu0
      %v2643 = vpop.f32.mrb[0].mxu0
      %v2644 = vadd.f32 0.0, %v2643
      %v2645 = vpop.f32.mrb[0].mxu0
      %2646 = vmatprep.mubr.bf16.mxu0 0
      %2647 = vmatmul.mubr.bf16.gmra.mrb[0].mxu0 %v2493
      %v2648 = vpop.f32.mrb[0].mxu0
      %v2649 = vadd.f32 0.0, %v2648
      %v2650 = vpop.f32.mrb[0].mxu0
      %v2651 = vpop.f32.mrb[0].mxu0
      %v2652 = vadd.f32 0.0, %v2651
      %v2653 = vpop.f32.mrb[0].mxu0
      %2654 = vmatprep.mubr.bf16.mxu0 0
      %2655 = vmatmul.mubr.bf16.gmra.mrb[0].mxu0 %v2496
      %v2656 = vpop.f32.mrb[0].mxu0
      %v2657 = vadd.f32 0.0, %v2656
      %v2658 = vpop.f32.mrb[0].mxu0
      %v2659 = vpop.f32.mrb[0].mxu0
      %v2660 = vadd.f32 0.0, %v2659
      %v2661 = vpop.f32.mrb[0].mxu0
      %2662 = vmatprep.mubr.bf16.mxu0 0
      %2663 = vmatmul.mubr.bf16.gmra.mrb[0].mxu0 %v2499
      %v2664 = vpop.f32.mrb[0].mxu0
      %v2665 = vadd.f32 0.0, %v2664
      %v2666 = vpop.f32.mrb[0].mxu0
      %v2667 = vpop.f32.mrb[0].mxu0
      %v2668 = vadd.f32 0.0, %v2667
      %v2669 = vpop.f32.mrb[0].mxu0
      %2670 = vmatprep.mubr.bf16.mxu0 0
      %2671 = vmatmul.mubr.bf16.gmra.mrb[0].mxu0 %v2502
      %v2672 = vpop.f32.mrb[0].mxu0
      %v2673 = vadd.f32 0.0, %v2672
      %v2674 = vpop.f32.mrb[0].mxu0
      %v2675 = vpop.f32.mrb[0].mxu0
      %v2676 = vadd.f32 0.0, %v2675
      %v2677 = vpop.f32.mrb[0].mxu0
      %2678 = vmatprep.mubr.bf16.mxu0 0
      %2679 = vmatmul.mubr.bf16.gmra.mrb[0].mxu0 %v2505
      %v2680 = vpop.f32.mrb[0].mxu0
      %v2681 = vadd.f32 0.0, %v2680
      %v2682 = vpop.f32.mrb[0].mxu0
      %v2683 = vpop.f32.mrb[0].mxu0
      %v2684 = vadd.f32 0.0, %v2683
      %v2685 = vpop.f32.mrb[0].mxu0
      %2686 = vdwg.mxu0
      %v2687 = vadd.f32 %v2329, %v2545
      %v2688 = vadd.f32 %v2330, %v2548
      %v2689 = vadd.f32 %v2331, %v2553
      %v2690 = vadd.f32 %v2332, %v2556
      %v2691 = vadd.f32 %v2333, %v2561
      %v2692 = vadd.f32 %v2334, %v2564
      %v2693 = vadd.f32 %v2335, %v2569
      %v2694 = vadd.f32 %v2336, %v2572
      %v2695 = vadd.f32 %v2337, %v2577
      %v2696 = vadd.f32 %v2338, %v2580
      %v2697 = vadd.f32 %v2339, %v2585
      %v2698 = vadd.f32 %v2340, %v2588
      %v2699 = vadd.f32 %v2341, %v2593
      %v2700 = vadd.f32 %v2342, %v2596
      %v2701 = vadd.f32 %v2343, %v2601
      %v2702 = vadd.f32 %v2344, %v2604
      %v2703 = vadd.f32 %v2345, %v2609
      %v2704 = vadd.f32 %v2346, %v2612
      %v2705 = vadd.f32 %v2347, %v2617
      %v2706 = vadd.f32 %v2348, %v2620
      %v2707 = vadd.f32 %v2349, %v2625
      %v2708 = vadd.f32 %v2350, %v2628
      %v2709 = vadd.f32 %v2351, %v2633
      %v2710 = vadd.f32 %v2352, %v2636
      %v2711 = vadd.f32 %v2353, %v2641
      %v2712 = vadd.f32 %v2354, %v2644
      %v2713 = vadd.f32 %v2355, %v2649
      %v2714 = vadd.f32 %v2356, %v2652
      %v2715 = vadd.f32 %v2357, %v2657
      %v2716 = vadd.f32 %v2358, %v2660
      %v2717 = vadd.f32 %v2359, %v2665
      %v2718 = vadd.f32 %v2360, %v2668
      %v2719 = vadd.f32 %v2361, %v2673
      %v2720 = vadd.f32 %v2362, %v2676
      %v2721 = vadd.f32 %v2363, %v2681
      %v2722 = vadd.f32 %v2364, %v2684
      %s2723 = scalar_lea.vmem %s1, 32
      %v2724 = vld [vmem:[%s2723] sm:$0xf]
      %vm2725 = vcmask 1044480
      %v2726 = vrot.slane %v283, 3
      %v2727 = vrot.slane %v284, 3
      %v2728 = vsel %vm2725, %v2726, %v2727
      %v2729 = vrot.slane %v285, 3
      %v2730 = vsel %vm2725, %v2727, %v2729
      %v2731 = vrot.slane %v286, 3
      %v2732 = vsel %vm2725, %v2729, %v2731
      %v2733 = vrot.slane %v287, 3
      %v2734 = vsel %vm2725, %v2731, %v2733
      %v2735 = vrot.slane %v288, 3
      %v2736 = vsel %vm2725, %v2733, %v2735
      %v2737 = vrot.slane %v289, 3
      %v2738 = vsel %vm2725, %v2735, %v2737
      %v2739 = vrot.slane %v290, 3
      %v2740 = vsel %vm2725, %v2737, %v2739
      %v2741 = vrot.slane %v291, 3
      %v2742 = vsel %vm2725, %v2739, %v2741
      %v2743 = vrot.slane %v292, 3
      %v2744 = vsel %vm2725, %v2741, %v2743
      %v2745 = vrot.slane %v293, 3
      %v2746 = vsel %vm2725, %v2743, %v2745
      %v2747 = vrot.slane %v294, 3
      %v2748 = vsel %vm2725, %v2745, %v2747
      %v2749 = vrot.slane %v295, 3
      %v2750 = vsel %vm2725, %v2747, %v2749
      %v2751 = vrot.slane %v296, 3
      %v2752 = vsel %vm2725, %v2749, %v2751
      %v2753 = vrot.slane %v297, 3
      %v2754 = vsel %vm2725, %v2751, %v2753
      %v2755 = vrot.slane %v298, 3
      %v2756 = vsel %vm2725, %v2753, %v2755
      %v2757 = vrot.slane %v1233, 3
      %v2758 = vsel %vm2725, %v2755, %v2757
      %v2759 = vrot.slane %v2133, 3
      %v2760 = vsel %vm2725, %v2757, %v2759
      %v2761 = vrot.slane %v2134, 3
      %v2762 = vsel %vm2725, %v2759, %v2761
      %v2764 = vsel %vm452, %v2728, 0
      %v2767 = vsel %vm452, %v2730, 0
      %v2770 = vsel %vm452, %v2732, 0
      %v2773 = vsel %vm452, %v2734, 0
      %v2776 = vsel %vm452, %v2736, 0
      %v2779 = vsel %vm452, %v2738, 0
      %v2782 = vsel %vm452, %v2740, 0
      %v2785 = vsel %vm452, %v2742, 0
      %v2788 = vsel %vm452, %v2744, 0
      %v2791 = vsel %vm452, %v2746, 0
      %v2794 = vsel %vm452, %v2748, 0
      %v2797 = vsel %vm452, %v2750, 0
      %v2800 = vsel %vm452, %v2752, 0
      %v2803 = vsel %vm452, %v2754, 0
      %v2806 = vsel %vm452, %v2756, 0
      %v2809 = vsel %vm452, %v2758, 0
      %v2812 = vsel %vm452, %v2760, 0
      %v2815 = vsel %vm452, %v2762, 0
      %v2818 = vsel %vm507, %v2724, 0
      %2820 = vmatprep.subr.bf16.mxu0 0
      %2821 = vmatpush1.bf16.msra.mxu0 %v2818
      %2822 = vmatprep.subr.bf16.mxu0 0
      %2823 = vmatpush1.bf16.msra.mxu0 0
      %2824 = vmatprep.subr.bf16.mxu0 0
      %2825 = vmatpush1.bf16.msra.mxu0 0
      %2826 = vmatprep.subr.bf16.mxu0 0
      %2827 = vmatpush1.bf16.msra.mxu0 0
      %2828 = vmatprep.subr.bf16.mxu0 0
      %2829 = vmatpush1.bf16.msra.mxu0 0
      %2830 = vmatprep.subr.bf16.mxu0 0
      %2831 = vmatpush1.bf16.msra.mxu0 0
      %2832 = vmatprep.subr.bf16.mxu0 0
      %2833 = vmatpush1.bf16.msra.mxu0 0
      %2834 = vmatprep.subr.bf16.mxu0 0
      %2835 = vmatpush1.bf16.msra.mxu0 0
      %2836 = vmatprep.subr.bf16.mxu0 0
      %2837 = vmatpush1.bf16.msra.mxu0 0
      %2838 = vmatprep.subr.bf16.mxu0 0
      %2839 = vmatpush1.bf16.msra.mxu0 0
      %2840 = vmatprep.subr.bf16.mxu0 0
      %2841 = vmatpush1.bf16.msra.mxu0 0
      %2842 = vmatprep.subr.bf16.mxu0 0
      %2843 = vmatpush1.bf16.msra.mxu0 0
      %2844 = vmatprep.subr.bf16.mxu0 0
      %2845 = vmatpush1.bf16.msra.mxu0 0
      %2846 = vmatprep.subr.bf16.mxu0 0
      %2847 = vmatpush1.bf16.msra.mxu0 0
      %2848 = vmatprep.subr.bf16.mxu0 0
      %2849 = vmatpush1.bf16.msra.mxu0 0
      %2850 = vmatprep.subr.bf16.mxu0 0
      %2851 = vmatpush1.bf16.msra.mxu0 0
      %2852 = vmatprep.mubr.bf16.mxu0 0
      %2853 = vmatmul.mubr.bf16.gmra.mrb[0].mxu0 %v2764
      %v2854 = vpop.f32.mrb[0].mxu0
      %v2855 = vadd.f32 0.0, %v2854
      %v2856 = vpop.f32.mrb[0].mxu0
      %v2857 = vpop.f32.mrb[0].mxu0
      %v2858 = vadd.f32 0.0, %v2857
      %v2859 = vpop.f32.mrb[0].mxu0
      %2860 = vmatprep.mubr.bf16.mxu0 0
      %2861 = vmatmul.mubr.bf16.gmra.mrb[0].mxu0 %v2767
      %v2862 = vpop.f32.mrb[0].mxu0
      %v2863 = vadd.f32 0.0, %v2862
      %v2864 = vpop.f32.mrb[0].mxu0
      %v2865 = vpop.f32.mrb[0].mxu0
      %v2866 = vadd.f32 0.0, %v2865
      %v2867 = vpop.f32.mrb[0].mxu0
      %2868 = vmatprep.mubr.bf16.mxu0 0
      %2869 = vmatmul.mubr.bf16.gmra.mrb[0].mxu0 %v2770
      %v2870 = vpop.f32.mrb[0].mxu0
      %v2871 = vadd.f32 0.0, %v2870
      %v2872 = vpop.f32.mrb[0].mxu0
      %v2873 = vpop.f32.mrb[0].mxu0
      %v2874 = vadd.f32 0.0, %v2873
      %v2875 = vpop.f32.mrb[0].mxu0
      %2876 = vmatprep.mubr.bf16.mxu0 0
      %2877 = vmatmul.mubr.bf16.gmra.mrb[0].mxu0 %v2773
      %v2878 = vpop.f32.mrb[0].mxu0
      %v2879 = vadd.f32 0.0, %v2878
      %v2880 = vpop.f32.mrb[0].mxu0
      %v2881 = vpop.f32.mrb[0].mxu0
      %v2882 = vadd.f32 0.0, %v2881
      %v2883 = vpop.f32.mrb[0].mxu0
      %2884 = vmatprep.mubr.bf16.mxu0 0
      %2885 = vmatmul.mubr.bf16.gmra.mrb[0].mxu0 %v2776
      %v2886 = vpop.f32.mrb[0].mxu0
      %v2887 = vadd.f32 0.0, %v2886
      %v2888 = vpop.f32.mrb[0].mxu0
      %v2889 = vpop.f32.mrb[0].mxu0
      %v2890 = vadd.f32 0.0, %v2889
      %v2891 = vpop.f32.mrb[0].mxu0
      %2892 = vmatprep.mubr.bf16.mxu0 0
      %2893 = vmatmul.mubr.bf16.gmra.mrb[0].mxu0 %v2779
      %v2894 = vpop.f32.mrb[0].mxu0
      %v2895 = vadd.f32 0.0, %v2894
      %v2896 = vpop.f32.mrb[0].mxu0
      %v2897 = vpop.f32.mrb[0].mxu0
      %v2898 = vadd.f32 0.0, %v2897
      %v2899 = vpop.f32.mrb[0].mxu0
      %2900 = vmatprep.mubr.bf16.mxu0 0
      %2901 = vmatmul.mubr.bf16.gmra.mrb[0].mxu0 %v2782
      %v2902 = vpop.f32.mrb[0].mxu0
      %v2903 = vadd.f32 0.0, %v2902
      %v2904 = vpop.f32.mrb[0].mxu0
      %v2905 = vpop.f32.mrb[0].mxu0
      %v2906 = vadd.f32 0.0, %v2905
      %v2907 = vpop.f32.mrb[0].mxu0
      %2908 = vmatprep.mubr.bf16.mxu0 0
      %2909 = vmatmul.mubr.bf16.gmra.mrb[0].mxu0 %v2785
      %v2910 = vpop.f32.mrb[0].mxu0
      %v2911 = vadd.f32 0.0, %v2910
      %v2912 = vpop.f32.mrb[0].mxu0
      %v2913 = vpop.f32.mrb[0].mxu0
      %v2914 = vadd.f32 0.0, %v2913
      %v2915 = vpop.f32.mrb[0].mxu0
      %2916 = vmatprep.mubr.bf16.mxu0 0
      %2917 = vmatmul.mubr.bf16.gmra.mrb[0].mxu0 %v2788
      %v2918 = vpop.f32.mrb[0].mxu0
      %v2919 = vadd.f32 0.0, %v2918
      %v2920 = vpop.f32.mrb[0].mxu0
      %v2921 = vpop.f32.mrb[0].mxu0
      %v2922 = vadd.f32 0.0, %v2921
      %v2923 = vpop.f32.mrb[0].mxu0
      %2924 = vmatprep.mubr.bf16.mxu0 0
      %2925 = vmatmul.mubr.bf16.gmra.mrb[0].mxu0 %v2791
      %v2926 = vpop.f32.mrb[0].mxu0
      %v2927 = vadd.f32 0.0, %v2926
      %v2928 = vpop.f32.mrb[0].mxu0
      %v2929 = vpop.f32.mrb[0].mxu0
      %v2930 = vadd.f32 0.0, %v2929
      %v2931 = vpop.f32.mrb[0].mxu0
      %2932 = vmatprep.mubr.bf16.mxu0 0
      %2933 = vmatmul.mubr.bf16.gmra.mrb[0].mxu0 %v2794
      %v2934 = vpop.f32.mrb[0].mxu0
      %v2935 = vadd.f32 0.0, %v2934
      %v2936 = vpop.f32.mrb[0].mxu0
      %v2937 = vpop.f32.mrb[0].mxu0
      %v2938 = vadd.f32 0.0, %v2937
      %v2939 = vpop.f32.mrb[0].mxu0
      %2940 = vmatprep.mubr.bf16.mxu0 0
      %2941 = vmatmul.mubr.bf16.gmra.mrb[0].mxu0 %v2797
      %v2942 = vpop.f32.mrb[0].mxu0
      %v2943 = vadd.f32 0.0, %v2942
      %v2944 = vpop.f32.mrb[0].mxu0
      %v2945 = vpop.f32.mrb[0].mxu0
      %v2946 = vadd.f32 0.0, %v2945
      %v2947 = vpop.f32.mrb[0].mxu0
      %2948 = vmatprep.mubr.bf16.mxu0 0
      %2949 = vmatmul.mubr.bf16.gmra.mrb[0].mxu0 %v2800
      %v2950 = vpop.f32.mrb[0].mxu0
      %v2951 = vadd.f32 0.0, %v2950
      %v2952 = vpop.f32.mrb[0].mxu0
      %v2953 = vpop.f32.mrb[0].mxu0
      %v2954 = vadd.f32 0.0, %v2953
      %v2955 = vpop.f32.mrb[0].mxu0
      %2956 = vmatprep.mubr.bf16.mxu0 0
      %2957 = vmatmul.mubr.bf16.gmra.mrb[0].mxu0 %v2803
      %v2958 = vpop.f32.mrb[0].mxu0
      %v2959 = vadd.f32 0.0, %v2958
      %v2960 = vpop.f32.mrb[0].mxu0
      %v2961 = vpop.f32.mrb[0].mxu0
      %v2962 = vadd.f32 0.0, %v2961
      %v2963 = vpop.f32.mrb[0].mxu0
      %2964 = vmatprep.mubr.bf16.mxu0 0
      %2965 = vmatmul.mubr.bf16.gmra.mrb[0].mxu0 %v2806
      %v2966 = vpop.f32.mrb[0].mxu0
      %v2967 = vadd.f32 0.0, %v2966
      %v2968 = vpop.f32.mrb[0].mxu0
      %v2969 = vpop.f32.mrb[0].mxu0
      %v2970 = vadd.f32 0.0, %v2969
      %v2971 = vpop.f32.mrb[0].mxu0
      %2972 = vmatprep.mubr.bf16.mxu0 0
      %2973 = vmatmul.mubr.bf16.gmra.mrb[0].mxu0 %v2809
      %v2974 = vpop.f32.mrb[0].mxu0
      %v2975 = vadd.f32 0.0, %v2974
      %v2976 = vpop.f32.mrb[0].mxu0
      %v2977 = vpop.f32.mrb[0].mxu0
      %v2978 = vadd.f32 0.0, %v2977
      %v2979 = vpop.f32.mrb[0].mxu0
      %2980 = vmatprep.mubr.bf16.mxu0 0
      %2981 = vmatmul.mubr.bf16.gmra.mrb[0].mxu0 %v2812
      %v2982 = vpop.f32.mrb[0].mxu0
      %v2983 = vadd.f32 0.0, %v2982
      %v2984 = vpop.f32.mrb[0].mxu0
      %v2985 = vpop.f32.mrb[0].mxu0
      %v2986 = vadd.f32 0.0, %v2985
      %v2987 = vpop.f32.mrb[0].mxu0
      %2988 = vmatprep.mubr.bf16.mxu0 0
      %2989 = vmatmul.mubr.bf16.gmra.mrb[0].mxu0 %v2815
      %v2990 = vpop.f32.mrb[0].mxu0
      %v2991 = vadd.f32 0.0, %v2990
      %v2992 = vpop.f32.mrb[0].mxu0
      %v2993 = vpop.f32.mrb[0].mxu0
      %v2994 = vadd.f32 0.0, %v2993
      %v2995 = vpop.f32.mrb[0].mxu0
      %2996 = vdwg.mxu0
      %v2997 = vadd.f32 %v2687, %v2855
      %v2998 = vadd.f32 %v2688, %v2858
      %v2999 = vadd.f32 %v2689, %v2863
      %v3000 = vadd.f32 %v2690, %v2866
      %v3001 = vadd.f32 %v2691, %v2871
      %v3002 = vadd.f32 %v2692, %v2874
      %v3003 = vadd.f32 %v2693, %v2879
      %v3004 = vadd.f32 %v2694, %v2882
      %v3005 = vadd.f32 %v2695, %v2887
      %v3006 = vadd.f32 %v2696, %v2890
      %v3007 = vadd.f32 %v2697, %v2895
      %v3008 = vadd.f32 %v2698, %v2898
      %v3009 = vadd.f32 %v2699, %v2903
      %v3010 = vadd.f32 %v2700, %v2906
      %v3011 = vadd.f32 %v2701, %v2911
      %v3012 = vadd.f32 %v2702, %v2914
      %v3013 = vadd.f32 %v2703, %v2919
      %v3014 = vadd.f32 %v2704, %v2922
      %v3015 = vadd.f32 %v2705, %v2927
      %v3016 = vadd.f32 %v2706, %v2930
      %v3017 = vadd.f32 %v2707, %v2935
      %v3018 = vadd.f32 %v2708, %v2938
      %v3019 = vadd.f32 %v2709, %v2943
      %v3020 = vadd.f32 %v2710, %v2946
      %v3021 = vadd.f32 %v2711, %v2951
      %v3022 = vadd.f32 %v2712, %v2954
      %v3023 = vadd.f32 %v2713, %v2959
      %v3024 = vadd.f32 %v2714, %v2962
      %v3025 = vadd.f32 %v2715, %v2967
      %v3026 = vadd.f32 %v2716, %v2970
      %v3027 = vadd.f32 %v2717, %v2975
      %v3028 = vadd.f32 %v2718, %v2978
      %v3029 = vadd.f32 %v2719, %v2983
      %v3030 = vadd.f32 %v2720, %v2986
      %v3031 = vadd.f32 %v2721, %v2991
      %v3032 = vadd.f32 %v2722, %v2994
      %v3033 = vld [vmem:[%s2] sm:$0x1]
      %v3035 = vlaneseq
      %v3036 = vshrl.u32 %v3035, 7
      %v3037 = vsub.s32 0, %v3036
      %v3038 = vrot.slane %v3033, %v3037
      %v3040 = vmul.f32 %v2997, %v3038
      %v3041 = vmul.f32 %v2998, %v3038
      %v3042 = vmul.f32 %v2999, %v3038
      %v3043 = vmul.f32 %v3000, %v3038
      %v3044 = vmul.f32 %v3001, %v3038
      %v3045 = vmul.f32 %v3002, %v3038
      %v3046 = vmul.f32 %v3003, %v3038
      %v3047 = vmul.f32 %v3004, %v3038
      %v3048 = vmul.f32 %v3005, %v3038
      %v3049 = vmul.f32 %v3006, %v3038
      %v3050 = vmul.f32 %v3007, %v3038
      %v3051 = vmul.f32 %v3008, %v3038
      %v3052 = vmul.f32 %v3009, %v3038
      %v3053 = vmul.f32 %v3010, %v3038
      %v3054 = vmul.f32 %v3011, %v3038
      %v3055 = vmul.f32 %v3012, %v3038
      %v3056 = vmul.f32 %v3013, %v3038
      %v3057 = vmul.f32 %v3014, %v3038
      %v3058 = vmul.f32 %v3015, %v3038
      %v3059 = vmul.f32 %v3016, %v3038
      %v3060 = vmul.f32 %v3017, %v3038
      %v3061 = vmul.f32 %v3018, %v3038
      %v3062 = vmul.f32 %v3019, %v3038
      %v3063 = vmul.f32 %v3020, %v3038
      %v3064 = vmul.f32 %v3021, %v3038
      %v3065 = vmul.f32 %v3022, %v3038
      %v3066 = vmul.f32 %v3023, %v3038
      %v3067 = vmul.f32 %v3024, %v3038
      %v3068 = vmul.f32 %v3025, %v3038
      %v3069 = vmul.f32 %v3026, %v3038
      %v3070 = vmul.f32 %v3027, %v3038
      %v3071 = vmul.f32 %v3028, %v3038
      %v3072 = vmul.f32 %v3029, %v3038
      %v3073 = vmul.f32 %v3030, %v3038
      %v3074 = vmul.f32 %v3031, %v3038
      %v3075 = vmul.f32 %v3032, %v3038
      %v3076 = vld [vmem:[%s3] sm:$0x1]
      %v3078 = vlaneseq
      %v3079 = vshrl.u32 %v3078, 7
      %v3080 = vsub.s32 0, %v3079
      %v3081 = vrot.slane %v3076, %v3080
      %v3083 = vadd.f32 %v3040, %v3081
      %v3084 = vadd.f32 %v3041, %v3081
      %v3085 = vadd.f32 %v3042, %v3081
      %v3086 = vadd.f32 %v3043, %v3081
      %v3087 = vadd.f32 %v3044, %v3081
      %v3088 = vadd.f32 %v3045, %v3081
      %v3089 = vadd.f32 %v3046, %v3081
      %v3090 = vadd.f32 %v3047, %v3081
      %v3091 = vadd.f32 %v3048, %v3081
      %v3092 = vadd.f32 %v3049, %v3081
      %v3093 = vadd.f32 %v3050, %v3081
      %v3094 = vadd.f32 %v3051, %v3081
      %v3095 = vadd.f32 %v3052, %v3081
      %v3096 = vadd.f32 %v3053, %v3081
      %v3097 = vadd.f32 %v3054, %v3081
      %v3098 = vadd.f32 %v3055, %v3081
      %v3099 = vadd.f32 %v3056, %v3081
      %v3100 = vadd.f32 %v3057, %v3081
      %v3101 = vadd.f32 %v3058, %v3081
      %v3102 = vadd.f32 %v3059, %v3081
      %v3103 = vadd.f32 %v3060, %v3081
      %v3104 = vadd.f32 %v3061, %v3081
      %v3105 = vadd.f32 %v3062, %v3081
      %v3106 = vadd.f32 %v3063, %v3081
      %v3107 = vadd.f32 %v3064, %v3081
      %v3108 = vadd.f32 %v3065, %v3081
      %v3109 = vadd.f32 %v3066, %v3081
      %v3110 = vadd.f32 %v3067, %v3081
      %v3111 = vadd.f32 %v3068, %v3081
      %v3112 = vadd.f32 %v3069, %v3081
      %v3113 = vadd.f32 %v3070, %v3081
      %v3114 = vadd.f32 %v3071, %v3081
      %v3115 = vadd.f32 %v3072, %v3081
      %v3116 = vadd.f32 %v3073, %v3081
      %v3117 = vadd.f32 %v3074, %v3081
      %v3118 = vadd.f32 %v3075, %v3081
      %v3119 = vmax.f32 %v3083, 0.0
      %v3120 = vmax.f32 %v3084, 0.0
      %v3121 = vmax.f32 %v3085, 0.0
      %v3122 = vmax.f32 %v3086, 0.0
      %v3123 = vmax.f32 %v3087, 0.0
      %v3124 = vmax.f32 %v3088, 0.0
      %v3125 = vmax.f32 %v3089, 0.0
      %v3126 = vmax.f32 %v3090, 0.0
      %v3127 = vmax.f32 %v3091, 0.0
      %v3128 = vmax.f32 %v3092, 0.0
      %v3129 = vmax.f32 %v3093, 0.0
      %v3130 = vmax.f32 %v3094, 0.0
      %v3131 = vmax.f32 %v3095, 0.0
      %v3132 = vmax.f32 %v3096, 0.0
      %v3133 = vmax.f32 %v3097, 0.0
      %v3134 = vmax.f32 %v3098, 0.0
      %v3135 = vmax.f32 %v3099, 0.0
      %v3136 = vmax.f32 %v3100, 0.0
      %v3137 = vmax.f32 %v3101, 0.0
      %v3138 = vmax.f32 %v3102, 0.0
      %v3139 = vmax.f32 %v3103, 0.0
      %v3140 = vmax.f32 %v3104, 0.0
      %v3141 = vmax.f32 %v3105, 0.0
      %v3142 = vmax.f32 %v3106, 0.0
      %v3143 = vmax.f32 %v3107, 0.0
      %v3144 = vmax.f32 %v3108, 0.0
      %v3145 = vmax.f32 %v3109, 0.0
      %v3146 = vmax.f32 %v3110, 0.0
      %v3147 = vmax.f32 %v3111, 0.0
      %v3148 = vmax.f32 %v3112, 0.0
      %v3149 = vmax.f32 %v3113, 0.0
      %v3150 = vmax.f32 %v3114, 0.0
      %v3151 = vmax.f32 %v3115, 0.0
      %v3152 = vmax.f32 %v3116, 0.0
      %v3153 = vmax.f32 %v3117, 0.0
      %v3154 = vmax.f32 %v3118, 0.0
      %v3155 = vpack.c.bf16 %v3120, %v3119
      %v3156 = vpack.c.bf16 %v3122, %v3121
      %v3157 = vpack.c.bf16 %v3124, %v3123
      %v3158 = vpack.c.bf16 %v3126, %v3125
      %v3159 = vpack.c.bf16 %v3128, %v3127
      %v3160 = vpack.c.bf16 %v3130, %v3129
      %v3161 = vpack.c.bf16 %v3132, %v3131
      %v3162 = vpack.c.bf16 %v3134, %v3133
      %v3163 = vpack.c.bf16 %v3136, %v3135
      %v3164 = vpack.c.bf16 %v3138, %v3137
      %v3165 = vpack.c.bf16 %v3140, %v3139
      %v3166 = vpack.c.bf16 %v3142, %v3141
      %v3167 = vpack.c.bf16 %v3144, %v3143
      %v3168 = vpack.c.bf16 %v3146, %v3145
      %v3169 = vpack.c.bf16 %v3148, %v3147
      %v3170 = vpack.c.bf16 %v3150, %v3149
      %v3171 = vpack.c.bf16 %v3152, %v3151
      %v3172 = vpack.c.bf16 %v3154, %v3153
      %v3191 = vunpack.c.l.b16 %v3155
      %v3192 = vunpack.c.h.b16 %v3155
      %v3193 = vunpack.c.l.b16 %v3156
      %v3194 = vunpack.c.h.b16 %v3156
      %v3195 = vunpack.c.l.b16 %v3157
      %v3196 = vunpack.c.h.b16 %v3157
      %v3197 = vunpack.c.l.b16 %v3158
      %v3198 = vunpack.c.h.b16 %v3158
      %v3199 = vunpack.c.l.b16 %v3159
      %v3200 = vunpack.c.h.b16 %v3159
      %v3201 = vunpack.c.l.b16 %v3160
      %v3202 = vunpack.c.h.b16 %v3160
      %v3203 = vunpack.c.l.b16 %v3161
      %v3204 = vunpack.c.h.b16 %v3161
      %v3205 = vunpack.c.l.b16 %v3162
      %v3206 = vunpack.c.h.b16 %v3162
      %v3207 = vunpack.c.l.b16 %v3163
      %v3208 = vunpack.c.h.b16 %v3163
      %v3209 = vunpack.c.l.b16 %v3164
      %v3210 = vunpack.c.h.b16 %v3164
      %v3211 = vunpack.c.l.b16 %v3165
      %v3212 = vunpack.c.h.b16 %v3165
      %v3213 = vunpack.c.l.b16 %v3166
      %v3214 = vunpack.c.h.b16 %v3166
      %v3215 = vunpack.c.l.b16 %v3167
      %v3216 = vunpack.c.h.b16 %v3167
      %v3217 = vunpack.c.l.b16 %v3168
      %v3218 = vunpack.c.h.b16 %v3168
      %v3219 = vunpack.c.l.b16 %v3169
      %v3220 = vunpack.c.h.b16 %v3169
      %v3221 = vunpack.c.l.b16 %v3170
      %v3222 = vunpack.c.h.b16 %v3170
      %v3223 = vunpack.c.l.b16 %v3171
      %v3224 = vunpack.c.h.b16 %v3171
      %v3225 = vunpack.c.l.b16 %v3172
      %v3226 = vunpack.c.h.b16 %v3172
      %v3227 = vpack.c.b16 %v3191, %v3191
      %v3228 = vpack.c.b16 %v3192, %v3192
      %v3229 = vpack.c.b16 %v3193, %v3193
      %v3230 = vpack.c.b16 %v3194, %v3194
      %v3231 = vpack.c.b16 %v3195, %v3195
      %v3232 = vpack.c.b16 %v3196, %v3196
      %v3233 = vpack.c.b16 %v3197, %v3197
      %v3234 = vpack.c.b16 %v3198, %v3198
      %v3235 = vpack.c.b16 %v3199, %v3199
      %v3236 = vpack.c.b16 %v3200, %v3200
      %v3237 = vpack.c.b16 %v3201, %v3201
      %v3238 = vpack.c.b16 %v3202, %v3202
      %v3239 = vpack.c.b16 %v3203, %v3203
      %v3240 = vpack.c.b16 %v3204, %v3204
      %v3241 = vpack.c.b16 %v3205, %v3205
      %v3242 = vpack.c.b16 %v3206, %v3206
      %v3243 = vpack.c.b16 %v3207, %v3207
      %v3244 = vpack.c.b16 %v3208, %v3208
      %v3245 = vpack.c.b16 %v3209, %v3209
      %v3246 = vpack.c.b16 %v3210, %v3210
      %v3247 = vpack.c.b16 %v3211, %v3211
      %v3248 = vpack.c.b16 %v3212, %v3212
      %v3249 = vpack.c.b16 %v3213, %v3213
      %v3250 = vpack.c.b16 %v3214, %v3214
      %v3251 = vpack.c.b16 %v3215, %v3215
      %v3252 = vpack.c.b16 %v3216, %v3216
      %v3253 = vpack.c.b16 %v3217, %v3217
      %v3254 = vpack.c.b16 %v3218, %v3218
      %v3255 = vpack.c.b16 %v3219, %v3219
      %v3256 = vpack.c.b16 %v3220, %v3220
      %v3257 = vpack.c.b16 %v3221, %v3221
      %v3258 = vpack.c.b16 %v3222, %v3222
      %v3259 = vpack.c.b16 %v3223, %v3223
      %v3260 = vpack.c.b16 %v3224, %v3224
      %v3261 = vpack.c.b16 %v3225, %v3225
      %v3262 = vpack.c.b16 %v3226, %v3226
      %vm3299 = vcmask 519168
      %3300 = vst.msk [vmem:[%s197] sm:$0xf] %vm3299, %v3227
      %3301 = vst.msk [vmem:[%s197 + $0x4] sm:$0xf] %vm3299, %v3228
      %3302 = vst.msk [vmem:[%s197 + $0x8] sm:$0xf] %vm3299, %v3229
      %3303 = vst.msk [vmem:[%s197 + $0xc] sm:$0xf] %vm3299, %v3230
      %3304 = vst.msk [vmem:[%s197 + $0x10] sm:$0xf] %vm3299, %v3231
      %3305 = vst.msk [vmem:[%s197 + $0x14] sm:$0xf] %vm3299, %v3232
      %3306 = vst.msk [vmem:[%s197 + $0x18] sm:$0xf] %vm3299, %v3233
      %3307 = vst.msk [vmem:[%s197 + $0x1c] sm:$0xf] %vm3299, %v3234
      %3308 = vst.msk [vmem:[%s197 + $0x20] sm:$0xf] %vm3299, %v3235
      %3309 = vst.msk [vmem:[%s197 + $0x24] sm:$0xf] %vm3299, %v3236
      %3310 = vst.msk [vmem:[%s197 + $0x28] sm:$0xf] %vm3299, %v3237
      %3311 = vst.msk [vmem:[%s197 + $0x2c] sm:$0xf] %vm3299, %v3238
      %3312 = vst.msk [vmem:[%s197 + $0x30] sm:$0xf] %vm3299, %v3239
      %3313 = vst.msk [vmem:[%s197 + $0x34] sm:$0xf] %vm3299, %v3240
      %3314 = vst.msk [vmem:[%s197 + $0x38] sm:$0xf] %vm3299, %v3241
      %3315 = vst.msk [vmem:[%s197 + $0x3c] sm:$0xf] %vm3299, %v3242
      %3316 = vst.msk [vmem:[%s197 + $0x40] sm:$0xf] %vm3299, %v3243
      %3317 = vst.msk [vmem:[%s197 + $0x44] sm:$0xf] %vm3299, %v3244
      %3318 = vst.msk [vmem:[%s197 + $0x48] sm:$0xf] %vm3299, %v3245
      %3319 = vst.msk [vmem:[%s197 + $0x4c] sm:$0xf] %vm3299, %v3246
      %3320 = vst.msk [vmem:[%s197 + $0x50] sm:$0xf] %vm3299, %v3247
      %3321 = vst.msk [vmem:[%s197 + $0x54] sm:$0xf] %vm3299, %v3248
      %3322 = vst.msk [vmem:[%s197 + $0x58] sm:$0xf] %vm3299, %v3249
      %3323 = vst.msk [vmem:[%s197 + $0x5c] sm:$0xf] %vm3299, %v3250
      %3324 = vst.msk [vmem:[%s197 + $0x60] sm:$0xf] %vm3299, %v3251
      %3325 = vst.msk [vmem:[%s197 + $0x64] sm:$0xf] %vm3299, %v3252
      %3326 = vst.msk [vmem:[%s197 + $0x68] sm:$0xf] %vm3299, %v3253
      %3327 = vst.msk [vmem:[%s197 + $0x6c] sm:$0xf] %vm3299, %v3254
      %3328 = vst.msk [vmem:[%s197 + $0x70] sm:$0xf] %vm3299, %v3255
      %3329 = vst.msk [vmem:[%s197 + $0x74] sm:$0xf] %vm3299, %v3256
      %3330 = vst.msk [vmem:[%s197 + $0x78] sm:$0xf] %vm3299, %v3257
      %3331 = vst.msk [vmem:[%s197 + $0x7c] sm:$0xf] %vm3299, %v3258
      %3332 = vst.msk [vmem:[%s197 + $0x80] sm:$0xf] %vm3299, %v3259
      %3333 = vst.msk [vmem:[%s197 + $0x84] sm:$0xf] %vm3299, %v3260
      %3334 = vst.msk [vmem:[%s197 + $0x88] sm:$0xf] %vm3299, %v3261
      %3335 = vst.msk [vmem:[%s197 + $0x8c] sm:$0xf] %vm3299, %v3262
      %p3336 = scmp.lt.s32.totalorder %s15, 1
      %s3337 = scalar_select %p3336, %s15, 1
      %s3338 = smul.addr %s3337, 36
      %s3339 = smul.addr %s3338, 4
      %s3340 = scalar_lea.vmem %s4, %s3339
      // Predicated region
      $region37: #{tpu_custom_call.1} parent=35 // pred_check
        %p3341 = pneg %p122
      $region38: #{tpu_custom_call.1} parent=35 // pred_check_branch
        %3343 = sbr.rel (%p3341) target = $region40
      $region39: #{tpu_custom_call.1} parent=35 // pred_region
        _
      $region40: #{tpu_custom_call.1} parent=35 // pred_fallthru
        _
    $region36: #{tpu_custom_call.1} parent=5 // pred_fallthru
      _
    %p3344 = scmp.le.s32.totalorder 2, %s10
    // Predicated region
    $region41: #{tpu_custom_call.1} parent=5 // pred_check
      %p3345 = pneg %p3344
    $region42: #{tpu_custom_call.1} parent=5 // pred_check_branch
      %3347 = sbr.rel (%p3345) target = $region44
    $region43: #{tpu_custom_call.1} parent=5 // pred_region
      %s3348 = ssub.s32 %s10, 2
      // Predicated region
      $region45: #{tpu_custom_call.1} parent=43 // pred_check
        %p3349 = pneg %p128
      $region46: #{tpu_custom_call.1} parent=43 // pred_check_branch
        %3351 = sbr.rel (%p3349) target = $region48
      $region47: #{tpu_custom_call.1} parent=43 // pred_region
        %p3352 = scmp.lt.s32.totalorder %s16, 1
        %s3353 = scalar_select %p3352, %s16, 1
        %s3354 = smul.addr %s3353, 36
        %s3355 = smul.addr %s3354, 4
        %s3356 = scalar_lea.vmem %s4, %s3355
      $region48: #{tpu_custom_call.1} parent=43 // pred_fallthru
        _
    $region44: #{tpu_custom_call.1} parent=5 // pred_fallthru
      _
  $region6: #{tpu_custom_call.1} parent=0 // loop_footer
    %s14 = sadd.s32 1, %s10
  $region7: #{tpu_custom_call.1} parent=0 // loop_footer_branch
    %9 = sbr.rel target = $region3
  $region8: #{tpu_custom_call.1} parent=0 // loop_exit
    _

</llo_original>
